<compile_context>
chip_gen: v5e
topology: v5e:2x2
jax: 0.10.0
libtpu: 0.0.40
codegen_flags: <defaults>
</compile_context>

<pallas_src>
import functools

import numpy as np
import jax
import jax.numpy as jnp
from jax.experimental import pallas as pl
from jax.experimental.pallas import tpu as pltpu


# ---------------------------------------------------------------------------
# Pallas kernel
# ---------------------------------------------------------------------------
def gru_layer_kernel(x_ref, w_ih_ref, w_hh_ref, bgi_ref, bhn_ref, *rest,
                     chunk_steps, batch, hidden, fuse_out):
    """One (direction, sequence-chunk) grid step of a GRU layer.

    x_ref     : (T*B, Din)  bf16  chunk of the flattened time-major input
    w_ih_ref  : (Din, 3H)   bf16  this direction's input weights [r|z|n]
    w_hh_ref  : (H, 3H)     bf16  this direction's hidden weights
    bgi_ref   : (1, 3H)     f32   b_ih with b_hh[r,z] folded in
    bhn_ref   : (1, H)      f32   b_hh[n] (must stay inside the r* product)
    non-fused : y_ref (T*B, H) bf16   this direction's half of the layer output
    fused     : wo_ref (H, Opad) bf16, bo_ref (1, Opad) f32,
                out_ref (B, Opad) f32  partial classifier output h_d @ W_out[d]
    scratch   : h_scratch (B, H) f32  recurrent state, carried across chunks
                gi_scratch (T*B, 3H) f32  hoisted input projection
    """
    if fuse_out:
        wo_ref, bo_ref, out_ref, h_scratch, gi_scratch = rest
        y_ref = None
    else:
        y_ref, h_scratch, gi_scratch = rest
        wo_ref = bo_ref = out_ref = None

    d = pl.program_id(0)     # direction: 0 = forward, 1 = backward
    c = pl.program_id(1)     # sequence chunk (runs sequentially per direction)
    last_chunk = pl.num_programs(1) - 1

    @pl.when(c == 0)
    def _init():
        h_scratch[...] = jnp.zeros_like(h_scratch)

    # Hoisted input projection: one big MXU matmul for the whole chunk.
    gi_scratch[...] = (
        jnp.dot(x_ref[...], w_ih_ref[...], preferred_element_type=jnp.float32)
        + bgi_ref[...])

    b_hn = bhn_ref[...]                                     # (1, H) f32

    # Recurrence: the hidden state lives in vregs across the unrolled steps;
    # VMEM scratch is touched only at chunk boundaries (it persists across
    # grid iterations).  One unrolled body serves both directions via a
    # per-step scalar row select, halving the emitted code.
    # NOTE: keep chunk_steps <= ~16 with this full static unroll; beyond that
    # switch to lax.fori_loop(..., unroll=4/8) to bound vreg live ranges.
    h = h_scratch[...]                                      # (B, H) f32
    for step in range(chunk_steps):
        # forward walks rows 0..T-1 of the chunk, backward walks T-1..0.
        row = step + d * (chunk_steps - 1 - 2 * step)
        lo = pl.multiple_of(row * batch, batch)
        gh = jnp.dot(h.astype(w_hh_ref.dtype), w_hh_ref[...],
                     preferred_element_type=jnp.float32)    # (B, 3H)
        gi_t = gi_scratch[pl.ds(lo, batch), :]              # (B, 3H)
        r = jax.nn.sigmoid(gi_t[:, :hidden] + gh[:, :hidden])
        z = jax.nn.sigmoid(gi_t[:, hidden:2 * hidden]
                           + gh[:, hidden:2 * hidden])
        n = jnp.tanh(gi_t[:, 2 * hidden:]
                     + r * (gh[:, 2 * hidden:] + b_hn))
        h = n + z * (h - n)          # == (1-z)*n + z*h, one fewer VPU mul
        if not fuse_out:
            y_ref[pl.ds(lo, batch), :] = h.astype(y_ref.dtype)

    h_scratch[...] = h               # carry state to the next chunk

    if fuse_out:
        # Last layer: fused classifier.  This direction's partial contribution
        # is h_d @ W_out[d*H:(d+1)*H]; the bias is added once (direction 0).
        @pl.when(c == last_chunk)
        def _classifier():
            part = jnp.dot(h.astype(wo_ref.dtype), wo_ref[...],
                           preferred_element_type=jnp.float32)
            bias = jnp.where(d == 0, bo_ref[...], jnp.zeros_like(bo_ref[...]))
            out_ref[...] = part + bias


# ---------------------------------------------------------------------------
# Wrappers (pallas_call plumbing)
# ---------------------------------------------------------------------------
def _gru_vmem_budget(tb, din, h3, hidden, batch, o_pad, fuse_out):
    """Per-core VMEM footprint estimate (bytes), double-buffered where Pallas
    double-buffers, with headroom for Mosaic-internal scratch.  Capped at
    v7x's 64 MiB so the same kernel stays portable across generations."""
    bf16, f32 = 2, 4
    x_in = 2 * tb * din * bf16                                # pipelined input
    weights = 2 * (din * h3 * bf16 + hidden * h3 * bf16
                   + h3 * f32 + hidden * f32)                 # per-dir params
    if fuse_out:
        weights += 2 * (hidden * o_pad * bf16 + o_pad * f32)
        outs = 2 * batch * o_pad * f32
    else:
        outs = 2 * tb * hidden * bf16
    scratch = batch * hidden * f32 + tb * h3 * f32
    total = x_in + weights + outs + scratch
    return int(min(64 << 20, max(32 << 20, 4 * total)))


def gru_layer(x_flat, w_ih, w_hh, bgi, bhn, *, seq_len, batch, chunk_steps,
              out_w=None, out_b=None):
    """x_flat: (S*B, Din) bf16.

    Intermediate layers (out_w is None) return the sequence output
    y (S*B, num_dirs*H) bf16.  The last layer (out_w given) returns the
    per-direction partial classifier outputs (num_dirs, B, Opad) f32.
    """
    fuse_out = out_w is not None
    sb, din = x_flat.shape
    num_dirs, _, h3 = w_ih.shape
    hidden = h3 // 3
    assert sb == seq_len * batch
    assert seq_len % chunk_steps == 0
    n_chunks = seq_len // chunk_steps
    tb = chunk_steps * batch

    def row_block(d, c):
        # forward direction walks chunks 0..n-1, backward walks n-1..0
        return c + d * (n_chunks - 1 - 2 * c)

    kernel = functools.partial(gru_layer_kernel, chunk_steps=chunk_steps,
                               batch=batch, hidden=hidden, fuse_out=fuse_out)

    in_specs = [
        pl.BlockSpec((tb, din), lambda d, c: (row_block(d, c), 0)),
        pl.BlockSpec((None, din, h3), lambda d, c: (d, 0, 0)),
        pl.BlockSpec((None, hidden, h3), lambda d, c: (d, 0, 0)),
        pl.BlockSpec((None, 1, h3), lambda d, c: (d, 0, 0)),
        pl.BlockSpec((None, 1, hidden), lambda d, c: (d, 0, 0)),
    ]
    args = [x_flat, w_ih, w_hh, bgi, bhn]

    if fuse_out:
        o_pad = out_w.shape[-1]
        in_specs += [
            pl.BlockSpec((None, hidden, o_pad), lambda d, c: (d, 0, 0)),
            pl.BlockSpec((1, o_pad), lambda d, c: (0, 0)),
        ]
        args += [out_w, out_b]
        out_shape = jax.ShapeDtypeStruct((num_dirs, batch, o_pad), jnp.float32)
        out_specs = pl.BlockSpec((None, batch, o_pad), lambda d, c: (d, 0, 0))
    else:
        o_pad = 0
        # each direction writes directly into its half of the concatenated
        # layer output -> no wrapper-side concat pass.
        out_shape = jax.ShapeDtypeStruct((sb, num_dirs * hidden), jnp.bfloat16)
        out_specs = pl.BlockSpec((tb, hidden),
                                 lambda d, c: (row_block(d, c), d))

    vmem_bytes = _gru_vmem_budget(tb, din, h3, hidden, batch, o_pad, fuse_out)

    return pl.pallas_call(
        kernel,
        out_shape=out_shape,
        grid=(num_dirs, n_chunks),
        in_specs=in_specs,
        out_specs=out_specs,
        scratch_shapes=[
            pltpu.VMEM((batch, hidden), jnp.float32),   # recurrent state
            pltpu.VMEM((tb, h3), jnp.float32),          # hoisted projection
        ],
        compiler_params=pltpu.CompilerParams(
            # direction axis = independent work (core-split axis on v7x's
            # 2 TCs); chunk axis carries the recurrence -> "arbitrary".
            dimension_semantics=("parallel", "arbitrary"),
            vmem_limit_bytes=vmem_bytes),
    )(*args)


# ---------------------------------------------------------------------------
# Model: parameters + forward
# ---------------------------------------------------------------------------
def init_params(key, vocab_size, emb_dim, hidden_dim, output_dim, n_layers,
                bidirectional):
    num_dirs = 2 if bidirectional else 1
    params = {}
    key, k_emb = jax.random.split(key)
    params["emb"] = jax.random.normal(k_emb, (vocab_size, emb_dim),
                                      jnp.float32) * 0.02

    std = 1.0 / np.sqrt(hidden_dim)
    layers = []
    for layer in range(n_layers):
        in_dim = emb_dim if layer == 0 else hidden_dim * num_dirs
        w_ih_l, w_hh_l, bgi_l, bhn_l = [], [], [], []
        for _ in range(num_dirs):
            key, k1, k2, k3, k4 = jax.random.split(key, 5)
            # PyTorch convention: weight_ih (3H, in_dim), gates [r|z|n].
            w_ih = jax.random.uniform(k1, (3 * hidden_dim, in_dim),
                                      jnp.float32, -std, std)
            w_hh = jax.random.uniform(k2, (3 * hidden_dim, hidden_dim),
                                      jnp.float32, -std, std)
            b_ih = jax.random.uniform(k3, (3 * hidden_dim,), jnp.float32,
                                      -std, std)
            b_hh = jax.random.uniform(k4, (3 * hidden_dim,), jnp.float32,
                                      -std, std)
            # Fold b_ih (+ the r/z part of b_hh) into the hoisted projection
            # bias; keep b_hh[n] separate (it sits inside the r* product).
            bgi = b_ih + jnp.concatenate(
                [b_hh[:2 * hidden_dim],
                 jnp.zeros((hidden_dim,), jnp.float32)])
            bhn = b_hh[2 * hidden_dim:]
            w_ih_l.append(w_ih.T.astype(jnp.bfloat16))   # (Din, 3H) bf16
            w_hh_l.append(w_hh.T.astype(jnp.bfloat16))   # (H, 3H)  bf16
            bgi_l.append(bgi.reshape(1, -1))             # (1, 3H)  f32
            bhn_l.append(bhn.reshape(1, -1))             # (1, H)   f32
        layers.append((jnp.stack(w_ih_l), jnp.stack(w_hh_l),
                       jnp.stack(bgi_l), jnp.stack(bhn_l)))
    params["gru"] = layers

    fan_in = hidden_dim * num_dirs
    std_o = 1.0 / np.sqrt(fan_in)
    key, k5, k6 = jax.random.split(key, 3)
    w_out = jax.random.uniform(k5, (output_dim, fan_in), jnp.float32,
                               -std_o, std_o)            # PyTorch (out, in)
    b_out = jax.random.uniform(k6, (output_dim,), jnp.float32, -std_o, std_o)
    o_pad = 128                                          # lane-dense padding
    w_pad = (jnp.zeros((fan_in, o_pad), jnp.float32)
             .at[:, :output_dim].set(w_out.T))
    # split per direction: h_fin @ W = h_fwd @ W[:H] + h_bwd @ W[H:]
    params["out_w"] = (w_pad.reshape(num_dirs, hidden_dim, o_pad)
                       .astype(jnp.bfloat16))
    params["out_b"] = (jnp.zeros((1, o_pad), jnp.float32)
                       .at[:, :output_dim].set(b_out.reshape(1, -1)))
    return params


def bert_gru_sentiment_forward(text, params, output_dim, chunk_steps):
    b, s = text.shape
    # "BERT" stand-in: embedding lookup -> (B, S, E), then flattened time-major.
    embedded = jnp.take(params["emb"], text, axis=0)
    x = jnp.transpose(embedded, (1, 0, 2)).reshape(s * b, -1)
    x = x.astype(jnp.bfloat16)
    n_layers = len(params["gru"])
    partials = None
    for li, layer_p in enumerate(params["gru"]):
        if li == n_layers - 1:
            # Last layer: classifier fused into the kernel (per-direction
            # partials of hidden[-2:] @ W_out, summed below).
            partials = gru_layer(x, *layer_p, seq_len=s, batch=b,
                                 chunk_steps=chunk_steps,
                                 out_w=params["out_w"], out_b=params["out_b"])
        else:
            x = gru_layer(x, *layer_p, seq_len=s, batch=b,
                          chunk_steps=chunk_steps)
    # dropout -> identity (eval)
    out_pad = jnp.sum(partials, axis=0)          # (B, Opad) f32
    return out_pad[:, :output_dim]


# ---------------------------------------------------------------------------
# Pure-JAX reference (mirrors the kernel's bf16 matmul / f32 gate-math casts)
# ---------------------------------------------------------------------------
def _gru_dir_ref(x_flat, w_ih, w_hh, bgi, bhn, seq_len, batch, reverse):
    h_dim = w_hh.shape[0]
    gi_all = (jnp.dot(x_flat, w_ih, preferred_element_type=jnp.float32)
              + bgi)                                   # (S*B, 3H) f32
    h = jnp.zeros((batch, h_dim), jnp.float32)
    ys = [None] * seq_len
    order = range(seq_len - 1, -1, -1) if reverse else range(seq_len)
    for t in order:
        gi = gi_all[t * batch:(t + 1) * batch]
        gh = jnp.dot(h.astype(jnp.bfloat16), w_hh,
                     preferred_element_type=jnp.float32)
        r = jax.nn.sigmoid(gi[:, :h_dim] + gh[:, :h_dim])
        z = jax.nn.sigmoid(gi[:, h_dim:2 * h_dim] + gh[:, h_dim:2 * h_dim])
        n = jnp.tanh(gi[:, 2 * h_dim:] + r * (gh[:, 2 * h_dim:] + bhn))
        h = n + z * (h - n)
        ys[t] = h
    return jnp.concatenate(ys, axis=0), h


def _forward_ref(text, params, output_dim):
    b, s = text.shape
    embedded = jnp.take(params["emb"], text, axis=0)
    x = jnp.transpose(embedded, (1, 0, 2)).reshape(s * b, -1)
    x = x.astype(jnp.bfloat16)
    h_fin = None
    for (w_ih, w_hh, bgi, bhn) in params["gru"]:
        num_dirs = w_ih.shape[0]
        ys, hs = [], []
        for d in range(num_dirs):
            y, h = _gru_dir_ref(x, w_ih[d], w_hh[d], bgi[d], bhn[d],
                                s, b, reverse=(d == 1))
            ys.append(y)
            hs.append(h)
        x = jnp.concatenate(ys, axis=-1).astype(jnp.bfloat16)
        h_fin = jnp.concatenate(hs, axis=-1).astype(jnp.bfloat16)
    nd, hd, o_pad = params["out_w"].shape
    w = params["out_w"].reshape(nd * hd, o_pad)
    out = (jnp.dot(h_fin, w, preferred_element_type=jnp.float32)
           + params["out_b"])
    return out[:, :output_dim]


# ---------------------------------------------------------------------------
if __name__ == "__main__":
    B, S = 16, 16         # batch = full sublane tile, S divisible by chunk
    VOCAB = 64
    EMB_DIM = 128         # bert.config.hidden_size stand-in (lane-dense)
    HIDDEN_DIM = 128      # lane-dense hidden so gate slices are full vregs
    OUTPUT_DIM = 1
    N_LAYERS = 2
    BIDIRECTIONAL = True
    CHUNK_STEPS = 8       # tb = CHUNK_STEPS*B = 128 rows per hoisted matmul

    key = jax.random.PRNGKey(0)
    key, k_text = jax.random.split(key)
    text = jax.random.randint(k_text, (B, S), 0, VOCAB, dtype=jnp.int32)

    params = init_params(key, VOCAB, EMB_DIM, HIDDEN_DIM, OUTPUT_DIM,
                         N_LAYERS, BIDIRECTIONAL)

    out = bert_gru_sentiment_forward(text, params, OUTPUT_DIM, CHUNK_STEPS)
    out = jax.block_until_ready(out)

    ref = jax.block_until_ready(_forward_ref(text, params, OUTPUT_DIM))
    np.testing.assert_allclose(np.asarray(out, dtype=np.float32),
                               np.asarray(ref, dtype=np.float32),
                               rtol=1e-2, atol=1e-2)

    assert out.shape == (B, OUTPUT_DIM)
    print("KERNEL_OK")
</pallas_src>

<mosaic_0001>
module attributes {stable_mosaic.version = 11 : i64} {
  func.func @gru_layer_kernel(%arg0: i32, %arg1: i32, %arg2: memref<128x128xbf16, #tpu.memory_space<vmem>>, %arg3: memref<1x128x384xbf16, #tpu.memory_space<vmem>>, %arg4: memref<1x128x384xbf16, #tpu.memory_space<vmem>>, %arg5: memref<1x1x384xf32, #tpu.memory_space<vmem>>, %arg6: memref<1x1x128xf32, #tpu.memory_space<vmem>>, %arg7: memref<128x128xbf16, #tpu.memory_space<vmem>>, %arg8: memref<16x128xf32, #tpu.memory_space<vmem>>, %arg9: memref<128x384xf32, #tpu.memory_space<vmem>>) attributes {dimension_semantics = [#tpu.dimension_semantics<parallel>, #tpu.dimension_semantics<arbitrary>], iteration_bounds = array<i64: 2, 2>, scalar_prefetch = 0 : i64, scratch_operands = 2 : i64, tpu.core_type = #tpu.core_type<tc>, window_params = [{transform_indices = @transform_0, window_bounds = array<i64: 128, 128>}, {transform_indices = @transform_1, window_bounds = array<i64: 1, 128, 384>}, {transform_indices = @transform_2, window_bounds = array<i64: 1, 128, 384>}, {transform_indices = @transform_3, window_bounds = array<i64: 1, 1, 384>}, {transform_indices = @transform_4, window_bounds = array<i64: 1, 1, 128>}, {transform_indices = @transform_5, window_bounds = array<i64: 128, 128>}]} {
    %c0_i32 = arith.constant 0 : i32
    %0 = arith.cmpi eq, %arg1, %c0_i32 : i32
    %1 = arith.extui %0 : i1 to i32
    %c0_i32_0 = arith.constant 0 : i32
    %2 = arith.cmpi ne, %1, %c0_i32_0 : i32
    scf.if %2 {
      %cst_93 = arith.constant 0.000000e+00 : f32
      %328 = vector.broadcast %cst_93 : f32 to vector<16x128xf32>
      %c0_94 = arith.constant 0 : index
      %c0_95 = arith.constant 0 : index
      %329 = vector.load %arg8[%c0_94, %c0_95] : memref<16x128xf32, #tpu.memory_space<vmem>>, vector<16x128xf32>
      tpu.vector_store %arg8[%c0_94, %c0_95], %328 {strides = array<i32>} : memref<16x128xf32, #tpu.memory_space<vmem>>, vector<16x128xf32>,
    } else {
    }
    %c0 = arith.constant 0 : index
    %c0_1 = arith.constant 0 : index
    %3 = vector.load %arg2[%c0, %c0_1] : memref<128x128xbf16, #tpu.memory_space<vmem>>, vector<128x128xbf16>
    %c0_2 = arith.constant 0 : index
    %c0_3 = arith.constant 0 : index
    %c0_4 = arith.constant 0 : index
    %4 = vector.load %arg3[%c0_2, %c0_3, %c0_4] : memref<1x128x384xbf16, #tpu.memory_space<vmem>>, vector<1x128x384xbf16>
    %5 = vector.shape_cast %4 : vector<1x128x384xbf16> to vector<128x384xbf16>
    %cst = arith.constant dense<0.000000e+00> : vector<128x384xf32>
    %6 = tpu.matmul %3, %5, %cst {dimension_numbers = #tpu.dot_dimension_numbers<[1], [0], [0], [1], [0, 0, 1, 1], [], []>} : vector<128x128xbf16>, vector<128x384xbf16>, vector<128x384xf32> -> vector<128x384xf32>
    %c0_5 = arith.constant 0 : index
    %c0_6 = arith.constant 0 : index
    %c0_7 = arith.constant 0 : index
    %7 = vector.load %arg5[%c0_5, %c0_6, %c0_7] : memref<1x1x384xf32, #tpu.memory_space<vmem>>, vector<1x1x384xf32>
    %8 = vector.shape_cast %7 : vector<1x1x384xf32> to vector<1x384xf32>
    %9 = vector.broadcast %8 : vector<1x384xf32> to vector<128x384xf32>
    %10 = arith.addf %6, %9 : vector<128x384xf32>
    %c0_8 = arith.constant 0 : index
    %c0_9 = arith.constant 0 : index
    %11 = vector.load %arg9[%c0_8, %c0_9] : memref<128x384xf32, #tpu.memory_space<vmem>>, vector<128x384xf32>
    tpu.vector_store %arg9[%c0_8, %c0_9], %10 {strides = array<i32>} : memref<128x384xf32, #tpu.memory_space<vmem>>, vector<128x384xf32>,
    %c0_10 = arith.constant 0 : index
    %c0_11 = arith.constant 0 : index
    %c0_12 = arith.constant 0 : index
    %12 = vector.load %arg6[%c0_10, %c0_11, %c0_12] : memref<1x1x128xf32, #tpu.memory_space<vmem>>, vector<1x1x128xf32>
    %13 = vector.shape_cast %12 : vector<1x1x128xf32> to vector<1x128xf32>
    %c0_13 = arith.constant 0 : index
    %c0_14 = arith.constant 0 : index
    %14 = vector.load %arg8[%c0_13, %c0_14] : memref<16x128xf32, #tpu.memory_space<vmem>>, vector<16x128xf32>
    %c7_i32 = arith.constant 7 : i32
    %15 = arith.muli %arg0, %c7_i32 : i32
    %c0_i32_15 = arith.constant 0 : i32
    %16 = arith.addi %c0_i32_15, %15 : i32
    %c16_i32 = arith.constant 16 : i32
    %17 = arith.muli %16, %c16_i32 : i32
    %18 = tpu.assume_multiple %17, 16 : i32
    %19 = arith.truncf %14 : vector<16x128xf32> to vector<16x128xbf16>
    %c0_16 = arith.constant 0 : index
    %c0_17 = arith.constant 0 : index
    %c0_18 = arith.constant 0 : index
    %20 = vector.load %arg4[%c0_16, %c0_17, %c0_18] : memref<1x128x384xbf16, #tpu.memory_space<vmem>>, vector<1x128x384xbf16>
    %21 = vector.shape_cast %20 : vector<1x128x384xbf16> to vector<128x384xbf16>
    %cst_19 = arith.constant dense<0.000000e+00> : vector<16x384xf32>
    %22 = tpu.matmul %19, %21, %cst_19 {dimension_numbers = #tpu.dot_dimension_numbers<[1], [0], [0], [1], [0, 0, 1, 1], [], []>} : vector<16x128xbf16>, vector<128x384xbf16>, vector<16x384xf32> -> vector<16x384xf32>
    %23 = arith.index_cast %18 : i32 to index
    %c0_20 = arith.constant 0 : index
    %24 = vector.load %arg9[%23, %c0_20] : memref<128x384xf32, #tpu.memory_space<vmem>>, vector<16x384xf32>
    %25 = vector.extract_strided_slice %24 {offsets = [0, 0], sizes = [16, 128], strides = [1, 1]} : vector<16x384xf32> to vector<16x128xf32>
    %26 = vector.extract_strided_slice %22 {offsets = [0, 0], sizes = [16, 128], strides = [1, 1]} : vector<16x384xf32> to vector<16x128xf32>
    %27 = arith.addf %25, %26 : vector<16x128xf32>
    %28 = arith.negf %27 : vector<16x128xf32>
    %29 = math.exp %28 : vector<16x128xf32>
    %cst_21 = arith.constant 1.000000e+00 : f32
    %30 = vector.broadcast %cst_21 : f32 to vector<16x128xf32>
    %31 = arith.addf %30, %29 : vector<16x128xf32>
    %32 = arith.divf %30, %31 : vector<16x128xf32>
    %33 = vector.extract_strided_slice %24 {offsets = [0, 128], sizes = [16, 128], strides = [1, 1]} : vector<16x384xf32> to vector<16x128xf32>
    %34 = vector.extract_strided_slice %22 {offsets = [0, 128], sizes = [16, 128], strides = [1, 1]} : vector<16x384xf32> to vector<16x128xf32>
    %35 = arith.addf %33, %34 : vector<16x128xf32>
    %36 = arith.negf %35 : vector<16x128xf32>
    %37 = math.exp %36 : vector<16x128xf32>
    %cst_22 = arith.constant 1.000000e+00 : f32
    %38 = vector.broadcast %cst_22 : f32 to vector<16x128xf32>
    %39 = arith.addf %38, %37 : vector<16x128xf32>
    %40 = arith.divf %38, %39 : vector<16x128xf32>
    %41 = vector.extract_strided_slice %24 {offsets = [0, 256], sizes = [16, 128], strides = [1, 1]} : vector<16x384xf32> to vector<16x128xf32>
    %42 = vector.extract_strided_slice %22 {offsets = [0, 256], sizes = [16, 128], strides = [1, 1]} : vector<16x384xf32> to vector<16x128xf32>
    %43 = vector.broadcast %13 : vector<1x128xf32> to vector<16x128xf32>
    %44 = arith.addf %42, %43 : vector<16x128xf32>
    %45 = arith.mulf %32, %44 : vector<16x128xf32>
    %46 = arith.addf %41, %45 : vector<16x128xf32>
    %47 = math.tanh %46 : vector<16x128xf32>
    %48 = arith.subf %14, %47 : vector<16x128xf32>
    %49 = arith.mulf %40, %48 : vector<16x128xf32>
    %50 = arith.addf %47, %49 : vector<16x128xf32>
    %51 = arith.truncf %50 : vector<16x128xf32> to vector<16x128xbf16>
    %52 = arith.index_cast %18 : i32 to index
    %c0_23 = arith.constant 0 : index
    %53 = vector.load %arg7[%52, %c0_23] : memref<128x128xbf16, #tpu.memory_space<vmem>>, vector<16x128xbf16>
    tpu.vector_store %arg7[%52, %c0_23], %51 {strides = array<i32>} : memref<128x128xbf16, #tpu.memory_space<vmem>>, vector<16x128xbf16>,
    %c5_i32 = arith.constant 5 : i32
    %54 = arith.muli %arg0, %c5_i32 : i32
    %c1_i32 = arith.constant 1 : i32
    %55 = arith.addi %c1_i32, %54 : i32
    %c16_i32_24 = arith.constant 16 : i32
    %56 = arith.muli %55, %c16_i32_24 : i32
    %57 = tpu.assume_multiple %56, 16 : i32
    %58 = arith.truncf %50 : vector<16x128xf32> to vector<16x128xbf16>
    %c0_25 = arith.constant 0 : index
    %c0_26 = arith.constant 0 : index
    %c0_27 = arith.constant 0 : index
    %59 = vector.load %arg4[%c0_25, %c0_26, %c0_27] : memref<1x128x384xbf16, #tpu.memory_space<vmem>>, vector<1x128x384xbf16>
    %60 = vector.shape_cast %59 : vector<1x128x384xbf16> to vector<128x384xbf16>
    %cst_28 = arith.constant dense<0.000000e+00> : vector<16x384xf32>
    %61 = tpu.matmul %58, %60, %cst_28 {dimension_numbers = #tpu.dot_dimension_numbers<[1], [0], [0], [1], [0, 0, 1, 1], [], []>} : vector<16x128xbf16>, vector<128x384xbf16>, vector<16x384xf32> -> vector<16x384xf32>
    %62 = arith.index_cast %57 : i32 to index
    %c0_29 = arith.constant 0 : index
    %63 = vector.load %arg9[%62, %c0_29] : memref<128x384xf32, #tpu.memory_space<vmem>>, vector<16x384xf32>
    %64 = vector.extract_strided_slice %63 {offsets = [0, 0], sizes = [16, 128], strides = [1, 1]} : vector<16x384xf32> to vector<16x128xf32>
    %65 = vector.extract_strided_slice %61 {offsets = [0, 0], sizes = [16, 128], strides = [1, 1]} : vector<16x384xf32> to vector<16x128xf32>
    %66 = arith.addf %64, %65 : vector<16x128xf32>
    %67 = arith.negf %66 : vector<16x128xf32>
    %68 = math.exp %67 : vector<16x128xf32>
    %cst_30 = arith.constant 1.000000e+00 : f32
    %69 = vector.broadcast %cst_30 : f32 to vector<16x128xf32>
    %70 = arith.addf %69, %68 : vector<16x128xf32>
    %71 = arith.divf %69, %70 : vector<16x128xf32>
    %72 = vector.extract_strided_slice %63 {offsets = [0, 128], sizes = [16, 128], strides = [1, 1]} : vector<16x384xf32> to vector<16x128xf32>
    %73 = vector.extract_strided_slice %61 {offsets = [0, 128], sizes = [16, 128], strides = [1, 1]} : vector<16x384xf32> to vector<16x128xf32>
    %74 = arith.addf %72, %73 : vector<16x128xf32>
    %75 = arith.negf %74 : vector<16x128xf32>
    %76 = math.exp %75 : vector<16x128xf32>
    %cst_31 = arith.constant 1.000000e+00 : f32
    %77 = vector.broadcast %cst_31 : f32 to vector<16x128xf32>
    %78 = arith.addf %77, %76 : vector<16x128xf32>
    %79 = arith.divf %77, %78 : vector<16x128xf32>
    %80 = vector.extract_strided_slice %63 {offsets = [0, 256], sizes = [16, 128], strides = [1, 1]} : vector<16x384xf32> to vector<16x128xf32>
    %81 = vector.extract_strided_slice %61 {offsets = [0, 256], sizes = [16, 128], strides = [1, 1]} : vector<16x384xf32> to vector<16x128xf32>
    %82 = vector.broadcast %13 : vector<1x128xf32> to vector<16x128xf32>
    %83 = arith.addf %81, %82 : vector<16x128xf32>
    %84 = arith.mulf %71, %83 : vector<16x128xf32>
    %85 = arith.addf %80, %84 : vector<16x128xf32>
    %86 = math.tanh %85 : vector<16x128xf32>
    %87 = arith.subf %50, %86 : vector<16x128xf32>
    %88 = arith.mulf %79, %87 : vector<16x128xf32>
    %89 = arith.addf %86, %88 : vector<16x128xf32>
    %90 = arith.truncf %89 : vector<16x128xf32> to vector<16x128xbf16>
    %91 = arith.index_cast %57 : i32 to index
    %c0_32 = arith.constant 0 : index
    %92 = vector.load %arg7[%91, %c0_32] : memref<128x128xbf16, #tpu.memory_space<vmem>>, vector<16x128xbf16>
    tpu.vector_store %arg7[%91, %c0_32], %90 {strides = array<i32>} : memref<128x128xbf16, #tpu.memory_space<vmem>>, vector<16x128xbf16>,
    %c3_i32 = arith.constant 3 : i32
    %93 = arith.muli %arg0, %c3_i32 : i32
    %c2_i32 = arith.constant 2 : i32
    %94 = arith.addi %c2_i32, %93 : i32
    %c16_i32_33 = arith.constant 16 : i32
    %95 = arith.muli %94, %c16_i32_33 : i32
    %96 = tpu.assume_multiple %95, 16 : i32
    %97 = arith.truncf %89 : vector<16x128xf32> to vector<16x128xbf16>
    %c0_34 = arith.constant 0 : index
    %c0_35 = arith.constant 0 : index
    %c0_36 = arith.constant 0 : index
    %98 = vector.load %arg4[%c0_34, %c0_35, %c0_36] : memref<1x128x384xbf16, #tpu.memory_space<vmem>>, vector<1x128x384xbf16>
    %99 = vector.shape_cast %98 : vector<1x128x384xbf16> to vector<128x384xbf16>
    %cst_37 = arith.constant dense<0.000000e+00> : vector<16x384xf32>
    %100 = tpu.matmul %97, %99, %cst_37 {dimension_numbers = #tpu.dot_dimension_numbers<[1], [0], [0], [1], [0, 0, 1, 1], [], []>} : vector<16x128xbf16>, vector<128x384xbf16>, vector<16x384xf32> -> vector<16x384xf32>
    %101 = arith.index_cast %96 : i32 to index
    %c0_38 = arith.constant 0 : index
    %102 = vector.load %arg9[%101, %c0_38] : memref<128x384xf32, #tpu.memory_space<vmem>>, vector<16x384xf32>
    %103 = vector.extract_strided_slice %102 {offsets = [0, 0], sizes = [16, 128], strides = [1, 1]} : vector<16x384xf32> to vector<16x128xf32>
    %104 = vector.extract_strided_slice %100 {offsets = [0, 0], sizes = [16, 128], strides = [1, 1]} : vector<16x384xf32> to vector<16x128xf32>
    %105 = arith.addf %103, %104 : vector<16x128xf32>
    %106 = arith.negf %105 : vector<16x128xf32>
    %107 = math.exp %106 : vector<16x128xf32>
    %cst_39 = arith.constant 1.000000e+00 : f32
    %108 = vector.broadcast %cst_39 : f32 to vector<16x128xf32>
    %109 = arith.addf %108, %107 : vector<16x128xf32>
    %110 = arith.divf %108, %109 : vector<16x128xf32>
    %111 = vector.extract_strided_slice %102 {offsets = [0, 128], sizes = [16, 128], strides = [1, 1]} : vector<16x384xf32> to vector<16x128xf32>
    %112 = vector.extract_strided_slice %100 {offsets = [0, 128], sizes = [16, 128], strides = [1, 1]} : vector<16x384xf32> to vector<16x128xf32>
    %113 = arith.addf %111, %112 : vector<16x128xf32>
    %114 = arith.negf %113 : vector<16x128xf32>
    %115 = math.exp %114 : vector<16x128xf32>
    %cst_40 = arith.constant 1.000000e+00 : f32
    %116 = vector.broadcast %cst_40 : f32 to vector<16x128xf32>
    %117 = arith.addf %116, %115 : vector<16x128xf32>
    %118 = arith.divf %116, %117 : vector<16x128xf32>
    %119 = vector.extract_strided_slice %102 {offsets = [0, 256], sizes = [16, 128], strides = [1, 1]} : vector<16x384xf32> to vector<16x128xf32>
    %120 = vector.extract_strided_slice %100 {offsets = [0, 256], sizes = [16, 128], strides = [1, 1]} : vector<16x384xf32> to vector<16x128xf32>
    %121 = vector.broadcast %13 : vector<1x128xf32> to vector<16x128xf32>
    %122 = arith.addf %120, %121 : vector<16x128xf32>
    %123 = arith.mulf %110, %122 : vector<16x128xf32>
    %124 = arith.addf %119, %123 : vector<16x128xf32>
    %125 = math.tanh %124 : vector<16x128xf32>
    %126 = arith.subf %89, %125 : vector<16x128xf32>
    %127 = arith.mulf %118, %126 : vector<16x128xf32>
    %128 = arith.addf %125, %127 : vector<16x128xf32>
    %129 = arith.truncf %128 : vector<16x128xf32> to vector<16x128xbf16>
    %130 = arith.index_cast %96 : i32 to index
    %c0_41 = arith.constant 0 : index
    %131 = vector.load %arg7[%130, %c0_41] : memref<128x128xbf16, #tpu.memory_space<vmem>>, vector<16x128xbf16>
    tpu.vector_store %arg7[%130, %c0_41], %129 {strides = array<i32>} : memref<128x128xbf16, #tpu.memory_space<vmem>>, vector<16x128xbf16>,
    %c1_i32_42 = arith.constant 1 : i32
    %132 = arith.muli %arg0, %c1_i32_42 : i32
    %c3_i32_43 = arith.constant 3 : i32
    %133 = arith.addi %c3_i32_43, %132 : i32
    %c16_i32_44 = arith.constant 16 : i32
    %134 = arith.muli %133, %c16_i32_44 : i32
    %135 = tpu.assume_multiple %134, 16 : i32
    %136 = arith.truncf %128 : vector<16x128xf32> to vector<16x128xbf16>
    %c0_45 = arith.constant 0 : index
    %c0_46 = arith.constant 0 : index
    %c0_47 = arith.constant 0 : index
    %137 = vector.load %arg4[%c0_45, %c0_46, %c0_47] : memref<1x128x384xbf16, #tpu.memory_space<vmem>>, vector<1x128x384xbf16>
    %138 = vector.shape_cast %137 : vector<1x128x384xbf16> to vector<128x384xbf16>
    %cst_48 = arith.constant dense<0.000000e+00> : vector<16x384xf32>
    %139 = tpu.matmul %136, %138, %cst_48 {dimension_numbers = #tpu.dot_dimension_numbers<[1], [0], [0], [1], [0, 0, 1, 1], [], []>} : vector<16x128xbf16>, vector<128x384xbf16>, vector<16x384xf32> -> vector<16x384xf32>
    %140 = arith.index_cast %135 : i32 to index
    %c0_49 = arith.constant 0 : index
    %141 = vector.load %arg9[%140, %c0_49] : memref<128x384xf32, #tpu.memory_space<vmem>>, vector<16x384xf32>
    %142 = vector.extract_strided_slice %141 {offsets = [0, 0], sizes = [16, 128], strides = [1, 1]} : vector<16x384xf32> to vector<16x128xf32>
    %143 = vector.extract_strided_slice %139 {offsets = [0, 0], sizes = [16, 128], strides = [1, 1]} : vector<16x384xf32> to vector<16x128xf32>
    %144 = arith.addf %142, %143 : vector<16x128xf32>
    %145 = arith.negf %144 : vector<16x128xf32>
    %146 = math.exp %145 : vector<16x128xf32>
    %cst_50 = arith.constant 1.000000e+00 : f32
    %147 = vector.broadcast %cst_50 : f32 to vector<16x128xf32>
    %148 = arith.addf %147, %146 : vector<16x128xf32>
    %149 = arith.divf %147, %148 : vector<16x128xf32>
    %150 = vector.extract_strided_slice %141 {offsets = [0, 128], sizes = [16, 128], strides = [1, 1]} : vector<16x384xf32> to vector<16x128xf32>
    %151 = vector.extract_strided_slice %139 {offsets = [0, 128], sizes = [16, 128], strides = [1, 1]} : vector<16x384xf32> to vector<16x128xf32>
    %152 = arith.addf %150, %151 : vector<16x128xf32>
    %153 = arith.negf %152 : vector<16x128xf32>
    %154 = math.exp %153 : vector<16x128xf32>
    %cst_51 = arith.constant 1.000000e+00 : f32
    %155 = vector.broadcast %cst_51 : f32 to vector<16x128xf32>
    %156 = arith.addf %155, %154 : vector<16x128xf32>
    %157 = arith.divf %155, %156 : vector<16x128xf32>
    %158 = vector.extract_strided_slice %141 {offsets = [0, 256], sizes = [16, 128], strides = [1, 1]} : vector<16x384xf32> to vector<16x128xf32>
    %159 = vector.extract_strided_slice %139 {offsets = [0, 256], sizes = [16, 128], strides = [1, 1]} : vector<16x384xf32> to vector<16x128xf32>
    %160 = vector.broadcast %13 : vector<1x128xf32> to vector<16x128xf32>
    %161 = arith.addf %159, %160 : vector<16x128xf32>
    %162 = arith.mulf %149, %161 : vector<16x128xf32>
    %163 = arith.addf %158, %162 : vector<16x128xf32>
    %164 = math.tanh %163 : vector<16x128xf32>
    %165 = arith.subf %128, %164 : vector<16x128xf32>
    %166 = arith.mulf %157, %165 : vector<16x128xf32>
    %167 = arith.addf %164, %166 : vector<16x128xf32>
    %168 = arith.truncf %167 : vector<16x128xf32> to vector<16x128xbf16>
    %169 = arith.index_cast %135 : i32 to index
    %c0_52 = arith.constant 0 : index
    %170 = vector.load %arg7[%169, %c0_52] : memref<128x128xbf16, #tpu.memory_space<vmem>>, vector<16x128xbf16>
    tpu.vector_store %arg7[%169, %c0_52], %168 {strides = array<i32>} : memref<128x128xbf16, #tpu.memory_space<vmem>>, vector<16x128xbf16>,
    %c-1_i32 = arith.constant -1 : i32
    %171 = arith.muli %arg0, %c-1_i32 : i32
    %c4_i32 = arith.constant 4 : i32
    %172 = arith.addi %c4_i32, %171 : i32
    %c16_i32_53 = arith.constant 16 : i32
    %173 = arith.muli %172, %c16_i32_53 : i32
    %174 = tpu.assume_multiple %173, 16 : i32
    %175 = arith.truncf %167 : vector<16x128xf32> to vector<16x128xbf16>
    %c0_54 = arith.constant 0 : index
    %c0_55 = arith.constant 0 : index
    %c0_56 = arith.constant 0 : index
    %176 = vector.load %arg4[%c0_54, %c0_55, %c0_56] : memref<1x128x384xbf16, #tpu.memory_space<vmem>>, vector<1x128x384xbf16>
    %177 = vector.shape_cast %176 : vector<1x128x384xbf16> to vector<128x384xbf16>
    %cst_57 = arith.constant dense<0.000000e+00> : vector<16x384xf32>
    %178 = tpu.matmul %175, %177, %cst_57 {dimension_numbers = #tpu.dot_dimension_numbers<[1], [0], [0], [1], [0, 0, 1, 1], [], []>} : vector<16x128xbf16>, vector<128x384xbf16>, vector<16x384xf32> -> vector<16x384xf32>
    %179 = arith.index_cast %174 : i32 to index
    %c0_58 = arith.constant 0 : index
    %180 = vector.load %arg9[%179, %c0_58] : memref<128x384xf32, #tpu.memory_space<vmem>>, vector<16x384xf32>
    %181 = vector.extract_strided_slice %180 {offsets = [0, 0], sizes = [16, 128], strides = [1, 1]} : vector<16x384xf32> to vector<16x128xf32>
    %182 = vector.extract_strided_slice %178 {offsets = [0, 0], sizes = [16, 128], strides = [1, 1]} : vector<16x384xf32> to vector<16x128xf32>
    %183 = arith.addf %181, %182 : vector<16x128xf32>
    %184 = arith.negf %183 : vector<16x128xf32>
    %185 = math.exp %184 : vector<16x128xf32>
    %cst_59 = arith.constant 1.000000e+00 : f32
    %186 = vector.broadcast %cst_59 : f32 to vector<16x128xf32>
    %187 = arith.addf %186, %185 : vector<16x128xf32>
    %188 = arith.divf %186, %187 : vector<16x128xf32>
    %189 = vector.extract_strided_slice %180 {offsets = [0, 128], sizes = [16, 128], strides = [1, 1]} : vector<16x384xf32> to vector<16x128xf32>
    %190 = vector.extract_strided_slice %178 {offsets = [0, 128], sizes = [16, 128], strides = [1, 1]} : vector<16x384xf32> to vector<16x128xf32>
    %191 = arith.addf %189, %190 : vector<16x128xf32>
    %192 = arith.negf %191 : vector<16x128xf32>
    %193 = math.exp %192 : vector<16x128xf32>
    %cst_60 = arith.constant 1.000000e+00 : f32
    %194 = vector.broadcast %cst_60 : f32 to vector<16x128xf32>
    %195 = arith.addf %194, %193 : vector<16x128xf32>
    %196 = arith.divf %194, %195 : vector<16x128xf32>
    %197 = vector.extract_strided_slice %180 {offsets = [0, 256], sizes = [16, 128], strides = [1, 1]} : vector<16x384xf32> to vector<16x128xf32>
    %198 = vector.extract_strided_slice %178 {offsets = [0, 256], sizes = [16, 128], strides = [1, 1]} : vector<16x384xf32> to vector<16x128xf32>
    %199 = vector.broadcast %13 : vector<1x128xf32> to vector<16x128xf32>
    %200 = arith.addf %198, %199 : vector<16x128xf32>
    %201 = arith.mulf %188, %200 : vector<16x128xf32>
    %202 = arith.addf %197, %201 : vector<16x128xf32>
    %203 = math.tanh %202 : vector<16x128xf32>
    %204 = arith.subf %167, %203 : vector<16x128xf32>
    %205 = arith.mulf %196, %204 : vector<16x128xf32>
    %206 = arith.addf %203, %205 : vector<16x128xf32>
    %207 = arith.truncf %206 : vector<16x128xf32> to vector<16x128xbf16>
    %208 = arith.index_cast %174 : i32 to index
    %c0_61 = arith.constant 0 : index
    %209 = vector.load %arg7[%208, %c0_61] : memref<128x128xbf16, #tpu.memory_space<vmem>>, vector<16x128xbf16>
    tpu.vector_store %arg7[%208, %c0_61], %207 {strides = array<i32>} : memref<128x128xbf16, #tpu.memory_space<vmem>>, vector<16x128xbf16>,
    %c-3_i32 = arith.constant -3 : i32
    %210 = arith.muli %arg0, %c-3_i32 : i32
    %c5_i32_62 = arith.constant 5 : i32
    %211 = arith.addi %c5_i32_62, %210 : i32
    %c16_i32_63 = arith.constant 16 : i32
    %212 = arith.muli %211, %c16_i32_63 : i32
    %213 = tpu.assume_multiple %212, 16 : i32
    %214 = arith.truncf %206 : vector<16x128xf32> to vector<16x128xbf16>
    %c0_64 = arith.constant 0 : index
    %c0_65 = arith.constant 0 : index
    %c0_66 = arith.constant 0 : index
    %215 = vector.load %arg4[%c0_64, %c0_65, %c0_66] : memref<1x128x384xbf16, #tpu.memory_space<vmem>>, vector<1x128x384xbf16>
    %216 = vector.shape_cast %215 : vector<1x128x384xbf16> to vector<128x384xbf16>
    %cst_67 = arith.constant dense<0.000000e+00> : vector<16x384xf32>
    %217 = tpu.matmul %214, %216, %cst_67 {dimension_numbers = #tpu.dot_dimension_numbers<[1], [0], [0], [1], [0, 0, 1, 1], [], []>} : vector<16x128xbf16>, vector<128x384xbf16>, vector<16x384xf32> -> vector<16x384xf32>
    %218 = arith.index_cast %213 : i32 to index
    %c0_68 = arith.constant 0 : index
    %219 = vector.load %arg9[%218, %c0_68] : memref<128x384xf32, #tpu.memory_space<vmem>>, vector<16x384xf32>
    %220 = vector.extract_strided_slice %219 {offsets = [0, 0], sizes = [16, 128], strides = [1, 1]} : vector<16x384xf32> to vector<16x128xf32>
    %221 = vector.extract_strided_slice %217 {offsets = [0, 0], sizes = [16, 128], strides = [1, 1]} : vector<16x384xf32> to vector<16x128xf32>
    %222 = arith.addf %220, %221 : vector<16x128xf32>
    %223 = arith.negf %222 : vector<16x128xf32>
    %224 = math.exp %223 : vector<16x128xf32>
    %cst_69 = arith.constant 1.000000e+00 : f32
    %225 = vector.broadcast %cst_69 : f32 to vector<16x128xf32>
    %226 = arith.addf %225, %224 : vector<16x128xf32>
    %227 = arith.divf %225, %226 : vector<16x128xf32>
    %228 = vector.extract_strided_slice %219 {offsets = [0, 128], sizes = [16, 128], strides = [1, 1]} : vector<16x384xf32> to vector<16x128xf32>
    %229 = vector.extract_strided_slice %217 {offsets = [0, 128], sizes = [16, 128], strides = [1, 1]} : vector<16x384xf32> to vector<16x128xf32>
    %230 = arith.addf %228, %229 : vector<16x128xf32>
    %231 = arith.negf %230 : vector<16x128xf32>
    %232 = math.exp %231 : vector<16x128xf32>
    %cst_70 = arith.constant 1.000000e+00 : f32
    %233 = vector.broadcast %cst_70 : f32 to vector<16x128xf32>
    %234 = arith.addf %233, %232 : vector<16x128xf32>
    %235 = arith.divf %233, %234 : vector<16x128xf32>
    %236 = vector.extract_strided_slice %219 {offsets = [0, 256], sizes = [16, 128], strides = [1, 1]} : vector<16x384xf32> to vector<16x128xf32>
    %237 = vector.extract_strided_slice %217 {offsets = [0, 256], sizes = [16, 128], strides = [1, 1]} : vector<16x384xf32> to vector<16x128xf32>
    %238 = vector.broadcast %13 : vector<1x128xf32> to vector<16x128xf32>
    %239 = arith.addf %237, %238 : vector<16x128xf32>
    %240 = arith.mulf %227, %239 : vector<16x128xf32>
    %241 = arith.addf %236, %240 : vector<16x128xf32>
    %242 = math.tanh %241 : vector<16x128xf32>
    %243 = arith.subf %206, %242 : vector<16x128xf32>
    %244 = arith.mulf %235, %243 : vector<16x128xf32>
    %245 = arith.addf %242, %244 : vector<16x128xf32>
    %246 = arith.truncf %245 : vector<16x128xf32> to vector<16x128xbf16>
    %247 = arith.index_cast %213 : i32 to index
    %c0_71 = arith.constant 0 : index
    %248 = vector.load %arg7[%247, %c0_71] : memref<128x128xbf16, #tpu.memory_space<vmem>>, vector<16x128xbf16>
    tpu.vector_store %arg7[%247, %c0_71], %246 {strides = array<i32>} : memref<128x128xbf16, #tpu.memory_space<vmem>>, vector<16x128xbf16>,
    %c-5_i32 = arith.constant -5 : i32
    %249 = arith.muli %arg0, %c-5_i32 : i32
    %c6_i32 = arith.constant 6 : i32
    %250 = arith.addi %c6_i32, %249 : i32
    %c16_i32_72 = arith.constant 16 : i32
    %251 = arith.muli %250, %c16_i32_72 : i32
    %252 = tpu.assume_multiple %251, 16 : i32
    %253 = arith.truncf %245 : vector<16x128xf32> to vector<16x128xbf16>
    %c0_73 = arith.constant 0 : index
    %c0_74 = arith.constant 0 : index
    %c0_75 = arith.constant 0 : index
    %254 = vector.load %arg4[%c0_73, %c0_74, %c0_75] : memref<1x128x384xbf16, #tpu.memory_space<vmem>>, vector<1x128x384xbf16>
    %255 = vector.shape_cast %254 : vector<1x128x384xbf16> to vector<128x384xbf16>
    %cst_76 = arith.constant dense<0.000000e+00> : vector<16x384xf32>
    %256 = tpu.matmul %253, %255, %cst_76 {dimension_numbers = #tpu.dot_dimension_numbers<[1], [0], [0], [1], [0, 0, 1, 1], [], []>} : vector<16x128xbf16>, vector<128x384xbf16>, vector<16x384xf32> -> vector<16x384xf32>
    %257 = arith.index_cast %252 : i32 to index
    %c0_77 = arith.constant 0 : index
    %258 = vector.load %arg9[%257, %c0_77] : memref<128x384xf32, #tpu.memory_space<vmem>>, vector<16x384xf32>
    %259 = vector.extract_strided_slice %258 {offsets = [0, 0], sizes = [16, 128], strides = [1, 1]} : vector<16x384xf32> to vector<16x128xf32>
    %260 = vector.extract_strided_slice %256 {offsets = [0, 0], sizes = [16, 128], strides = [1, 1]} : vector<16x384xf32> to vector<16x128xf32>
    %261 = arith.addf %259, %260 : vector<16x128xf32>
    %262 = arith.negf %261 : vector<16x128xf32>
    %263 = math.exp %262 : vector<16x128xf32>
    %cst_78 = arith.constant 1.000000e+00 : f32
    %264 = vector.broadcast %cst_78 : f32 to vector<16x128xf32>
    %265 = arith.addf %264, %263 : vector<16x128xf32>
    %266 = arith.divf %264, %265 : vector<16x128xf32>
    %267 = vector.extract_strided_slice %258 {offsets = [0, 128], sizes = [16, 128], strides = [1, 1]} : vector<16x384xf32> to vector<16x128xf32>
    %268 = vector.extract_strided_slice %256 {offsets = [0, 128], sizes = [16, 128], strides = [1, 1]} : vector<16x384xf32> to vector<16x128xf32>
    %269 = arith.addf %267, %268 : vector<16x128xf32>
    %270 = arith.negf %269 : vector<16x128xf32>
    %271 = math.exp %270 : vector<16x128xf32>
    %cst_79 = arith.constant 1.000000e+00 : f32
    %272 = vector.broadcast %cst_79 : f32 to vector<16x128xf32>
    %273 = arith.addf %272, %271 : vector<16x128xf32>
    %274 = arith.divf %272, %273 : vector<16x128xf32>
    %275 = vector.extract_strided_slice %258 {offsets = [0, 256], sizes = [16, 128], strides = [1, 1]} : vector<16x384xf32> to vector<16x128xf32>
    %276 = vector.extract_strided_slice %256 {offsets = [0, 256], sizes = [16, 128], strides = [1, 1]} : vector<16x384xf32> to vector<16x128xf32>
    %277 = vector.broadcast %13 : vector<1x128xf32> to vector<16x128xf32>
    %278 = arith.addf %276, %277 : vector<16x128xf32>
    %279 = arith.mulf %266, %278 : vector<16x128xf32>
    %280 = arith.addf %275, %279 : vector<16x128xf32>
    %281 = math.tanh %280 : vector<16x128xf32>
    %282 = arith.subf %245, %281 : vector<16x128xf32>
    %283 = arith.mulf %274, %282 : vector<16x128xf32>
    %284 = arith.addf %281, %283 : vector<16x128xf32>
    %285 = arith.truncf %284 : vector<16x128xf32> to vector<16x128xbf16>
    %286 = arith.index_cast %252 : i32 to index
    %c0_80 = arith.constant 0 : index
    %287 = vector.load %arg7[%286, %c0_80] : memref<128x128xbf16, #tpu.memory_space<vmem>>, vector<16x128xbf16>
    tpu.vector_store %arg7[%286, %c0_80], %285 {strides = array<i32>} : memref<128x128xbf16, #tpu.memory_space<vmem>>, vector<16x128xbf16>,
    %c-7_i32 = arith.constant -7 : i32
    %288 = arith.muli %arg0, %c-7_i32 : i32
    %c7_i32_81 = arith.constant 7 : i32
    %289 = arith.addi %c7_i32_81, %288 : i32
    %c16_i32_82 = arith.constant 16 : i32
    %290 = arith.muli %289, %c16_i32_82 : i32
    %291 = tpu.assume_multiple %290, 16 : i32
    %292 = arith.truncf %284 : vector<16x128xf32> to vector<16x128xbf16>
    %c0_83 = arith.constant 0 : index
    %c0_84 = arith.constant 0 : index
    %c0_85 = arith.constant 0 : index
    %293 = vector.load %arg4[%c0_83, %c0_84, %c0_85] : memref<1x128x384xbf16, #tpu.memory_space<vmem>>, vector<1x128x384xbf16>
    %294 = vector.shape_cast %293 : vector<1x128x384xbf16> to vector<128x384xbf16>
    %cst_86 = arith.constant dense<0.000000e+00> : vector<16x384xf32>
    %295 = tpu.matmul %292, %294, %cst_86 {dimension_numbers = #tpu.dot_dimension_numbers<[1], [0], [0], [1], [0, 0, 1, 1], [], []>} : vector<16x128xbf16>, vector<128x384xbf16>, vector<16x384xf32> -> vector<16x384xf32>
    %296 = arith.index_cast %291 : i32 to index
    %c0_87 = arith.constant 0 : index
    %297 = vector.load %arg9[%296, %c0_87] : memref<128x384xf32, #tpu.memory_space<vmem>>, vector<16x384xf32>
    %298 = vector.extract_strided_slice %297 {offsets = [0, 0], sizes = [16, 128], strides = [1, 1]} : vector<16x384xf32> to vector<16x128xf32>
    %299 = vector.extract_strided_slice %295 {offsets = [0, 0], sizes = [16, 128], strides = [1, 1]} : vector<16x384xf32> to vector<16x128xf32>
    %300 = arith.addf %298, %299 : vector<16x128xf32>
    %301 = arith.negf %300 : vector<16x128xf32>
    %302 = math.exp %301 : vector<16x128xf32>
    %cst_88 = arith.constant 1.000000e+00 : f32
    %303 = vector.broadcast %cst_88 : f32 to vector<16x128xf32>
    %304 = arith.addf %303, %302 : vector<16x128xf32>
    %305 = arith.divf %303, %304 : vector<16x128xf32>
    %306 = vector.extract_strided_slice %297 {offsets = [0, 128], sizes = [16, 128], strides = [1, 1]} : vector<16x384xf32> to vector<16x128xf32>
    %307 = vector.extract_strided_slice %295 {offsets = [0, 128], sizes = [16, 128], strides = [1, 1]} : vector<16x384xf32> to vector<16x128xf32>
    %308 = arith.addf %306, %307 : vector<16x128xf32>
    %309 = arith.negf %308 : vector<16x128xf32>
    %310 = math.exp %309 : vector<16x128xf32>
    %cst_89 = arith.constant 1.000000e+00 : f32
    %311 = vector.broadcast %cst_89 : f32 to vector<16x128xf32>
    %312 = arith.addf %311, %310 : vector<16x128xf32>
    %313 = arith.divf %311, %312 : vector<16x128xf32>
    %314 = vector.extract_strided_slice %297 {offsets = [0, 256], sizes = [16, 128], strides = [1, 1]} : vector<16x384xf32> to vector<16x128xf32>
    %315 = vector.extract_strided_slice %295 {offsets = [0, 256], sizes = [16, 128], strides = [1, 1]} : vector<16x384xf32> to vector<16x128xf32>
    %316 = vector.broadcast %13 : vector<1x128xf32> to vector<16x128xf32>
    %317 = arith.addf %315, %316 : vector<16x128xf32>
    %318 = arith.mulf %305, %317 : vector<16x128xf32>
    %319 = arith.addf %314, %318 : vector<16x128xf32>
    %320 = math.tanh %319 : vector<16x128xf32>
    %321 = arith.subf %284, %320 : vector<16x128xf32>
    %322 = arith.mulf %313, %321 : vector<16x128xf32>
    %323 = arith.addf %320, %322 : vector<16x128xf32>
    %324 = arith.truncf %323 : vector<16x128xf32> to vector<16x128xbf16>
    %325 = arith.index_cast %291 : i32 to index
    %c0_90 = arith.constant 0 : index
    %326 = vector.load %arg7[%325, %c0_90] : memref<128x128xbf16, #tpu.memory_space<vmem>>, vector<16x128xbf16>
    tpu.vector_store %arg7[%325, %c0_90], %324 {strides = array<i32>} : memref<128x128xbf16, #tpu.memory_space<vmem>>, vector<16x128xbf16>,
    %c0_91 = arith.constant 0 : index
    %c0_92 = arith.constant 0 : index
    %327 = vector.load %arg8[%c0_91, %c0_92] : memref<16x128xf32, #tpu.memory_space<vmem>>, vector<16x128xf32>
    tpu.vector_store %arg8[%c0_91, %c0_92], %323 {strides = array<i32>} : memref<16x128xf32, #tpu.memory_space<vmem>>, vector<16x128xf32>,
    return
  }
  func.func @transform_0(%arg0: i32, %arg1: i32) -> (i32, i32) {
    %c2_i32 = arith.constant 2 : i32
    %0 = arith.muli %c2_i32, %arg1 : i32
    %c1_i32 = arith.constant 1 : i32
    %1 = arith.subi %c1_i32, %0 : i32
    %2 = arith.muli %arg0, %1 : i32
    %3 = arith.addi %arg1, %2 : i32
    %c0_i32 = arith.constant 0 : i32
    %c0_i32_0 = arith.constant 0 : i32
    return %3, %c0_i32 : i32, i32
  }
  func.func @transform_1(%arg0: i32, %arg1: i32) -> (i32, i32, i32) {
    %c0_i32 = arith.constant 0 : i32
    %c0_i32_0 = arith.constant 0 : i32
    %c0_i32_1 = arith.constant 0 : i32
    return %arg0, %c0_i32, %c0_i32_0 : i32, i32, i32
  }
  func.func @transform_2(%arg0: i32, %arg1: i32) -> (i32, i32, i32) {
    %c0_i32 = arith.constant 0 : i32
    %c0_i32_0 = arith.constant 0 : i32
    %c0_i32_1 = arith.constant 0 : i32
    return %arg0, %c0_i32, %c0_i32_0 : i32, i32, i32
  }
  func.func @transform_3(%arg0: i32, %arg1: i32) -> (i32, i32, i32) {
    %c0_i32 = arith.constant 0 : i32
    %c0_i32_0 = arith.constant 0 : i32
    %c0_i32_1 = arith.constant 0 : i32
    return %arg0, %c0_i32, %c0_i32_0 : i32, i32, i32
  }
  func.func @transform_4(%arg0: i32, %arg1: i32) -> (i32, i32, i32) {
    %c0_i32 = arith.constant 0 : i32
    %c0_i32_0 = arith.constant 0 : i32
    %c0_i32_1 = arith.constant 0 : i32
    return %arg0, %c0_i32, %c0_i32_0 : i32, i32, i32
  }
  func.func @transform_5(%arg0: i32, %arg1: i32) -> (i32, i32) {
    %c2_i32 = arith.constant 2 : i32
    %0 = arith.muli %c2_i32, %arg1 : i32
    %c1_i32 = arith.constant 1 : i32
    %1 = arith.subi %c1_i32, %0 : i32
    %2 = arith.muli %arg0, %1 : i32
    %3 = arith.addi %arg1, %2 : i32
    %c0_i32 = arith.constant 0 : i32
    return %3, %arg0 : i32, i32
  }
}

</mosaic_0001>

<llo_original>
// kernel: tpu_custom_call.1
$region0: #{tpu_custom_call.1}
  #allocation0 [shape = 'u32[]', space=smem, size = 0x4, offset = 0x4, fixed_abs, tag = 'smem constant byte address 0x4 - core index']
  #allocation1 [shape = 'u32[72,128]{1,0:T(1,128)}', space=vmem, size = 0x9000, scoped, tag = 'internal scratch']
  #allocation2 [shape = 'f32[16,128]{1,0:T(8,128)}', space=vmem, size = 0x2000, scoped, tag = 'scratch operand']
  #allocation3 [shape = 'f32[128,384]{1,0:T(8,128)}', space=vmem, size = 0x30000, scoped, tag = 'scratch operand']
  %s0 = inlined_call_operand.hbm [shape: bf16[256,128], index: 0, kind: input, shape index: {}]
  %s1 = inlined_call_operand.hbm [shape: bf16[2,128,384], index: 1, kind: input, shape index: {}]
  %s2 = inlined_call_operand.hbm [shape: bf16[2,128,384], index: 2, kind: input, shape index: {}]
  %s3 = inlined_call_operand.hbm [shape: f32[2,1,384], index: 3, kind: input, shape index: {}]
  %s4 = inlined_call_operand.vmem [shape: f32[2,1,128], index: 4, kind: input, shape index: {}]
  %s5 = inlined_call_operand.hbm [shape: bf16[256,256], index: 5, kind: output, shape index: {}]
  %s6 = sld [smem:[#allocation0]]
  $region73: #{tpu_custom_call.1} parent=0
    _
  %s8 = ssub.s32 1, %s6
  %s9 = scalar_select 0, %s8, %s6
  $region1: #{tpu_custom_call.1} parent=0
    #allocation4 [shape = 'u8[65536]{0}', space=vmem, size = 0x10000, scoped, tag = 'input window, operand 0']
    #allocation5 [shape = 's32[2]{0}', space=sflag, size = 0x8, scoped, tag = 'scoped memory for tpu_custom_call.1']
    #allocation6 [shape = 's32[2]{0}', space=sflag, size = 0x8, scoped, tag = 'scoped memory for tpu_custom_call.1']
    #allocation7 [shape = 'u8[196608]{0}', space=vmem, size = 0x30000, scoped, tag = 'input window, operand 1']
    #allocation8 [shape = 's32[2]{0}', space=sflag, size = 0x8, scoped, tag = 'scoped memory for tpu_custom_call.1']
    #allocation9 [shape = 'u8[196608]{0}', space=vmem, size = 0x30000, scoped, tag = 'input window, operand 2']
    #allocation10 [shape = 'u8[3072]{0}', space=vmem, size = 0xc00, scoped, tag = 'input window, operand 3']
    #allocation11 [shape = 's32[2]{0}', space=sflag, size = 0x8, scoped, tag = 'scoped memory for tpu_custom_call.1']
    #allocation12 [shape = 'u8[65536]{0}', space=vmem, size = 0x10000, scoped, tag = 'output window, operand 0']
    %10 = vsyncpa [#allocation5], 0
    %s11 = scalar_lea.sflag [#allocation5], 1
    %12 = vsyncpa %s11, 0
    %13 = vsyncpa [#allocation8], 0
    %s14 = scalar_lea.sflag [#allocation8], 1
    %15 = vsyncpa %s14, 0
    %16 = vsyncpa [#allocation11], 0
    %s17 = scalar_lea.sflag [#allocation11], 1
    %18 = vsyncpa %s17, 0
    %19 = vsyncpa [#allocation6], 0
    %s20 = scalar_lea.sflag [#allocation6], 1
    %21 = vsyncpa %s20, 0
    loop: start=0, step=1, limit=6
    $region2: #{tpu_custom_call.1} parent=1 // loop_pre_header
      _
    $region3: #{tpu_custom_call.1} parent=1 // loop_header
      %s23 = sphi 0, %s27
      %p24 = scmp.ge.s32.totalorder %s23, 6
      %s30 = sphi 0, %s42
      %s31 = sphi 0, %s38
      %s32 = sphi 0, %s30
      %s33 = sphi 0, %s31
      %s34 = sphi 0, %s32
      %s35 = sphi 0, %s33
      %s53 = sphi 0, %s55
      %s56 = sphi 0, %s53
      %s57 = sphi 0, %s56
      %s73 = sphi 0, %s57
      %s79 = sphi 0, %s81
      %s82 = sphi 0, %s79
      %s83 = sphi 0, %s82
      %s99 = sphi 0, %s83
      %s105 = sphi 0, %s107
      %s108 = sphi 0, %s105
      %s109 = sphi 0, %s108
      %s125 = sphi 0, %s109
      %s131 = sphi 0, %s133
      %s134 = sphi 0, %s131
      %s135 = sphi 0, %s134
      %s151 = sphi 0, %s135
      %s157 = sphi 0, %s159
      %s160 = sphi 0, %s157
      %s161 = sphi 0, %s160
      %s177 = sphi 0, %s161
      %s193 = sphi 0, %s195
      %s196 = sphi 0, %s193
      %s197 = sphi 0, %s196
      %s213 = sphi 0, %s197
    $region4: #{tpu_custom_call.1} parent=1 // loop_header_branch
      %26 = sbr.rel (%p24) target = $region8
    $region5: #{tpu_custom_call.1} parent=1 // loop_body
      %s28 = ssub.s32 %s23, 1
      %s29 = ssub.s32 %s23, 2
      %s36 = sadd.s32 1, %s31
      %p37 = scmp.ge.s32.totalorder %s36, 2
      %s38 = scalar_select %p37, 0, %s36
      %s39 = sadd.s32 1, %s30
      %s40 = scalar_select %p37, %s39, %s30
      %p41 = scmp.ge.s32.totalorder %s40, 2
      %s42 = scalar_select %p41, 0, %s40
      %s43 = smul.u32 %s31, 2
      %s44 = ssub.s32 1, %s43
      %s45 = smul.u32 %s30, %s44
      %s46 = sadd.s32 %s31, %s45
      %s47 = smul.u32 %s38, 2
      %s48 = ssub.s32 1, %s47
      %s49 = smul.u32 %s42, %s48
      %s50 = sadd.s32 %s38, %s49
      %s51 = ssub.s32 %s46, %s50
      %p52 = scmp.eq.s32.totalorder %s51, 0
      %s54 = sadd.s32 %s53, 1
      %s55 = scalar_select %p52, %s53, %s54
      %p58 = pneg %p52
      %p59 = scmp.eq.s32.totalorder %s23, 3
      %p60 = por %p58, %p59
      %p61 = scmp.ne.s32.totalorder %s53, %s56
      %p62 = scmp.eq.s32.totalorder %s23, 0
      %p63 = por %p61, %p62
      %p64 = scmp.ne.s32.totalorder %s53, %s56
      %p65 = scmp.eq.s32.totalorder %s28, 3
      %p66 = por %p64, %p65
      %p67 = scmp.ne.s32.totalorder %s56, %s57
      %p68 = scmp.eq.s32.totalorder %s28, 0
      %p69 = por %p67, %p68
      %p70 = scmp.ne.s32.totalorder %s56, %s57
      %p71 = scmp.eq.s32.totalorder %s29, 3
      %p72 = por %p70, %p71
      %p74 = scmp.ne.s32.totalorder %s57, %s73
      %p75 = scmp.eq.s32.totalorder %s29, 0
      %p76 = por %p74, %p75
      %s77 = ssub.s32 %s30, %s42
      %p78 = scmp.eq.s32.totalorder %s77, 0
      %s80 = sadd.s32 %s79, 1
      %s81 = scalar_select %p78, %s79, %s80
      %p84 = pneg %p78
      %p85 = scmp.eq.s32.totalorder %s23, 3
      %p86 = por %p84, %p85
      %p87 = scmp.ne.s32.totalorder %s79, %s82
      %p88 = scmp.eq.s32.totalorder %s23, 0
      %p89 = por %p87, %p88
      %p90 = scmp.ne.s32.totalorder %s79, %s82
      %p91 = scmp.eq.s32.totalorder %s28, 3
      %p92 = por %p90, %p91
      %p93 = scmp.ne.s32.totalorder %s82, %s83
      %p94 = scmp.eq.s32.totalorder %s28, 0
      %p95 = por %p93, %p94
      %p96 = scmp.ne.s32.totalorder %s82, %s83
      %p97 = scmp.eq.s32.totalorder %s29, 3
      %p98 = por %p96, %p97
      %p100 = scmp.ne.s32.totalorder %s83, %s99
      %p101 = scmp.eq.s32.totalorder %s29, 0
      %p102 = por %p100, %p101
      %s103 = ssub.s32 %s30, %s42
      %p104 = scmp.eq.s32.totalorder %s103, 0
      %s106 = sadd.s32 %s105, 1
      %s107 = scalar_select %p104, %s105, %s106
      %p110 = pneg %p104
      %p111 = scmp.eq.s32.totalorder %s23, 3
      %p112 = por %p110, %p111
      %p113 = scmp.ne.s32.totalorder %s105, %s108
      %p114 = scmp.eq.s32.totalorder %s23, 0
      %p115 = por %p113, %p114
      %p116 = scmp.ne.s32.totalorder %s105, %s108
      %p117 = scmp.eq.s32.totalorder %s28, 3
      %p118 = por %p116, %p117
      %p119 = scmp.ne.s32.totalorder %s108, %s109
      %p120 = scmp.eq.s32.totalorder %s28, 0
      %p121 = por %p119, %p120
      %p122 = scmp.ne.s32.totalorder %s108, %s109
      %p123 = scmp.eq.s32.totalorder %s29, 3
      %p124 = por %p122, %p123
      %p126 = scmp.ne.s32.totalorder %s109, %s125
      %p127 = scmp.eq.s32.totalorder %s29, 0
      %p128 = por %p126, %p127
      %s129 = ssub.s32 %s30, %s42
      %p130 = scmp.eq.s32.totalorder %s129, 0
      %s132 = sadd.s32 %s131, 1
      %s133 = scalar_select %p130, %s131, %s132
      %p136 = pneg %p130
      %p137 = scmp.eq.s32.totalorder %s23, 3
      %p138 = por %p136, %p137
      %p139 = scmp.ne.s32.totalorder %s131, %s134
      %p140 = scmp.eq.s32.totalorder %s23, 0
      %p141 = por %p139, %p140
      %p142 = scmp.ne.s32.totalorder %s131, %s134
      %p143 = scmp.eq.s32.totalorder %s28, 3
      %p144 = por %p142, %p143
      %p145 = scmp.ne.s32.totalorder %s134, %s135
      %p146 = scmp.eq.s32.totalorder %s28, 0
      %p147 = por %p145, %p146
      %p148 = scmp.ne.s32.totalorder %s134, %s135
      %p149 = scmp.eq.s32.totalorder %s29, 3
      %p150 = por %p148, %p149
      %p152 = scmp.ne.s32.totalorder %s135, %s151
      %p153 = scmp.eq.s32.totalorder %s29, 0
      %p154 = por %p152, %p153
      %s155 = ssub.s32 %s30, %s42
      %p156 = scmp.eq.s32.totalorder %s155, 0
      %s158 = sadd.s32 %s157, 1
      %s159 = scalar_select %p156, %s157, %s158
      %p162 = pneg %p156
      %p163 = scmp.eq.s32.totalorder %s23, 3
      %p164 = por %p162, %p163
      %p165 = scmp.ne.s32.totalorder %s157, %s160
      %p166 = scmp.eq.s32.totalorder %s23, 0
      %p167 = por %p165, %p166
      %p168 = scmp.ne.s32.totalorder %s157, %s160
      %p169 = scmp.eq.s32.totalorder %s28, 3
      %p170 = por %p168, %p169
      %p171 = scmp.ne.s32.totalorder %s160, %s161
      %p172 = scmp.eq.s32.totalorder %s28, 0
      %p173 = por %p171, %p172
      %p174 = scmp.ne.s32.totalorder %s160, %s161
      %p175 = scmp.eq.s32.totalorder %s29, 3
      %p176 = por %p174, %p175
      %p178 = scmp.ne.s32.totalorder %s161, %s177
      %p179 = scmp.eq.s32.totalorder %s29, 0
      %p180 = por %p178, %p179
      %s181 = smul.u32 %s31, 2
      %s182 = ssub.s32 1, %s181
      %s183 = smul.u32 %s30, %s182
      %s184 = sadd.s32 %s31, %s183
      %s185 = smul.u32 %s38, 2
      %s186 = ssub.s32 1, %s185
      %s187 = smul.u32 %s42, %s186
      %s188 = sadd.s32 %s38, %s187
      %s189 = ssub.s32 %s184, %s188
      %s190 = ssub.s32 %s30, %s42
      %s191 = sor.u32 %s189, %s190
      %p192 = scmp.eq.s32.totalorder %s191, 0
      %s194 = sadd.s32 %s193, 1
      %s195 = scalar_select %p192, %s193, %s194
      %p198 = pneg %p192
      %p199 = scmp.eq.s32.totalorder %s23, 3
      %p200 = por %p198, %p199
      %p201 = scmp.ne.s32.totalorder %s193, %s196
      %p202 = scmp.eq.s32.totalorder %s23, 0
      %p203 = por %p201, %p202
      %p204 = scmp.ne.s32.totalorder %s193, %s196
      %p205 = scmp.eq.s32.totalorder %s28, 3
      %p206 = por %p204, %p205
      %p207 = scmp.ne.s32.totalorder %s196, %s197
      %p208 = scmp.eq.s32.totalorder %s28, 0
      %p209 = por %p207, %p208
      %p210 = scmp.ne.s32.totalorder %s196, %s197
      %p211 = scmp.eq.s32.totalorder %s29, 3
      %p212 = por %p210, %p211
      %p214 = scmp.ne.s32.totalorder %s197, %s213
      %p215 = scmp.eq.s32.totalorder %s29, 0
      %p216 = por %p214, %p215
      %p217 = scmp.le.s32.totalorder 1, %s23
      %p218 = scmp.lt.s32.totalorder %s23, 5
      %p219 = pnand %p217, %p218
      %p220 = pneg %p219
      // Predicated region
      $region9: #{tpu_custom_call.1} parent=5 // pred_check
        _
      $region10: #{tpu_custom_call.1} parent=5 // pred_check_branch
        %222 = sbr.rel (%p219) target = $region12
      $region11: #{tpu_custom_call.1} parent=5 // pred_region
        %s223 = ssub.s32 %s23, 1
      $region12: #{tpu_custom_call.1} parent=5 // pred_fallthru
        _
      %p224 = scmp.lt.s32.totalorder %s23, 4
      // Predicated region
      $region13: #{tpu_custom_call.1} parent=5 // pred_check
        %p225 = pneg %p224
      $region14: #{tpu_custom_call.1} parent=5 // pred_check_branch
        %227 = sbr.rel (%p225) target = $region16
      $region15: #{tpu_custom_call.1} parent=5 // pred_region
        // Predicated region
        $region17: #{tpu_custom_call.1} parent=15 // pred_check
          %p228 = pneg %p63
        $region18: #{tpu_custom_call.1} parent=15 // pred_check_branch
          %230 = sbr.rel (%p228) target = $region20
        $region19: #{tpu_custom_call.1} parent=15 // pred_region
          %s231 = sand.u32 %s53, 1
          %s232 = scalar_lea.sflag [#allocation5], %s231
          %s233 = sand.u32 %s53, 1
          %s234 = smul.addr %s233, 64
          %s235 = scalar_lea.vmem [#allocation4], %s234
          %s236 = smul.u32 %s31, 2
          %s237 = ssub.s32 1, %s236
          %s238 = smul.u32 %s30, %s237
          %s239 = sadd.s32 %s31, %s238
          %s240 = smul.u32 16, %s239
          %242 = vsyncadd %s232, 0
          %s243 = smul.addr %s240, 4
          %s244 = scalar_lea.hbm %s0, %s243
          %s245 = sshll.u32 %s244, 4
          %s246 = int_to_ptr.hbm [resolvable:$true] %s245
          %s247 = sshll.u32 %s235, 4
          %s248 = int_to_ptr.vmem [resolvable:$true] %s247
          %253 = dma.hbm_to_vmem [thread:$0]  %s246, 1024, %s248, %s232, 64, 64, 4
        $region20: #{tpu_custom_call.1} parent=15 // pred_fallthru
          _
        // Predicated region
        $region21: #{tpu_custom_call.1} parent=15 // pred_check
          %p254 = pneg %p89
        $region22: #{tpu_custom_call.1} parent=15 // pred_check_branch
          %256 = sbr.rel (%p254) target = $region24
        $region23: #{tpu_custom_call.1} parent=15 // pred_region
          %s257 = sand.u32 %s23, 1
          %s258 = scalar_lea.sflag [#allocation8], %s257
          %s259 = sand.u32 %s79, 1
          %s260 = smul.addr %s259, 192
          %s261 = scalar_lea.vmem [#allocation7], %s260
          %263 = vsyncadd %s258, 0
          %s264 = smul.addr %s30, 48
          %s265 = smul.addr %s264, 4
          %s266 = scalar_lea.hbm %s1, %s265
          %s267 = sshll.u32 %s266, 4
          %s268 = int_to_ptr.hbm [resolvable:$true] %s267
          %s269 = sshll.u32 %s261, 4
          %s270 = int_to_ptr.vmem [resolvable:$true] %s269
          %275 = dma.hbm_to_vmem [thread:$0]  %s268, 3072, %s270, %s258, 192, 192, 12
        $region24: #{tpu_custom_call.1} parent=15 // pred_fallthru
          _
        // Predicated region
        $region25: #{tpu_custom_call.1} parent=15 // pred_check
          %p276 = pneg %p115
        $region26: #{tpu_custom_call.1} parent=15 // pred_check_branch
          %278 = sbr.rel (%p276) target = $region28
        $region27: #{tpu_custom_call.1} parent=15 // pred_region
          %s279 = sand.u32 %s23, 1
          %s280 = scalar_lea.sflag [#allocation8], %s279
          %s281 = sand.u32 %s105, 1
          %s282 = smul.addr %s281, 192
          %s283 = scalar_lea.vmem [#allocation9], %s282
          %285 = vsyncadd %s280, 0
          %s286 = smul.addr %s30, 48
          %s287 = smul.addr %s286, 4
          %s288 = scalar_lea.hbm %s2, %s287
          %s289 = sshll.u32 %s288, 4
          %s290 = int_to_ptr.hbm [resolvable:$true] %s289
          %s291 = sshll.u32 %s283, 4
          %s292 = int_to_ptr.vmem [resolvable:$true] %s291
          %297 = dma.hbm_to_vmem [thread:$0]  %s290, 3072, %s292, %s280, 192, 192, 12
        $region28: #{tpu_custom_call.1} parent=15 // pred_fallthru
          _
        // Predicated region
        $region29: #{tpu_custom_call.1} parent=15 // pred_check
          %p298 = pneg %p141
        $region30: #{tpu_custom_call.1} parent=15 // pred_check_branch
          %300 = sbr.rel (%p298) target = $region32
        $region31: #{tpu_custom_call.1} parent=15 // pred_region
          %s301 = sand.u32 %s131, 1
          %s302 = scalar_lea.sflag [#allocation11], %s301
          %s303 = sand.u32 %s131, 1
          %s304 = smul.addr %s303, 3
          %s305 = scalar_lea.vmem [#allocation10], %s304
          %307 = vsyncadd %s302, 0
          %s308 = smul.addr %s30, 3
          %s309 = scalar_lea.hbm %s3, %s308
          %s311 = sshll.u32 %s309, 4
          %s312 = int_to_ptr.hbm [resolvable:$true] %s311
          %s313 = sshll.u32 %s305, 4
          %s314 = int_to_ptr.vmem [resolvable:$true] %s313
          %316 = dma.hbm_to_vmem [thread:$0]  %s312, 48, %s314, %s302
        $region32: #{tpu_custom_call.1} parent=15 // pred_fallthru
          _
        // Predicated region
        $region33: #{tpu_custom_call.1} parent=15 // pred_check
          %p317 = pneg %p167
        $region34: #{tpu_custom_call.1} parent=15 // pred_check_branch
          %319 = sbr.rel (%p317) target = $region36
        $region35: #{tpu_custom_call.1} parent=15 // pred_region
          %p320 = scmp.lt.s32.totalorder %s30, 1
          %s321 = scalar_select %p320, %s30, 1
          %s322 = scalar_lea.vmem %s4, %s321
        $region36: #{tpu_custom_call.1} parent=15 // pred_fallthru
          _
      $region16: #{tpu_custom_call.1} parent=5 // pred_fallthru
        _
      %p323 = scmp.le.s32.totalorder 1, %s23
      %p324 = scmp.lt.s32.totalorder %s23, 5
      %p325 = pnand %p323, %p324
      %p326 = pneg %p325
      // Predicated region
      $region37: #{tpu_custom_call.1} parent=5 // pred_check
        _
      $region38: #{tpu_custom_call.1} parent=5 // pred_check_branch
        %328 = sbr.rel (%p325) target = $region40
      $region39: #{tpu_custom_call.1} parent=5 // pred_region
        %s329 = ssub.s32 %s23, 1
        %s330 = sand.u32 %s56, 1
        %s331 = scalar_lea.sflag [#allocation5], %s330
        %s332 = sand.u32 %s56, 1
        %s333 = smul.addr %s332, 64
        %s334 = scalar_lea.vmem [#allocation4], %s333
        // Predicated region
        $region41: #{tpu_custom_call.1} parent=39 // pred_check
          %p335 = pneg %p69
        $region42: #{tpu_custom_call.1} parent=39 // pred_check_branch
          %337 = sbr.rel (%p335) target = $region44
        $region43: #{tpu_custom_call.1} parent=39 // pred_region
          %339 = dma.done %s331, 1024
        $region44: #{tpu_custom_call.1} parent=39 // pred_fallthru
          _
        %s340 = sand.u32 %s28, 1
        %s341 = scalar_lea.sflag [#allocation8], %s340
        %s342 = sand.u32 %s82, 1
        %s343 = smul.addr %s342, 192
        %s344 = scalar_lea.vmem [#allocation7], %s343
        // Predicated region
        $region45: #{tpu_custom_call.1} parent=39 // pred_check
          %p345 = pneg %p95
        $region46: #{tpu_custom_call.1} parent=39 // pred_check_branch
          %347 = sbr.rel (%p345) target = $region48
        $region47: #{tpu_custom_call.1} parent=39 // pred_region
          %349 = dma.done %s341, 3072
        $region48: #{tpu_custom_call.1} parent=39 // pred_fallthru
          _
        %s350 = sand.u32 %s28, 1
        %s351 = scalar_lea.sflag [#allocation8], %s350
        %s352 = sand.u32 %s108, 1
        %s353 = smul.addr %s352, 192
        %s354 = scalar_lea.vmem [#allocation9], %s353
        // Predicated region
        $region49: #{tpu_custom_call.1} parent=39 // pred_check
          %p355 = pneg %p121
        $region50: #{tpu_custom_call.1} parent=39 // pred_check_branch
          %357 = sbr.rel (%p355) target = $region52
        $region51: #{tpu_custom_call.1} parent=39 // pred_region
          %359 = dma.done %s351, 3072
        $region52: #{tpu_custom_call.1} parent=39 // pred_fallthru
          _
        %s360 = sand.u32 %s134, 1
        %s361 = scalar_lea.sflag [#allocation11], %s360
        %s362 = sand.u32 %s134, 1
        %s363 = smul.addr %s362, 3
        %s364 = scalar_lea.vmem [#allocation10], %s363
        // Predicated region
        $region53: #{tpu_custom_call.1} parent=39 // pred_check
          %p365 = pneg %p147
        $region54: #{tpu_custom_call.1} parent=39 // pred_check_branch
          %367 = sbr.rel (%p365) target = $region56
        $region55: #{tpu_custom_call.1} parent=39 // pred_region
          %369 = dma.done %s361, 48
        $region56: #{tpu_custom_call.1} parent=39 // pred_fallthru
          _
        %s370 = sand.u32 %s56, 1
        %s371 = scalar_lea.sflag [#allocation5], %s370
        %s372 = sand.u32 %s56, 1
        %s373 = smul.addr %s372, 64
        %s374 = scalar_lea.vmem [#allocation4], %s373
        %p375 = pneg %p69
        %p376 = pneg %p66
        %s377 = sand.u32 %s28, 1
        %s378 = scalar_lea.sflag [#allocation8], %s377
        %s379 = sand.u32 %s82, 1
        %s380 = smul.addr %s379, 192
        %s381 = scalar_lea.vmem [#allocation7], %s380
        %p382 = pneg %p95
        %p383 = pneg %p92
        %s384 = sand.u32 %s28, 1
        %s385 = scalar_lea.sflag [#allocation8], %s384
        %s386 = sand.u32 %s108, 1
        %s387 = smul.addr %s386, 192
        %s388 = scalar_lea.vmem [#allocation9], %s387
        %p389 = pneg %p121
        %p390 = pneg %p118
        %s391 = sand.u32 %s134, 1
        %s392 = scalar_lea.sflag [#allocation11], %s391
        %s393 = sand.u32 %s134, 1
        %s394 = smul.addr %s393, 3
        %s395 = scalar_lea.vmem [#allocation10], %s394
        %p396 = pneg %p147
        %p397 = pneg %p144
        %p398 = scmp.lt.s32.totalorder %s32, 1
        %s399 = scalar_select %p398, %s32, 1
        %s400 = scalar_lea.vmem %s4, %s399
        %p401 = pneg %p173
        %p402 = pneg %p170
        %p403 = pneg %p209
        %p404 = pneg %p206
        %s405 = sand.u32 %s196, 1
        %s406 = scalar_lea.sflag [#allocation6], %s405
        %s407 = sand.u32 %s196, 1
        %s408 = smul.addr %s407, 64
        %s409 = scalar_lea.vmem [#allocation12], %s408
        %s410 = smul.u32 %s33, 2
        %s411 = ssub.s32 1, %s410
        %s412 = smul.u32 %s32, %s411
        %s413 = sadd.s32 %s33, %s412
        %s414 = smul.u32 16, %s413
        %p415 = scmp.lt.s32.totalorder %s32, 1
        %s416 = scalar_select %p415, %s32, 1
        %s417 = scalar_lea.vmem %s4, %s416
        %s418 = smul.u32 %s33, 2
        %s419 = ssub.s32 1, %s418
        %s420 = smul.u32 %s32, %s419
        %s421 = sadd.s32 %s33, %s420
        %s422 = smul.u32 16, %s421
        %p423 = scmp.eq.s32.totalorder %s33, 0
        // Predicated region
        $region57: #{tpu_custom_call.1} parent=39 // pred_check
          %p424 = pneg %p423
        $region58: #{tpu_custom_call.1} parent=39 // pred_check_branch
          %426 = sbr.rel (%p424) target = $region60
        $region59: #{tpu_custom_call.1} parent=39 // pred_region
          %427 = vst [vmem:[#allocation2] sm:$0xff] 0.0
          %428 = vst [vmem:[#allocation2 + $0x8] sm:$0xff] 0.0
        $region60: #{tpu_custom_call.1} parent=39 // pred_fallthru
          _
        %v429 = vld [vmem:[%s334] sm:$0xf]
        %v430 = vld [vmem:[%s334 + $0x4] sm:$0xf]
        %v431 = vld [vmem:[%s334 + $0x8] sm:$0xf]
        %v432 = vld [vmem:[%s334 + $0xc] sm:$0xf]
        %v433 = vld [vmem:[%s334 + $0x10] sm:$0xf]
        %v434 = vld [vmem:[%s334 + $0x14] sm:$0xf]
        %v435 = vld [vmem:[%s334 + $0x18] sm:$0xf]
        %v436 = vld [vmem:[%s334 + $0x1c] sm:$0xf]
        %v437 = vld [vmem:[%s334 + $0x20] sm:$0xf]
        %v438 = vld [vmem:[%s334 + $0x24] sm:$0xf]
        %v439 = vld [vmem:[%s334 + $0x28] sm:$0xf]
        %v440 = vld [vmem:[%s334 + $0x2c] sm:$0xf]
        %v441 = vld [vmem:[%s334 + $0x30] sm:$0xf]
        %v442 = vld [vmem:[%s334 + $0x34] sm:$0xf]
        %v443 = vld [vmem:[%s334 + $0x38] sm:$0xf]
        %v444 = vld [vmem:[%s334 + $0x3c] sm:$0xf]
        %v445 = vld [vmem:[%s344] sm:$0xff]
        %v446 = vld [vmem:[%s344 + $0x8] sm:$0xf]
        %v447 = vld [vmem:[%s344 + $0xc] sm:$0xff]
        %v448 = vld [vmem:[%s344 + $0x14] sm:$0xf]
        %v449 = vld [vmem:[%s344 + $0x18] sm:$0xff]
        %v450 = vld [vmem:[%s344 + $0x20] sm:$0xf]
        %v451 = vld [vmem:[%s344 + $0x24] sm:$0xff]
        %v452 = vld [vmem:[%s344 + $0x2c] sm:$0xf]
        %v453 = vld [vmem:[%s344 + $0x30] sm:$0xff]
        %v454 = vld [vmem:[%s344 + $0x38] sm:$0xf]
        %v455 = vld [vmem:[%s344 + $0x3c] sm:$0xff]
        %v456 = vld [vmem:[%s344 + $0x44] sm:$0xf]
        %v457 = vld [vmem:[%s344 + $0x48] sm:$0xff]
        %v458 = vld [vmem:[%s344 + $0x50] sm:$0xf]
        %v459 = vld [vmem:[%s344 + $0x54] sm:$0xff]
        %v460 = vld [vmem:[%s344 + $0x5c] sm:$0xf]
        %v461 = vld [vmem:[%s344 + $0x60] sm:$0xff]
        %v462 = vld [vmem:[%s344 + $0x68] sm:$0xf]
        %v463 = vld [vmem:[%s344 + $0x6c] sm:$0xff]
        %v464 = vld [vmem:[%s344 + $0x74] sm:$0xf]
        %v465 = vld [vmem:[%s344 + $0x78] sm:$0xff]
        %v466 = vld [vmem:[%s344 + $0x80] sm:$0xf]
        %v467 = vld [vmem:[%s344 + $0x84] sm:$0xff]
        %v468 = vld [vmem:[%s344 + $0x8c] sm:$0xf]
        %v469 = vld [vmem:[%s344 + $0x90] sm:$0xff]
        %v470 = vld [vmem:[%s344 + $0x98] sm:$0xf]
        %v471 = vld [vmem:[%s344 + $0x9c] sm:$0xff]
        %v472 = vld [vmem:[%s344 + $0xa4] sm:$0xf]
        %v473 = vld [vmem:[%s344 + $0xa8] sm:$0xff]
        %v474 = vld [vmem:[%s344 + $0xb0] sm:$0xf]
        %v475 = vld [vmem:[%s344 + $0xb4] sm:$0xff]
        %v476 = vld [vmem:[%s344 + $0xbc] sm:$0xf]
        %v477 = vld [vmem:[%s364] sm:$0x7]
        %v479 = vperm.slane %v477, 0
        %v480 = vperm.slane %v477, 1
        %v481 = vperm.slane %v477, 2
        %v501 = vunpack.c.l.b16 %v429
        %v502 = vunpack.c.l.b16 %v430
        %v503 = vunpack.c.l.b16 %v431
        %v504 = vunpack.c.l.b16 %v432
        %v505 = vunpack.c.l.b16 %v433
        %v506 = vunpack.c.l.b16 %v434
        %v507 = vunpack.c.l.b16 %v435
        %v508 = vunpack.c.l.b16 %v436
        %v509 = vunpack.c.l.b16 %v437
        %v510 = vunpack.c.l.b16 %v438
        %v511 = vunpack.c.l.b16 %v439
        %v512 = vunpack.c.l.b16 %v440
        %v513 = vunpack.c.l.b16 %v441
        %v514 = vunpack.c.l.b16 %v442
        %v515 = vunpack.c.l.b16 %v443
        %v516 = vunpack.c.l.b16 %v444
        %v517 = vpack.c.b16 %v502, %v501
        %v518 = vpack.c.b16 %v504, %v503
        %v519 = vpack.c.b16 %v506, %v505
        %v520 = vpack.c.b16 %v508, %v507
        %v521 = vpack.c.b16 %v510, %v509
        %v522 = vpack.c.b16 %v512, %v511
        %v523 = vpack.c.b16 %v514, %v513
        %v524 = vpack.c.b16 %v516, %v515
        %v565 = vunpack.c.l.b16 %v445
        %v566 = vunpack.c.h.b16 %v445
        %v567 = vunpack.c.l.b16 %v446
        %v568 = vunpack.c.l.b16 %v447
        %v569 = vunpack.c.h.b16 %v447
        %v570 = vunpack.c.l.b16 %v448
        %v571 = vunpack.c.l.b16 %v449
        %v572 = vunpack.c.h.b16 %v449
        %v573 = vunpack.c.l.b16 %v450
        %v574 = vunpack.c.l.b16 %v451
        %v575 = vunpack.c.h.b16 %v451
        %v576 = vunpack.c.l.b16 %v452
        %v577 = vunpack.c.l.b16 %v453
        %v578 = vunpack.c.h.b16 %v453
        %v579 = vunpack.c.l.b16 %v454
        %v580 = vunpack.c.l.b16 %v455
        %v581 = vunpack.c.h.b16 %v455
        %v582 = vunpack.c.l.b16 %v456
        %v583 = vunpack.c.l.b16 %v457
        %v584 = vunpack.c.h.b16 %v457
        %v585 = vunpack.c.l.b16 %v458
        %v586 = vunpack.c.l.b16 %v459
        %v587 = vunpack.c.h.b16 %v459
        %v588 = vunpack.c.l.b16 %v460
        %v589 = vunpack.c.l.b16 %v461
        %v590 = vunpack.c.h.b16 %v461
        %v591 = vunpack.c.l.b16 %v462
        %v592 = vunpack.c.l.b16 %v463
        %v593 = vunpack.c.h.b16 %v463
        %v594 = vunpack.c.l.b16 %v464
        %v595 = vunpack.c.l.b16 %v465
        %v596 = vunpack.c.h.b16 %v465
        %v597 = vunpack.c.l.b16 %v466
        %v598 = vunpack.c.l.b16 %v467
        %v599 = vunpack.c.h.b16 %v467
        %v600 = vunpack.c.l.b16 %v468
        %v601 = vunpack.c.l.b16 %v469
        %v602 = vunpack.c.h.b16 %v469
        %v603 = vunpack.c.l.b16 %v470
        %v604 = vunpack.c.l.b16 %v471
        %v605 = vunpack.c.h.b16 %v471
        %v606 = vunpack.c.l.b16 %v472
        %v607 = vunpack.c.l.b16 %v473
        %v608 = vunpack.c.h.b16 %v473
        %v609 = vunpack.c.l.b16 %v474
        %v610 = vunpack.c.l.b16 %v475
        %v611 = vunpack.c.h.b16 %v475
        %v612 = vunpack.c.l.b16 %v476
        %v613 = vpack.c.b16 %v568, %v565
        %v614 = vpack.c.b16 %v569, %v566
        %v615 = vpack.c.b16 %v570, %v567
        %v616 = vpack.c.b16 %v574, %v571
        %v617 = vpack.c.b16 %v575, %v572
        %v618 = vpack.c.b16 %v576, %v573
        %v619 = vpack.c.b16 %v580, %v577
        %v620 = vpack.c.b16 %v581, %v578
        %v621 = vpack.c.b16 %v582, %v579
        %v622 = vpack.c.b16 %v586, %v583
        %v623 = vpack.c.b16 %v587, %v584
        %v624 = vpack.c.b16 %v588, %v585
        %v625 = vpack.c.b16 %v592, %v589
        %v626 = vpack.c.b16 %v593, %v590
        %v627 = vpack.c.b16 %v594, %v591
        %v628 = vpack.c.b16 %v598, %v595
        %v629 = vpack.c.b16 %v599, %v596
        %v630 = vpack.c.b16 %v600, %v597
        %v631 = vpack.c.b16 %v604, %v601
        %v632 = vpack.c.b16 %v605, %v602
        %v633 = vpack.c.b16 %v606, %v603
        %v634 = vpack.c.b16 %v610, %v607
        %v635 = vpack.c.b16 %v611, %v608
        %v636 = vpack.c.b16 %v612, %v609
        %661 = vmatpush.bf16.msra.mxu0 %v634
        %662 = vmatpush.bf16.msra.mxu0 %v631
        %663 = vmatpush.bf16.msra.mxu0 %v628
        %664 = vmatpush.bf16.msra.mxu0 %v625
        %665 = vmatpush.bf16.msra.mxu0 %v622
        %666 = vmatpush.bf16.msra.mxu0 %v619
        %667 = vmatpush.bf16.msra.mxu0 %v616
        %668 = vmatpush.bf16.msra.mxu0 %v613
        %669 = vmatmul.bf16.gmra.mxu0 %v517
        %v670 = vpop.f32.mrf.mxu0
        %v671 = vadd.f32 %v479, %v670
        %v672 = vpop.f32.mrf.mxu0
        %v673 = vadd.f32 %v479, %v672
        %674 = vmatmul.bf16.gmra.mxu0 %v518
        %v675 = vpop.f32.mrf.mxu0
        %v676 = vadd.f32 %v479, %v675
        %v677 = vpop.f32.mrf.mxu0
        %v678 = vadd.f32 %v479, %v677
        %679 = vmatmul.bf16.gmra.mxu0 %v519
        %v680 = vpop.f32.mrf.mxu0
        %v681 = vadd.f32 %v479, %v680
        %v682 = vpop.f32.mrf.mxu0
        %v683 = vadd.f32 %v479, %v682
        %684 = vmatmul.bf16.gmra.mxu0 %v520
        %v685 = vpop.f32.mrf.mxu0
        %v686 = vadd.f32 %v479, %v685
        %v687 = vpop.f32.mrf.mxu0
        %v688 = vadd.f32 %v479, %v687
        %689 = vmatmul.bf16.gmra.mxu0 %v521
        %v690 = vpop.f32.mrf.mxu0
        %v691 = vadd.f32 %v479, %v690
        %v692 = vpop.f32.mrf.mxu0
        %v693 = vadd.f32 %v479, %v692
        %694 = vmatmul.bf16.gmra.mxu0 %v522
        %v695 = vpop.f32.mrf.mxu0
        %v696 = vadd.f32 %v479, %v695
        %v697 = vpop.f32.mrf.mxu0
        %v698 = vadd.f32 %v479, %v697
        %699 = vmatmul.bf16.gmra.mxu0 %v523
        %v700 = vpop.f32.mrf.mxu0
        %v701 = vadd.f32 %v479, %v700
        %v702 = vpop.f32.mrf.mxu0
        %v703 = vadd.f32 %v479, %v702
        %704 = vmatmul.bf16.gmra.mxu0 %v524
        %v705 = vpop.f32.mrf.mxu0
        %v706 = vadd.f32 %v479, %v705
        %v707 = vpop.f32.mrf.mxu0
        %v708 = vadd.f32 %v479, %v707
        %709 = vdwg.mxu0
        %710 = vmatpush.bf16.msra.mxu0 %v635
        %711 = vmatpush.bf16.msra.mxu0 %v632
        %712 = vmatpush.bf16.msra.mxu0 %v629
        %713 = vmatpush.bf16.msra.mxu0 %v626
        %714 = vmatpush.bf16.msra.mxu0 %v623
        %715 = vmatpush.bf16.msra.mxu0 %v620
        %716 = vmatpush.bf16.msra.mxu0 %v617
        %717 = vmatpush.bf16.msra.mxu0 %v614
        %718 = vmatmul.bf16.gmra.mxu0 %v517
        %v719 = vpop.f32.mrf.mxu0
        %v720 = vadd.f32 %v480, %v719
        %v721 = vpop.f32.mrf.mxu0
        %v722 = vadd.f32 %v480, %v721
        %723 = vmatmul.bf16.gmra.mxu0 %v518
        %v724 = vpop.f32.mrf.mxu0
        %v725 = vadd.f32 %v480, %v724
        %v726 = vpop.f32.mrf.mxu0
        %v727 = vadd.f32 %v480, %v726
        %728 = vmatmul.bf16.gmra.mxu0 %v519
        %v729 = vpop.f32.mrf.mxu0
        %v730 = vadd.f32 %v480, %v729
        %v731 = vpop.f32.mrf.mxu0
        %v732 = vadd.f32 %v480, %v731
        %733 = vmatmul.bf16.gmra.mxu0 %v520
        %v734 = vpop.f32.mrf.mxu0
        %v735 = vadd.f32 %v480, %v734
        %v736 = vpop.f32.mrf.mxu0
        %v737 = vadd.f32 %v480, %v736
        %738 = vmatmul.bf16.gmra.mxu0 %v521
        %v739 = vpop.f32.mrf.mxu0
        %v740 = vadd.f32 %v480, %v739
        %v741 = vpop.f32.mrf.mxu0
        %v742 = vadd.f32 %v480, %v741
        %743 = vmatmul.bf16.gmra.mxu0 %v522
        %v744 = vpop.f32.mrf.mxu0
        %v745 = vadd.f32 %v480, %v744
        %v746 = vpop.f32.mrf.mxu0
        %v747 = vadd.f32 %v480, %v746
        %748 = vmatmul.bf16.gmra.mxu0 %v523
        %v749 = vpop.f32.mrf.mxu0
        %v750 = vadd.f32 %v480, %v749
        %v751 = vpop.f32.mrf.mxu0
        %v752 = vadd.f32 %v480, %v751
        %753 = vmatmul.bf16.gmra.mxu0 %v524
        %v754 = vpop.f32.mrf.mxu0
        %v755 = vadd.f32 %v480, %v754
        %v756 = vpop.f32.mrf.mxu0
        %v757 = vadd.f32 %v480, %v756
        %758 = vdwg.mxu0
        %759 = vmatpush.bf16.msra.mxu0 %v636
        %760 = vmatpush.bf16.msra.mxu0 %v633
        %761 = vmatpush.bf16.msra.mxu0 %v630
        %762 = vmatpush.bf16.msra.mxu0 %v627
        %763 = vmatpush.bf16.msra.mxu0 %v624
        %764 = vmatpush.bf16.msra.mxu0 %v621
        %765 = vmatpush.bf16.msra.mxu0 %v618
        %766 = vmatpush.bf16.msra.mxu0 %v615
        %767 = vmatmul.bf16.gmra.mxu0 %v517
        %v768 = vpop.f32.mrf.mxu0
        %v769 = vadd.f32 %v481, %v768
        %v770 = vpop.f32.mrf.mxu0
        %v771 = vadd.f32 %v481, %v770
        %772 = vmatmul.bf16.gmra.mxu0 %v518
        %v773 = vpop.f32.mrf.mxu0
        %v774 = vadd.f32 %v481, %v773
        %v775 = vpop.f32.mrf.mxu0
        %v776 = vadd.f32 %v481, %v775
        %777 = vmatmul.bf16.gmra.mxu0 %v519
        %v778 = vpop.f32.mrf.mxu0
        %v779 = vadd.f32 %v481, %v778
        %v780 = vpop.f32.mrf.mxu0
        %v781 = vadd.f32 %v481, %v780
        %782 = vmatmul.bf16.gmra.mxu0 %v520
        %v783 = vpop.f32.mrf.mxu0
        %v784 = vadd.f32 %v481, %v783
        %v785 = vpop.f32.mrf.mxu0
        %v786 = vadd.f32 %v481, %v785
        %787 = vmatmul.bf16.gmra.mxu0 %v521
        %v788 = vpop.f32.mrf.mxu0
        %v789 = vadd.f32 %v481, %v788
        %v790 = vpop.f32.mrf.mxu0
        %v791 = vadd.f32 %v481, %v790
        %792 = vmatmul.bf16.gmra.mxu0 %v522
        %v793 = vpop.f32.mrf.mxu0
        %v794 = vadd.f32 %v481, %v793
        %v795 = vpop.f32.mrf.mxu0
        %v796 = vadd.f32 %v481, %v795
        %797 = vmatmul.bf16.gmra.mxu0 %v523
        %v798 = vpop.f32.mrf.mxu0
        %v799 = vadd.f32 %v481, %v798
        %v800 = vpop.f32.mrf.mxu0
        %v801 = vadd.f32 %v481, %v800
        %802 = vmatmul.bf16.gmra.mxu0 %v524
        %v803 = vpop.f32.mrf.mxu0
        %v804 = vadd.f32 %v481, %v803
        %v805 = vpop.f32.mrf.mxu0
        %v806 = vadd.f32 %v481, %v805
        %807 = vdwg.mxu0
        %808 = vst [vmem:[#allocation3] sm:$0xff] %v671
        %809 = vst [vmem:[#allocation3 + $0x8] sm:$0xff] %v720
        %810 = vst [vmem:[#allocation3 + $0x10] sm:$0xff] %v769
        %811 = vst [vmem:[#allocation3 + $0x18] sm:$0xff] %v673
        %812 = vst [vmem:[#allocation3 + $0x20] sm:$0xff] %v722
        %813 = vst [vmem:[#allocation3 + $0x28] sm:$0xff] %v771
        %814 = vst [vmem:[#allocation3 + $0x30] sm:$0xff] %v676
        %815 = vst [vmem:[#allocation3 + $0x38] sm:$0xff] %v725
        %816 = vst [vmem:[#allocation3 + $0x40] sm:$0xff] %v774
        %817 = vst [vmem:[#allocation3 + $0x48] sm:$0xff] %v678
        %818 = vst [vmem:[#allocation3 + $0x50] sm:$0xff] %v727
        %819 = vst [vmem:[#allocation3 + $0x58] sm:$0xff] %v776
        %820 = vst [vmem:[#allocation3 + $0x60] sm:$0xff] %v681
        %821 = vst [vmem:[#allocation3 + $0x68] sm:$0xff] %v730
        %822 = vst [vmem:[#allocation3 + $0x70] sm:$0xff] %v779
        %823 = vst [vmem:[#allocation3 + $0x78] sm:$0xff] %v683
        %824 = vst [vmem:[#allocation3 + $0x80] sm:$0xff] %v732
        %825 = vst [vmem:[#allocation3 + $0x88] sm:$0xff] %v781
        %826 = vst [vmem:[#allocation3 + $0x90] sm:$0xff] %v686
        %827 = vst [vmem:[#allocation3 + $0x98] sm:$0xff] %v735
        %828 = vst [vmem:[#allocation3 + $0xa0] sm:$0xff] %v784
        %829 = vst [vmem:[#allocation3 + $0xa8] sm:$0xff] %v688
        %830 = vst [vmem:[#allocation3 + $0xb0] sm:$0xff] %v737
        %831 = vst [vmem:[#allocation3 + $0xb8] sm:$0xff] %v786
        %832 = vst [vmem:[#allocation3 + $0xc0] sm:$0xff] %v691
        %833 = vst [vmem:[#allocation3 + $0xc8] sm:$0xff] %v740
        %834 = vst [vmem:[#allocation3 + $0xd0] sm:$0xff] %v789
        %835 = vst [vmem:[#allocation3 + $0xd8] sm:$0xff] %v693
        %836 = vst [vmem:[#allocation3 + $0xe0] sm:$0xff] %v742
        %837 = vst [vmem:[#allocation3 + $0xe8] sm:$0xff] %v791
        %838 = vst [vmem:[#allocation3 + $0xf0] sm:$0xff] %v696
        %839 = vst [vmem:[#allocation3 + $0xf8] sm:$0xff] %v745
        %840 = vst [vmem:[#allocation3 + $0x100] sm:$0xff] %v794
        %841 = vst [vmem:[#allocation3 + $0x108] sm:$0xff] %v698
        %842 = vst [vmem:[#allocation3 + $0x110] sm:$0xff] %v747
        %843 = vst [vmem:[#allocation3 + $0x118] sm:$0xff] %v796
        %844 = vst [vmem:[#allocation3 + $0x120] sm:$0xff] %v701
        %845 = vst [vmem:[#allocation3 + $0x128] sm:$0xff] %v750
        %846 = vst [vmem:[#allocation3 + $0x130] sm:$0xff] %v799
        %847 = vst [vmem:[#allocation3 + $0x138] sm:$0xff] %v703
        %848 = vst [vmem:[#allocation3 + $0x140] sm:$0xff] %v752
        %849 = vst [vmem:[#allocation3 + $0x148] sm:$0xff] %v801
        %850 = vst [vmem:[#allocation3 + $0x150] sm:$0xff] %v706
        %851 = vst [vmem:[#allocation3 + $0x158] sm:$0xff] %v755
        %852 = vst [vmem:[#allocation3 + $0x160] sm:$0xff] %v804
        %853 = vst [vmem:[#allocation3 + $0x168] sm:$0xff] %v708
        %854 = vst [vmem:[#allocation3 + $0x170] sm:$0xff] %v757
        %855 = vst [vmem:[#allocation3 + $0x178] sm:$0xff] %v806
        %v856 = vld [vmem:[%s417] sm:$0x1]
        %v857 = vld [vmem:[#allocation2] sm:$0xff]
        %v858 = vld [vmem:[#allocation2 + $0x8] sm:$0xff]
        %s859 = smul.u32 %s32, 112
        %v860 = vpack.c.bf16 %v858, %v857
        %v861 = vld [vmem:[%s354] sm:$0xff]
        %v862 = vld [vmem:[%s354 + $0x8] sm:$0xf]
        %v863 = vld [vmem:[%s354 + $0xc] sm:$0xff]
        %v864 = vld [vmem:[%s354 + $0x14] sm:$0xf]
        %v865 = vld [vmem:[%s354 + $0x18] sm:$0xff]
        %v866 = vld [vmem:[%s354 + $0x20] sm:$0xf]
        %v867 = vld [vmem:[%s354 + $0x24] sm:$0xff]
        %v868 = vld [vmem:[%s354 + $0x2c] sm:$0xf]
        %v869 = vld [vmem:[%s354 + $0x30] sm:$0xff]
        %v870 = vld [vmem:[%s354 + $0x38] sm:$0xf]
        %v871 = vld [vmem:[%s354 + $0x3c] sm:$0xff]
        %v872 = vld [vmem:[%s354 + $0x44] sm:$0xf]
        %v873 = vld [vmem:[%s354 + $0x48] sm:$0xff]
        %v874 = vld [vmem:[%s354 + $0x50] sm:$0xf]
        %v875 = vld [vmem:[%s354 + $0x54] sm:$0xff]
        %v876 = vld [vmem:[%s354 + $0x5c] sm:$0xf]
        %v877 = vld [vmem:[%s354 + $0x60] sm:$0xff]
        %v878 = vld [vmem:[%s354 + $0x68] sm:$0xf]
        %v879 = vld [vmem:[%s354 + $0x6c] sm:$0xff]
        %v880 = vld [vmem:[%s354 + $0x74] sm:$0xf]
        %v881 = vld [vmem:[%s354 + $0x78] sm:$0xff]
        %v882 = vld [vmem:[%s354 + $0x80] sm:$0xf]
        %v883 = vld [vmem:[%s354 + $0x84] sm:$0xff]
        %v884 = vld [vmem:[%s354 + $0x8c] sm:$0xf]
        %v885 = vld [vmem:[%s354 + $0x90] sm:$0xff]
        %v886 = vld [vmem:[%s354 + $0x98] sm:$0xf]
        %v887 = vld [vmem:[%s354 + $0x9c] sm:$0xff]
        %v888 = vld [vmem:[%s354 + $0xa4] sm:$0xf]
        %v889 = vld [vmem:[%s354 + $0xa8] sm:$0xff]
        %v890 = vld [vmem:[%s354 + $0xb0] sm:$0xf]
        %v891 = vld [vmem:[%s354 + $0xb4] sm:$0xff]
        %v892 = vld [vmem:[%s354 + $0xbc] sm:$0xf]
        %v925 = vunpack.c.l.b16 %v861
        %v926 = vunpack.c.h.b16 %v861
        %v927 = vunpack.c.l.b16 %v862
        %v928 = vunpack.c.l.b16 %v863
        %v929 = vunpack.c.h.b16 %v863
        %v930 = vunpack.c.l.b16 %v864
        %v931 = vunpack.c.l.b16 %v865
        %v932 = vunpack.c.h.b16 %v865
        %v933 = vunpack.c.l.b16 %v866
        %v934 = vunpack.c.l.b16 %v867
        %v935 = vunpack.c.h.b16 %v867
        %v936 = vunpack.c.l.b16 %v868
        %v937 = vunpack.c.l.b16 %v869
        %v938 = vunpack.c.h.b16 %v869
        %v939 = vunpack.c.l.b16 %v870
        %v940 = vunpack.c.l.b16 %v871
        %v941 = vunpack.c.h.b16 %v871
        %v942 = vunpack.c.l.b16 %v872
        %v943 = vunpack.c.l.b16 %v873
        %v944 = vunpack.c.h.b16 %v873
        %v945 = vunpack.c.l.b16 %v874
        %v946 = vunpack.c.l.b16 %v875
        %v947 = vunpack.c.h.b16 %v875
        %v948 = vunpack.c.l.b16 %v876
        %v949 = vunpack.c.l.b16 %v877
        %v950 = vunpack.c.h.b16 %v877
        %v951 = vunpack.c.l.b16 %v878
        %v952 = vunpack.c.l.b16 %v879
        %v953 = vunpack.c.h.b16 %v879
        %v954 = vunpack.c.l.b16 %v880
        %v955 = vunpack.c.l.b16 %v881
        %v956 = vunpack.c.h.b16 %v881
        %v957 = vunpack.c.l.b16 %v882
        %v958 = vunpack.c.l.b16 %v883
        %v959 = vunpack.c.h.b16 %v883
        %v960 = vunpack.c.l.b16 %v884
        %v961 = vunpack.c.l.b16 %v885
        %v962 = vunpack.c.h.b16 %v885
        %v963 = vunpack.c.l.b16 %v886
        %v964 = vunpack.c.l.b16 %v887
        %v965 = vunpack.c.h.b16 %v887
        %v966 = vunpack.c.l.b16 %v888
        %v967 = vunpack.c.l.b16 %v889
        %v968 = vunpack.c.h.b16 %v889
        %v969 = vunpack.c.l.b16 %v890
        %v970 = vunpack.c.l.b16 %v891
        %v971 = vunpack.c.h.b16 %v891
        %v972 = vunpack.c.l.b16 %v892
        %v973 = vpack.c.b16 %v928, %v925
        %v974 = vpack.c.b16 %v929, %v926
        %v975 = vpack.c.b16 %v930, %v927
        %v976 = vpack.c.b16 %v934, %v931
        %v977 = vpack.c.b16 %v935, %v932
        %v978 = vpack.c.b16 %v936, %v933
        %v979 = vpack.c.b16 %v940, %v937
        %v980 = vpack.c.b16 %v941, %v938
        %v981 = vpack.c.b16 %v942, %v939
        %v982 = vpack.c.b16 %v946, %v943
        %v983 = vpack.c.b16 %v947, %v944
        %v984 = vpack.c.b16 %v948, %v945
        %v985 = vpack.c.b16 %v952, %v949
        %v986 = vpack.c.b16 %v953, %v950
        %v987 = vpack.c.b16 %v954, %v951
        %v988 = vpack.c.b16 %v958, %v955
        %v989 = vpack.c.b16 %v959, %v956
        %v990 = vpack.c.b16 %v960, %v957
        %v991 = vpack.c.b16 %v964, %v961
        %v992 = vpack.c.b16 %v965, %v962
        %v993 = vpack.c.b16 %v966, %v963
        %v994 = vpack.c.b16 %v970, %v967
        %v995 = vpack.c.b16 %v971, %v968
        %v996 = vpack.c.b16 %v972, %v969
        %1021 = vmatpush.bf16.msra.mxu0 %v994
        %1022 = vmatpush.bf16.msra.mxu0 %v991
        %1023 = vmatpush.bf16.msra.mxu0 %v988
        %1024 = vmatpush.bf16.msra.mxu0 %v985
        %1025 = vmatpush.bf16.msra.mxu0 %v982
        %1026 = vmatpush.bf16.msra.mxu0 %v979
        %1027 = vmatpush.bf16.msra.mxu0 %v976
        %1028 = vmatpush.bf16.msra.mxu0 %v973
        %1029 = vmatmul.bf16.gmra.mxu0 %v860
        %v1030 = vpop.f32.mrf.mxu0
        %v1031 = vadd.f32 0.0, %v1030
        %v1032 = vpop.f32.mrf.mxu0
        %v1033 = vadd.f32 0.0, %v1032
        %1034 = vdwg.mxu0
        %1035 = vmatpush.bf16.msra.mxu0 %v995
        %1036 = vmatpush.bf16.msra.mxu0 %v992
        %1037 = vmatpush.bf16.msra.mxu0 %v989
        %1038 = vmatpush.bf16.msra.mxu0 %v986
        %1039 = vmatpush.bf16.msra.mxu0 %v983
        %1040 = vmatpush.bf16.msra.mxu0 %v980
        %1041 = vmatpush.bf16.msra.mxu0 %v977
        %1042 = vmatpush.bf16.msra.mxu0 %v974
        %1043 = vmatmul.bf16.gmra.mxu0 %v860
        %v1044 = vpop.f32.mrf.mxu0
        %v1045 = vadd.f32 0.0, %v1044
        %v1046 = vpop.f32.mrf.mxu0
        %v1047 = vadd.f32 0.0, %v1046
        %1048 = vdwg.mxu0
        %1049 = vmatpush.bf16.msra.mxu0 %v996
        %1050 = vmatpush.bf16.msra.mxu0 %v993
        %1051 = vmatpush.bf16.msra.mxu0 %v990
        %1052 = vmatpush.bf16.msra.mxu0 %v987
        %1053 = vmatpush.bf16.msra.mxu0 %v984
        %1054 = vmatpush.bf16.msra.mxu0 %v981
        %1055 = vmatpush.bf16.msra.mxu0 %v978
        %1056 = vmatpush.bf16.msra.mxu0 %v975
        %1057 = vmatmul.bf16.gmra.mxu0 %v860
        %v1058 = vpop.f32.mrf.mxu0
        %v1059 = vadd.f32 0.0, %v1058
        %v1060 = vpop.f32.mrf.mxu0
        %v1061 = vadd.f32 0.0, %v1060
        %1062 = vdwg.mxu0
        %s1063 = sshra.s32 %s859, 3
        %s1064 = sand.u32 %s859, 7
        %s1065 = smul.u32 %s1063, 3
        %s1066 = smul.addr %s1065, 8
        %s1067 = scalar_lea.vmem [#allocation3], %s1066
        %v1068 = vld [vmem:[%s1067] sm:$0xff]
        %v1069 = vld [vmem:[%s1067 + $0x8] sm:$0xff]
        %v1070 = vld [vmem:[%s1067 + $0x10] sm:$0xff]
        %v1071 = vld [vmem:[%s1067 + $0x18] sm:$0xff]
        %v1072 = vld [vmem:[%s1067 + $0x20] sm:$0xff]
        %v1073 = vld [vmem:[%s1067 + $0x28] sm:$0xff]
        %v1074 = vadd.f32 %v1068, %v1031
        %v1075 = vadd.f32 %v1071, %v1033
        %v1076 = vxor.u32 %v1074, 2147483648
        %v1077 = vxor.u32 %v1075, 2147483648
        %v1078 = vmul.f32 %v1076, 1.442695
        %v1079 = vpow.pop %v1078
        %v1080 = vmul.f32 %v1077, 1.442695
        %v1081 = vpow.pop %v1080
        %v1082 = vadd.f32 %v1079, 1.0
        %v1083 = vadd.f32 %v1081, 1.0
        %v1084 = vrcp.pop %v1082
        %v1085 = vmul.f32 %v1082, %v1084
        %v1086 = vsub.f32 1.0, %v1085
        %v1087 = vmul.f32 %v1084, %v1086
        %v1088 = vadd.f32 %v1084, %v1087
        %vm1089 = vweird.f32 %v1082
        %vm1090 = vweird.f32 %v1084
        %vm1091 = vmor %vm1089, %vm1090
        %v1092 = vsel %vm1091, %v1084, %v1088
        %v1093 = vand.u32 2147483647, %v1082
        %vm1094 = vcmp.eq.f32.partialorder %v1093, 8.507059e+37
        %v1095 = vand.u32 %v1082, 2147483648
        %v1096 = vor.u32 1.1754944e-38, %v1095
        %v1097 = vsel %vm1094, %v1096, %v1092
        %v1098 = vmul.f32 1.0, %v1097
        %v1099 = vrcp.pop %v1083
        %v1100 = vmul.f32 %v1083, %v1099
        %v1101 = vsub.f32 1.0, %v1100
        %v1102 = vmul.f32 %v1099, %v1101
        %v1103 = vadd.f32 %v1099, %v1102
        %vm1104 = vweird.f32 %v1083
        %vm1105 = vweird.f32 %v1099
        %vm1106 = vmor %vm1104, %vm1105
        %v1107 = vsel %vm1106, %v1099, %v1103
        %v1108 = vand.u32 2147483647, %v1083
        %vm1109 = vcmp.eq.f32.partialorder %v1108, 8.507059e+37
        %v1110 = vand.u32 %v1083, 2147483648
        %v1111 = vor.u32 1.1754944e-38, %v1110
        %v1112 = vsel %vm1109, %v1111, %v1107
        %v1113 = vmul.f32 1.0, %v1112
        %v1114 = vadd.f32 %v1069, %v1045
        %v1115 = vadd.f32 %v1072, %v1047
        %v1116 = vxor.u32 %v1114, 2147483648
        %v1117 = vxor.u32 %v1115, 2147483648
        %v1118 = vmul.f32 %v1116, 1.442695
        %v1119 = vpow.pop %v1118
        %v1120 = vmul.f32 %v1117, 1.442695
        %v1121 = vpow.pop %v1120
        %v1122 = vadd.f32 %v1119, 1.0
        %v1123 = vadd.f32 %v1121, 1.0
        %v1124 = vrcp.pop %v1122
        %v1125 = vmul.f32 %v1122, %v1124
        %v1126 = vsub.f32 1.0, %v1125
        %v1127 = vmul.f32 %v1124, %v1126
        %v1128 = vadd.f32 %v1124, %v1127
        %vm1129 = vweird.f32 %v1122
        %vm1130 = vweird.f32 %v1124
        %vm1131 = vmor %vm1129, %vm1130
        %v1132 = vsel %vm1131, %v1124, %v1128
        %v1133 = vand.u32 2147483647, %v1122
        %vm1134 = vcmp.eq.f32.partialorder %v1133, 8.507059e+37
        %v1135 = vand.u32 %v1122, 2147483648
        %v1136 = vor.u32 1.1754944e-38, %v1135
        %v1137 = vsel %vm1134, %v1136, %v1132
        %v1138 = vmul.f32 1.0, %v1137
        %v1139 = vrcp.pop %v1123
        %v1140 = vmul.f32 %v1123, %v1139
        %v1141 = vsub.f32 1.0, %v1140
        %v1142 = vmul.f32 %v1139, %v1141
        %v1143 = vadd.f32 %v1139, %v1142
        %vm1144 = vweird.f32 %v1123
        %vm1145 = vweird.f32 %v1139
        %vm1146 = vmor %vm1144, %vm1145
        %v1147 = vsel %vm1146, %v1139, %v1143
        %v1148 = vand.u32 2147483647, %v1123
        %vm1149 = vcmp.eq.f32.partialorder %v1148, 8.507059e+37
        %v1150 = vand.u32 %v1123, 2147483648
        %v1151 = vor.u32 1.1754944e-38, %v1150
        %v1152 = vsel %vm1149, %v1151, %v1147
        %v1153 = vmul.f32 1.0, %v1152
        %v1155 = vperm.slane %v856, 0
        %v1157 = vadd.f32 %v1059, %v1155
        %v1158 = vadd.f32 %v1061, %v1155
        %v1159 = vmul.f32 %v1098, %v1157
        %v1160 = vmul.f32 %v1113, %v1158
        %v1161 = vadd.f32 %v1070, %v1159
        %v1162 = vadd.f32 %v1073, %v1160
        %v1163 = vtanh.pop %v1161
        %v1164 = vtanh.pop %v1162
        %v1165 = vsub.f32 %v857, %v1163
        %v1166 = vsub.f32 %v858, %v1164
        %v1167 = vmul.f32 %v1138, %v1165
        %v1168 = vmul.f32 %v1153, %v1166
        %v1169 = vadd.f32 %v1163, %v1167
        %v1170 = vadd.f32 %v1164, %v1168
        %v1171 = vpack.c.bf16 %v1169, %v1169
        %v1172 = vpack.c.bf16 %v1170, %v1170
        %s1173 = smul.addr %s1063, 4
        %s1174 = scalar_lea.vmem %s409, %s1173 [#allocation12]
        %1175 = vst [vmem:[%s1174] sm:$0xf] %v1171
        %1176 = vst [vmem:[%s1174 + $0x4] sm:$0xf] %v1172
        %s1177 = smul.u32 %s32, 5
        %s1178 = sadd.s32 %s1177, 1
        %s1179 = smul.u32 %s1178, 16
        %v1180 = vld [vmem:[%s354] sm:$0xff]
        %v1181 = vld [vmem:[%s354 + $0x8] sm:$0xf]
        %v1182 = vld [vmem:[%s354 + $0xc] sm:$0xff]
        %v1183 = vld [vmem:[%s354 + $0x14] sm:$0xf]
        %v1184 = vld [vmem:[%s354 + $0x18] sm:$0xff]
        %v1185 = vld [vmem:[%s354 + $0x20] sm:$0xf]
        %v1186 = vld [vmem:[%s354 + $0x24] sm:$0xff]
        %v1187 = vld [vmem:[%s354 + $0x2c] sm:$0xf]
        %v1188 = vld [vmem:[%s354 + $0x30] sm:$0xff]
        %v1189 = vld [vmem:[%s354 + $0x38] sm:$0xf]
        %v1190 = vld [vmem:[%s354 + $0x3c] sm:$0xff]
        %v1191 = vld [vmem:[%s354 + $0x44] sm:$0xf]
        %v1192 = vld [vmem:[%s354 + $0x48] sm:$0xff]
        %v1193 = vld [vmem:[%s354 + $0x50] sm:$0xf]
        %v1194 = vld [vmem:[%s354 + $0x54] sm:$0xff]
        %v1195 = vld [vmem:[%s354 + $0x5c] sm:$0xf]
        %v1196 = vld [vmem:[%s354 + $0x60] sm:$0xff]
        %v1197 = vld [vmem:[%s354 + $0x68] sm:$0xf]
        %v1198 = vld [vmem:[%s354 + $0x6c] sm:$0xff]
        %v1199 = vld [vmem:[%s354 + $0x74] sm:$0xf]
        %v1200 = vld [vmem:[%s354 + $0x78] sm:$0xff]
        %v1201 = vld [vmem:[%s354 + $0x80] sm:$0xf]
        %v1202 = vld [vmem:[%s354 + $0x84] sm:$0xff]
        %v1203 = vld [vmem:[%s354 + $0x8c] sm:$0xf]
        %v1204 = vld [vmem:[%s354 + $0x90] sm:$0xff]
        %v1205 = vld [vmem:[%s354 + $0x98] sm:$0xf]
        %v1206 = vld [vmem:[%s354 + $0x9c] sm:$0xff]
        %v1207 = vld [vmem:[%s354 + $0xa4] sm:$0xf]
        %v1208 = vld [vmem:[%s354 + $0xa8] sm:$0xff]
        %v1209 = vld [vmem:[%s354 + $0xb0] sm:$0xf]
        %v1210 = vld [vmem:[%s354 + $0xb4] sm:$0xff]
        %v1211 = vld [vmem:[%s354 + $0xbc] sm:$0xf]
        %v1214 = vunpack.c.l.b16 %v1171
        %v1215 = vunpack.c.l.b16 %v1172
        %v1216 = vpack.c.b16 %v1215, %v1214
        %v1250 = vunpack.c.l.b16 %v1180
        %v1251 = vunpack.c.h.b16 %v1180
        %v1252 = vunpack.c.l.b16 %v1181
        %v1253 = vunpack.c.l.b16 %v1182
        %v1254 = vunpack.c.h.b16 %v1182
        %v1255 = vunpack.c.l.b16 %v1183
        %v1256 = vunpack.c.l.b16 %v1184
        %v1257 = vunpack.c.h.b16 %v1184
        %v1258 = vunpack.c.l.b16 %v1185
        %v1259 = vunpack.c.l.b16 %v1186
        %v1260 = vunpack.c.h.b16 %v1186
        %v1261 = vunpack.c.l.b16 %v1187
        %v1262 = vunpack.c.l.b16 %v1188
        %v1263 = vunpack.c.h.b16 %v1188
        %v1264 = vunpack.c.l.b16 %v1189
        %v1265 = vunpack.c.l.b16 %v1190
        %v1266 = vunpack.c.h.b16 %v1190
        %v1267 = vunpack.c.l.b16 %v1191
        %v1268 = vunpack.c.l.b16 %v1192
        %v1269 = vunpack.c.h.b16 %v1192
        %v1270 = vunpack.c.l.b16 %v1193
        %v1271 = vunpack.c.l.b16 %v1194
        %v1272 = vunpack.c.h.b16 %v1194
        %v1273 = vunpack.c.l.b16 %v1195
        %v1274 = vunpack.c.l.b16 %v1196
        %v1275 = vunpack.c.h.b16 %v1196
        %v1276 = vunpack.c.l.b16 %v1197
        %v1277 = vunpack.c.l.b16 %v1198
        %v1278 = vunpack.c.h.b16 %v1198
        %v1279 = vunpack.c.l.b16 %v1199
        %v1280 = vunpack.c.l.b16 %v1200
        %v1281 = vunpack.c.h.b16 %v1200
        %v1282 = vunpack.c.l.b16 %v1201
        %v1283 = vunpack.c.l.b16 %v1202
        %v1284 = vunpack.c.h.b16 %v1202
        %v1285 = vunpack.c.l.b16 %v1203
        %v1286 = vunpack.c.l.b16 %v1204
        %v1287 = vunpack.c.h.b16 %v1204
        %v1288 = vunpack.c.l.b16 %v1205
        %v1289 = vunpack.c.l.b16 %v1206
        %v1290 = vunpack.c.h.b16 %v1206
        %v1291 = vunpack.c.l.b16 %v1207
        %v1292 = vunpack.c.l.b16 %v1208
        %v1293 = vunpack.c.h.b16 %v1208
        %v1294 = vunpack.c.l.b16 %v1209
        %v1295 = vunpack.c.l.b16 %v1210
        %v1296 = vunpack.c.h.b16 %v1210
        %v1297 = vunpack.c.l.b16 %v1211
        %v1298 = vpack.c.b16 %v1253, %v1250
        %v1299 = vpack.c.b16 %v1254, %v1251
        %v1300 = vpack.c.b16 %v1255, %v1252
        %v1301 = vpack.c.b16 %v1259, %v1256
        %v1302 = vpack.c.b16 %v1260, %v1257
        %v1303 = vpack.c.b16 %v1261, %v1258
        %v1304 = vpack.c.b16 %v1265, %v1262
        %v1305 = vpack.c.b16 %v1266, %v1263
        %v1306 = vpack.c.b16 %v1267, %v1264
        %v1307 = vpack.c.b16 %v1271, %v1268
        %v1308 = vpack.c.b16 %v1272, %v1269
        %v1309 = vpack.c.b16 %v1273, %v1270
        %v1310 = vpack.c.b16 %v1277, %v1274
        %v1311 = vpack.c.b16 %v1278, %v1275
        %v1312 = vpack.c.b16 %v1279, %v1276
        %v1313 = vpack.c.b16 %v1283, %v1280
        %v1314 = vpack.c.b16 %v1284, %v1281
        %v1315 = vpack.c.b16 %v1285, %v1282
        %v1316 = vpack.c.b16 %v1289, %v1286
        %v1317 = vpack.c.b16 %v1290, %v1287
        %v1318 = vpack.c.b16 %v1291, %v1288
        %v1319 = vpack.c.b16 %v1295, %v1292
        %v1320 = vpack.c.b16 %v1296, %v1293
        %v1321 = vpack.c.b16 %v1297, %v1294
        %1346 = vmatpush.bf16.msra.mxu0 %v1319
        %1347 = vmatpush.bf16.msra.mxu0 %v1316
        %1348 = vmatpush.bf16.msra.mxu0 %v1313
        %1349 = vmatpush.bf16.msra.mxu0 %v1310
        %1350 = vmatpush.bf16.msra.mxu0 %v1307
        %1351 = vmatpush.bf16.msra.mxu0 %v1304
        %1352 = vmatpush.bf16.msra.mxu0 %v1301
        %1353 = vmatpush.bf16.msra.mxu0 %v1298
        %1354 = vmatmul.bf16.gmra.mxu0 %v1216
        %v1355 = vpop.f32.mrf.mxu0
        %v1356 = vadd.f32 0.0, %v1355
        %v1357 = vpop.f32.mrf.mxu0
        %v1358 = vadd.f32 0.0, %v1357
        %1359 = vdwg.mxu0
        %1360 = vmatpush.bf16.msra.mxu0 %v1320
        %1361 = vmatpush.bf16.msra.mxu0 %v1317
        %1362 = vmatpush.bf16.msra.mxu0 %v1314
        %1363 = vmatpush.bf16.msra.mxu0 %v1311
        %1364 = vmatpush.bf16.msra.mxu0 %v1308
        %1365 = vmatpush.bf16.msra.mxu0 %v1305
        %1366 = vmatpush.bf16.msra.mxu0 %v1302
        %1367 = vmatpush.bf16.msra.mxu0 %v1299
        %1368 = vmatmul.bf16.gmra.mxu0 %v1216
        %v1369 = vpop.f32.mrf.mxu0
        %v1370 = vadd.f32 0.0, %v1369
        %v1371 = vpop.f32.mrf.mxu0
        %v1372 = vadd.f32 0.0, %v1371
        %1373 = vdwg.mxu0
        %1374 = vmatpush.bf16.msra.mxu0 %v1321
        %1375 = vmatpush.bf16.msra.mxu0 %v1318
        %1376 = vmatpush.bf16.msra.mxu0 %v1315
        %1377 = vmatpush.bf16.msra.mxu0 %v1312
        %1378 = vmatpush.bf16.msra.mxu0 %v1309
        %1379 = vmatpush.bf16.msra.mxu0 %v1306
        %1380 = vmatpush.bf16.msra.mxu0 %v1303
        %1381 = vmatpush.bf16.msra.mxu0 %v1300
        %1382 = vmatmul.bf16.gmra.mxu0 %v1216
        %v1383 = vpop.f32.mrf.mxu0
        %v1384 = vadd.f32 0.0, %v1383
        %v1385 = vpop.f32.mrf.mxu0
        %v1386 = vadd.f32 0.0, %v1385
        %1387 = vdwg.mxu0
        %s1388 = sshra.s32 %s1179, 3
        %s1389 = sand.u32 %s1179, 7
        %s1390 = smul.u32 %s1388, 3
        %s1391 = smul.addr %s1390, 8
        %s1392 = scalar_lea.vmem [#allocation3], %s1391
        %v1393 = vld [vmem:[%s1392] sm:$0xff]
        %v1394 = vld [vmem:[%s1392 + $0x8] sm:$0xff]
        %v1395 = vld [vmem:[%s1392 + $0x10] sm:$0xff]
        %v1396 = vld [vmem:[%s1392 + $0x18] sm:$0xff]
        %v1397 = vld [vmem:[%s1392 + $0x20] sm:$0xff]
        %v1398 = vld [vmem:[%s1392 + $0x28] sm:$0xff]
        %v1399 = vadd.f32 %v1393, %v1356
        %v1400 = vadd.f32 %v1396, %v1358
        %v1401 = vxor.u32 %v1399, 2147483648
        %v1402 = vxor.u32 %v1400, 2147483648
        %v1403 = vmul.f32 %v1401, 1.442695
        %v1404 = vpow.pop %v1403
        %v1405 = vmul.f32 %v1402, 1.442695
        %v1406 = vpow.pop %v1405
        %v1407 = vadd.f32 %v1404, 1.0
        %v1408 = vadd.f32 %v1406, 1.0
        %v1409 = vrcp.pop %v1407
        %v1410 = vmul.f32 %v1407, %v1409
        %v1411 = vsub.f32 1.0, %v1410
        %v1412 = vmul.f32 %v1409, %v1411
        %v1413 = vadd.f32 %v1409, %v1412
        %vm1414 = vweird.f32 %v1407
        %vm1415 = vweird.f32 %v1409
        %vm1416 = vmor %vm1414, %vm1415
        %v1417 = vsel %vm1416, %v1409, %v1413
        %v1418 = vand.u32 2147483647, %v1407
        %vm1419 = vcmp.eq.f32.partialorder %v1418, 8.507059e+37
        %v1420 = vand.u32 %v1407, 2147483648
        %v1421 = vor.u32 1.1754944e-38, %v1420
        %v1422 = vsel %vm1419, %v1421, %v1417
        %v1423 = vmul.f32 1.0, %v1422
        %v1424 = vrcp.pop %v1408
        %v1425 = vmul.f32 %v1408, %v1424
        %v1426 = vsub.f32 1.0, %v1425
        %v1427 = vmul.f32 %v1424, %v1426
        %v1428 = vadd.f32 %v1424, %v1427
        %vm1429 = vweird.f32 %v1408
        %vm1430 = vweird.f32 %v1424
        %vm1431 = vmor %vm1429, %vm1430
        %v1432 = vsel %vm1431, %v1424, %v1428
        %v1433 = vand.u32 2147483647, %v1408
        %vm1434 = vcmp.eq.f32.partialorder %v1433, 8.507059e+37
        %v1435 = vand.u32 %v1408, 2147483648
        %v1436 = vor.u32 1.1754944e-38, %v1435
        %v1437 = vsel %vm1434, %v1436, %v1432
        %v1438 = vmul.f32 1.0, %v1437
        %v1439 = vadd.f32 %v1394, %v1370
        %v1440 = vadd.f32 %v1397, %v1372
        %v1441 = vxor.u32 %v1439, 2147483648
        %v1442 = vxor.u32 %v1440, 2147483648
        %v1443 = vmul.f32 %v1441, 1.442695
        %v1444 = vpow.pop %v1443
        %v1445 = vmul.f32 %v1442, 1.442695
        %v1446 = vpow.pop %v1445
        %v1447 = vadd.f32 %v1444, 1.0
        %v1448 = vadd.f32 %v1446, 1.0
        %v1449 = vrcp.pop %v1447
        %v1450 = vmul.f32 %v1447, %v1449
        %v1451 = vsub.f32 1.0, %v1450
        %v1452 = vmul.f32 %v1449, %v1451
        %v1453 = vadd.f32 %v1449, %v1452
        %vm1454 = vweird.f32 %v1447
        %vm1455 = vweird.f32 %v1449
        %vm1456 = vmor %vm1454, %vm1455
        %v1457 = vsel %vm1456, %v1449, %v1453
        %v1458 = vand.u32 2147483647, %v1447
        %vm1459 = vcmp.eq.f32.partialorder %v1458, 8.507059e+37
        %v1460 = vand.u32 %v1447, 2147483648
        %v1461 = vor.u32 1.1754944e-38, %v1460
        %v1462 = vsel %vm1459, %v1461, %v1457
        %v1463 = vmul.f32 1.0, %v1462
        %v1464 = vrcp.pop %v1448
        %v1465 = vmul.f32 %v1448, %v1464
        %v1466 = vsub.f32 1.0, %v1465
        %v1467 = vmul.f32 %v1464, %v1466
        %v1468 = vadd.f32 %v1464, %v1467
        %vm1469 = vweird.f32 %v1448
        %vm1470 = vweird.f32 %v1464
        %vm1471 = vmor %vm1469, %vm1470
        %v1472 = vsel %vm1471, %v1464, %v1468
        %v1473 = vand.u32 2147483647, %v1448
        %vm1474 = vcmp.eq.f32.partialorder %v1473, 8.507059e+37
        %v1475 = vand.u32 %v1448, 2147483648
        %v1476 = vor.u32 1.1754944e-38, %v1475
        %v1477 = vsel %vm1474, %v1476, %v1472
        %v1478 = vmul.f32 1.0, %v1477
        %v1479 = vadd.f32 %v1384, %v1155
        %v1480 = vadd.f32 %v1386, %v1155
        %v1481 = vmul.f32 %v1423, %v1479
        %v1482 = vmul.f32 %v1438, %v1480
        %v1483 = vadd.f32 %v1395, %v1481
        %v1484 = vadd.f32 %v1398, %v1482
        %v1485 = vtanh.pop %v1483
        %v1486 = vtanh.pop %v1484
        %v1487 = vsub.f32 %v1169, %v1485
        %v1488 = vsub.f32 %v1170, %v1486
        %v1489 = vmul.f32 %v1463, %v1487
        %v1490 = vmul.f32 %v1478, %v1488
        %v1491 = vadd.f32 %v1485, %v1489
        %v1492 = vadd.f32 %v1486, %v1490
        %v1493 = vpack.c.bf16 %v1491, %v1491
        %v1494 = vpack.c.bf16 %v1492, %v1492
        %s1495 = smul.addr %s1388, 4
        %s1496 = scalar_lea.vmem %s409, %s1495 [#allocation12]
        %1497 = vst [vmem:[%s1496] sm:$0xf] %v1493
        %1498 = vst [vmem:[%s1496 + $0x4] sm:$0xf] %v1494
        %s1499 = smul.u32 %s32, 3
        %s1500 = sadd.s32 %s1499, 2
        %s1501 = smul.u32 %s1500, 16
        %v1502 = vld [vmem:[%s354] sm:$0xff]
        %v1503 = vld [vmem:[%s354 + $0x8] sm:$0xf]
        %v1504 = vld [vmem:[%s354 + $0xc] sm:$0xff]
        %v1505 = vld [vmem:[%s354 + $0x14] sm:$0xf]
        %v1506 = vld [vmem:[%s354 + $0x18] sm:$0xff]
        %v1507 = vld [vmem:[%s354 + $0x20] sm:$0xf]
        %v1508 = vld [vmem:[%s354 + $0x24] sm:$0xff]
        %v1509 = vld [vmem:[%s354 + $0x2c] sm:$0xf]
        %v1510 = vld [vmem:[%s354 + $0x30] sm:$0xff]
        %v1511 = vld [vmem:[%s354 + $0x38] sm:$0xf]
        %v1512 = vld [vmem:[%s354 + $0x3c] sm:$0xff]
        %v1513 = vld [vmem:[%s354 + $0x44] sm:$0xf]
        %v1514 = vld [vmem:[%s354 + $0x48] sm:$0xff]
        %v1515 = vld [vmem:[%s354 + $0x50] sm:$0xf]
        %v1516 = vld [vmem:[%s354 + $0x54] sm:$0xff]
        %v1517 = vld [vmem:[%s354 + $0x5c] sm:$0xf]
        %v1518 = vld [vmem:[%s354 + $0x60] sm:$0xff]
        %v1519 = vld [vmem:[%s354 + $0x68] sm:$0xf]
        %v1520 = vld [vmem:[%s354 + $0x6c] sm:$0xff]
        %v1521 = vld [vmem:[%s354 + $0x74] sm:$0xf]
        %v1522 = vld [vmem:[%s354 + $0x78] sm:$0xff]
        %v1523 = vld [vmem:[%s354 + $0x80] sm:$0xf]
        %v1524 = vld [vmem:[%s354 + $0x84] sm:$0xff]
        %v1525 = vld [vmem:[%s354 + $0x8c] sm:$0xf]
        %v1526 = vld [vmem:[%s354 + $0x90] sm:$0xff]
        %v1527 = vld [vmem:[%s354 + $0x98] sm:$0xf]
        %v1528 = vld [vmem:[%s354 + $0x9c] sm:$0xff]
        %v1529 = vld [vmem:[%s354 + $0xa4] sm:$0xf]
        %v1530 = vld [vmem:[%s354 + $0xa8] sm:$0xff]
        %v1531 = vld [vmem:[%s354 + $0xb0] sm:$0xf]
        %v1532 = vld [vmem:[%s354 + $0xb4] sm:$0xff]
        %v1533 = vld [vmem:[%s354 + $0xbc] sm:$0xf]
        %v1536 = vunpack.c.l.b16 %v1493
        %v1537 = vunpack.c.l.b16 %v1494
        %v1538 = vpack.c.b16 %v1537, %v1536
        %v1572 = vunpack.c.l.b16 %v1502
        %v1573 = vunpack.c.h.b16 %v1502
        %v1574 = vunpack.c.l.b16 %v1503
        %v1575 = vunpack.c.l.b16 %v1504
        %v1576 = vunpack.c.h.b16 %v1504
        %v1577 = vunpack.c.l.b16 %v1505
        %v1578 = vunpack.c.l.b16 %v1506
        %v1579 = vunpack.c.h.b16 %v1506
        %v1580 = vunpack.c.l.b16 %v1507
        %v1581 = vunpack.c.l.b16 %v1508
        %v1582 = vunpack.c.h.b16 %v1508
        %v1583 = vunpack.c.l.b16 %v1509
        %v1584 = vunpack.c.l.b16 %v1510
        %v1585 = vunpack.c.h.b16 %v1510
        %v1586 = vunpack.c.l.b16 %v1511
        %v1587 = vunpack.c.l.b16 %v1512
        %v1588 = vunpack.c.h.b16 %v1512
        %v1589 = vunpack.c.l.b16 %v1513
        %v1590 = vunpack.c.l.b16 %v1514
        %v1591 = vunpack.c.h.b16 %v1514
        %v1592 = vunpack.c.l.b16 %v1515
        %v1593 = vunpack.c.l.b16 %v1516
        %v1594 = vunpack.c.h.b16 %v1516
        %v1595 = vunpack.c.l.b16 %v1517
        %v1596 = vunpack.c.l.b16 %v1518
        %v1597 = vunpack.c.h.b16 %v1518
        %v1598 = vunpack.c.l.b16 %v1519
        %v1599 = vunpack.c.l.b16 %v1520
        %v1600 = vunpack.c.h.b16 %v1520
        %v1601 = vunpack.c.l.b16 %v1521
        %v1602 = vunpack.c.l.b16 %v1522
        %v1603 = vunpack.c.h.b16 %v1522
        %v1604 = vunpack.c.l.b16 %v1523
        %v1605 = vunpack.c.l.b16 %v1524
        %v1606 = vunpack.c.h.b16 %v1524
        %v1607 = vunpack.c.l.b16 %v1525
        %v1608 = vunpack.c.l.b16 %v1526
        %v1609 = vunpack.c.h.b16 %v1526
        %v1610 = vunpack.c.l.b16 %v1527
        %v1611 = vunpack.c.l.b16 %v1528
        %v1612 = vunpack.c.h.b16 %v1528
        %v1613 = vunpack.c.l.b16 %v1529
        %v1614 = vunpack.c.l.b16 %v1530
        %v1615 = vunpack.c.h.b16 %v1530
        %v1616 = vunpack.c.l.b16 %v1531
        %v1617 = vunpack.c.l.b16 %v1532
        %v1618 = vunpack.c.h.b16 %v1532
        %v1619 = vunpack.c.l.b16 %v1533
        %v1620 = vpack.c.b16 %v1575, %v1572
        %v1621 = vpack.c.b16 %v1576, %v1573
        %v1622 = vpack.c.b16 %v1577, %v1574
        %v1623 = vpack.c.b16 %v1581, %v1578
        %v1624 = vpack.c.b16 %v1582, %v1579
        %v1625 = vpack.c.b16 %v1583, %v1580
        %v1626 = vpack.c.b16 %v1587, %v1584
        %v1627 = vpack.c.b16 %v1588, %v1585
        %v1628 = vpack.c.b16 %v1589, %v1586
        %v1629 = vpack.c.b16 %v1593, %v1590
        %v1630 = vpack.c.b16 %v1594, %v1591
        %v1631 = vpack.c.b16 %v1595, %v1592
        %v1632 = vpack.c.b16 %v1599, %v1596
        %v1633 = vpack.c.b16 %v1600, %v1597
        %v1634 = vpack.c.b16 %v1601, %v1598
        %v1635 = vpack.c.b16 %v1605, %v1602
        %v1636 = vpack.c.b16 %v1606, %v1603
        %v1637 = vpack.c.b16 %v1607, %v1604
        %v1638 = vpack.c.b16 %v1611, %v1608
        %v1639 = vpack.c.b16 %v1612, %v1609
        %v1640 = vpack.c.b16 %v1613, %v1610
        %v1641 = vpack.c.b16 %v1617, %v1614
        %v1642 = vpack.c.b16 %v1618, %v1615
        %v1643 = vpack.c.b16 %v1619, %v1616
        %1668 = vmatpush.bf16.msra.mxu0 %v1641
        %1669 = vmatpush.bf16.msra.mxu0 %v1638
        %1670 = vmatpush.bf16.msra.mxu0 %v1635
        %1671 = vmatpush.bf16.msra.mxu0 %v1632
        %1672 = vmatpush.bf16.msra.mxu0 %v1629
        %1673 = vmatpush.bf16.msra.mxu0 %v1626
        %1674 = vmatpush.bf16.msra.mxu0 %v1623
        %1675 = vmatpush.bf16.msra.mxu0 %v1620
        %1676 = vmatmul.bf16.gmra.mxu0 %v1538
        %v1677 = vpop.f32.mrf.mxu0
        %v1678 = vadd.f32 0.0, %v1677
        %v1679 = vpop.f32.mrf.mxu0
        %v1680 = vadd.f32 0.0, %v1679
        %1681 = vdwg.mxu0
        %1682 = vmatpush.bf16.msra.mxu0 %v1642
        %1683 = vmatpush.bf16.msra.mxu0 %v1639
        %1684 = vmatpush.bf16.msra.mxu0 %v1636
        %1685 = vmatpush.bf16.msra.mxu0 %v1633
        %1686 = vmatpush.bf16.msra.mxu0 %v1630
        %1687 = vmatpush.bf16.msra.mxu0 %v1627
        %1688 = vmatpush.bf16.msra.mxu0 %v1624
        %1689 = vmatpush.bf16.msra.mxu0 %v1621
        %1690 = vmatmul.bf16.gmra.mxu0 %v1538
        %v1691 = vpop.f32.mrf.mxu0
        %v1692 = vadd.f32 0.0, %v1691
        %v1693 = vpop.f32.mrf.mxu0
        %v1694 = vadd.f32 0.0, %v1693
        %1695 = vdwg.mxu0
        %1696 = vmatpush.bf16.msra.mxu0 %v1643
        %1697 = vmatpush.bf16.msra.mxu0 %v1640
        %1698 = vmatpush.bf16.msra.mxu0 %v1637
        %1699 = vmatpush.bf16.msra.mxu0 %v1634
        %1700 = vmatpush.bf16.msra.mxu0 %v1631
        %1701 = vmatpush.bf16.msra.mxu0 %v1628
        %1702 = vmatpush.bf16.msra.mxu0 %v1625
        %1703 = vmatpush.bf16.msra.mxu0 %v1622
        %1704 = vmatmul.bf16.gmra.mxu0 %v1538
        %v1705 = vpop.f32.mrf.mxu0
        %v1706 = vadd.f32 0.0, %v1705
        %v1707 = vpop.f32.mrf.mxu0
        %v1708 = vadd.f32 0.0, %v1707
        %1709 = vdwg.mxu0
        %s1710 = sshra.s32 %s1501, 3
        %s1711 = sand.u32 %s1501, 7
        %s1712 = smul.u32 %s1710, 3
        %s1713 = smul.addr %s1712, 8
        %s1714 = scalar_lea.vmem [#allocation3], %s1713
        %v1715 = vld [vmem:[%s1714] sm:$0xff]
        %v1716 = vld [vmem:[%s1714 + $0x8] sm:$0xff]
        %v1717 = vld [vmem:[%s1714 + $0x10] sm:$0xff]
        %v1718 = vld [vmem:[%s1714 + $0x18] sm:$0xff]
        %v1719 = vld [vmem:[%s1714 + $0x20] sm:$0xff]
        %v1720 = vld [vmem:[%s1714 + $0x28] sm:$0xff]
        %v1721 = vadd.f32 %v1715, %v1678
        %v1722 = vadd.f32 %v1718, %v1680
        %v1723 = vxor.u32 %v1721, 2147483648
        %v1724 = vxor.u32 %v1722, 2147483648
        %v1725 = vmul.f32 %v1723, 1.442695
        %v1726 = vpow.pop %v1725
        %v1727 = vmul.f32 %v1724, 1.442695
        %v1728 = vpow.pop %v1727
        %v1729 = vadd.f32 %v1726, 1.0
        %v1730 = vadd.f32 %v1728, 1.0
        %v1731 = vrcp.pop %v1729
        %v1732 = vmul.f32 %v1729, %v1731
        %v1733 = vsub.f32 1.0, %v1732
        %v1734 = vmul.f32 %v1731, %v1733
        %v1735 = vadd.f32 %v1731, %v1734
        %vm1736 = vweird.f32 %v1729
        %vm1737 = vweird.f32 %v1731
        %vm1738 = vmor %vm1736, %vm1737
        %v1739 = vsel %vm1738, %v1731, %v1735
        %v1740 = vand.u32 2147483647, %v1729
        %vm1741 = vcmp.eq.f32.partialorder %v1740, 8.507059e+37
        %v1742 = vand.u32 %v1729, 2147483648
        %v1743 = vor.u32 1.1754944e-38, %v1742
        %v1744 = vsel %vm1741, %v1743, %v1739
        %v1745 = vmul.f32 1.0, %v1744
        %v1746 = vrcp.pop %v1730
        %v1747 = vmul.f32 %v1730, %v1746
        %v1748 = vsub.f32 1.0, %v1747
        %v1749 = vmul.f32 %v1746, %v1748
        %v1750 = vadd.f32 %v1746, %v1749
        %vm1751 = vweird.f32 %v1730
        %vm1752 = vweird.f32 %v1746
        %vm1753 = vmor %vm1751, %vm1752
        %v1754 = vsel %vm1753, %v1746, %v1750
        %v1755 = vand.u32 2147483647, %v1730
        %vm1756 = vcmp.eq.f32.partialorder %v1755, 8.507059e+37
        %v1757 = vand.u32 %v1730, 2147483648
        %v1758 = vor.u32 1.1754944e-38, %v1757
        %v1759 = vsel %vm1756, %v1758, %v1754
        %v1760 = vmul.f32 1.0, %v1759
        %v1761 = vadd.f32 %v1716, %v1692
        %v1762 = vadd.f32 %v1719, %v1694
        %v1763 = vxor.u32 %v1761, 2147483648
        %v1764 = vxor.u32 %v1762, 2147483648
        %v1765 = vmul.f32 %v1763, 1.442695
        %v1766 = vpow.pop %v1765
        %v1767 = vmul.f32 %v1764, 1.442695
        %v1768 = vpow.pop %v1767
        %v1769 = vadd.f32 %v1766, 1.0
        %v1770 = vadd.f32 %v1768, 1.0
        %v1771 = vrcp.pop %v1769
        %v1772 = vmul.f32 %v1769, %v1771
        %v1773 = vsub.f32 1.0, %v1772
        %v1774 = vmul.f32 %v1771, %v1773
        %v1775 = vadd.f32 %v1771, %v1774
        %vm1776 = vweird.f32 %v1769
        %vm1777 = vweird.f32 %v1771
        %vm1778 = vmor %vm1776, %vm1777
        %v1779 = vsel %vm1778, %v1771, %v1775
        %v1780 = vand.u32 2147483647, %v1769
        %vm1781 = vcmp.eq.f32.partialorder %v1780, 8.507059e+37
        %v1782 = vand.u32 %v1769, 2147483648
        %v1783 = vor.u32 1.1754944e-38, %v1782
        %v1784 = vsel %vm1781, %v1783, %v1779
        %v1785 = vmul.f32 1.0, %v1784
        %v1786 = vrcp.pop %v1770
        %v1787 = vmul.f32 %v1770, %v1786
        %v1788 = vsub.f32 1.0, %v1787
        %v1789 = vmul.f32 %v1786, %v1788
        %v1790 = vadd.f32 %v1786, %v1789
        %vm1791 = vweird.f32 %v1770
        %vm1792 = vweird.f32 %v1786
        %vm1793 = vmor %vm1791, %vm1792
        %v1794 = vsel %vm1793, %v1786, %v1790
        %v1795 = vand.u32 2147483647, %v1770
        %vm1796 = vcmp.eq.f32.partialorder %v1795, 8.507059e+37
        %v1797 = vand.u32 %v1770, 2147483648
        %v1798 = vor.u32 1.1754944e-38, %v1797
        %v1799 = vsel %vm1796, %v1798, %v1794
        %v1800 = vmul.f32 1.0, %v1799
        %v1801 = vadd.f32 %v1706, %v1155
        %v1802 = vadd.f32 %v1708, %v1155
        %v1803 = vmul.f32 %v1745, %v1801
        %v1804 = vmul.f32 %v1760, %v1802
        %v1805 = vadd.f32 %v1717, %v1803
        %v1806 = vadd.f32 %v1720, %v1804
        %v1807 = vtanh.pop %v1805
        %v1808 = vtanh.pop %v1806
        %v1809 = vsub.f32 %v1491, %v1807
        %v1810 = vsub.f32 %v1492, %v1808
        %v1811 = vmul.f32 %v1785, %v1809
        %v1812 = vmul.f32 %v1800, %v1810
        %v1813 = vadd.f32 %v1807, %v1811
        %v1814 = vadd.f32 %v1808, %v1812
        %v1815 = vpack.c.bf16 %v1813, %v1813
        %v1816 = vpack.c.bf16 %v1814, %v1814
        %s1817 = smul.addr %s1710, 4
        %s1818 = scalar_lea.vmem %s409, %s1817 [#allocation12]
        %1819 = vst [vmem:[%s1818] sm:$0xf] %v1815
        %1820 = vst [vmem:[%s1818 + $0x4] sm:$0xf] %v1816
        %s1821 = sadd.s32 %s32, 3
        %s1822 = smul.u32 %s1821, 16
        %v1823 = vld [vmem:[%s354] sm:$0xff]
        %v1824 = vld [vmem:[%s354 + $0x8] sm:$0xf]
        %v1825 = vld [vmem:[%s354 + $0xc] sm:$0xff]
        %v1826 = vld [vmem:[%s354 + $0x14] sm:$0xf]
        %v1827 = vld [vmem:[%s354 + $0x18] sm:$0xff]
        %v1828 = vld [vmem:[%s354 + $0x20] sm:$0xf]
        %v1829 = vld [vmem:[%s354 + $0x24] sm:$0xff]
        %v1830 = vld [vmem:[%s354 + $0x2c] sm:$0xf]
        %v1831 = vld [vmem:[%s354 + $0x30] sm:$0xff]
        %v1832 = vld [vmem:[%s354 + $0x38] sm:$0xf]
        %v1833 = vld [vmem:[%s354 + $0x3c] sm:$0xff]
        %v1834 = vld [vmem:[%s354 + $0x44] sm:$0xf]
        %v1835 = vld [vmem:[%s354 + $0x48] sm:$0xff]
        %v1836 = vld [vmem:[%s354 + $0x50] sm:$0xf]
        %v1837 = vld [vmem:[%s354 + $0x54] sm:$0xff]
        %v1838 = vld [vmem:[%s354 + $0x5c] sm:$0xf]
        %v1839 = vld [vmem:[%s354 + $0x60] sm:$0xff]
        %v1840 = vld [vmem:[%s354 + $0x68] sm:$0xf]
        %v1841 = vld [vmem:[%s354 + $0x6c] sm:$0xff]
        %v1842 = vld [vmem:[%s354 + $0x74] sm:$0xf]
        %v1843 = vld [vmem:[%s354 + $0x78] sm:$0xff]
        %v1844 = vld [vmem:[%s354 + $0x80] sm:$0xf]
        %v1845 = vld [vmem:[%s354 + $0x84] sm:$0xff]
        %v1846 = vld [vmem:[%s354 + $0x8c] sm:$0xf]
        %v1847 = vld [vmem:[%s354 + $0x90] sm:$0xff]
        %v1848 = vld [vmem:[%s354 + $0x98] sm:$0xf]
        %v1849 = vld [vmem:[%s354 + $0x9c] sm:$0xff]
        %v1850 = vld [vmem:[%s354 + $0xa4] sm:$0xf]
        %v1851 = vld [vmem:[%s354 + $0xa8] sm:$0xff]
        %v1852 = vld [vmem:[%s354 + $0xb0] sm:$0xf]
        %v1853 = vld [vmem:[%s354 + $0xb4] sm:$0xff]
        %v1854 = vld [vmem:[%s354 + $0xbc] sm:$0xf]
        %v1857 = vunpack.c.l.b16 %v1815
        %v1858 = vunpack.c.l.b16 %v1816
        %v1859 = vpack.c.b16 %v1858, %v1857
        %v1893 = vunpack.c.l.b16 %v1823
        %v1894 = vunpack.c.h.b16 %v1823
        %v1895 = vunpack.c.l.b16 %v1824
        %v1896 = vunpack.c.l.b16 %v1825
        %v1897 = vunpack.c.h.b16 %v1825
        %v1898 = vunpack.c.l.b16 %v1826
        %v1899 = vunpack.c.l.b16 %v1827
        %v1900 = vunpack.c.h.b16 %v1827
        %v1901 = vunpack.c.l.b16 %v1828
        %v1902 = vunpack.c.l.b16 %v1829
        %v1903 = vunpack.c.h.b16 %v1829
        %v1904 = vunpack.c.l.b16 %v1830
        %v1905 = vunpack.c.l.b16 %v1831
        %v1906 = vunpack.c.h.b16 %v1831
        %v1907 = vunpack.c.l.b16 %v1832
        %v1908 = vunpack.c.l.b16 %v1833
        %v1909 = vunpack.c.h.b16 %v1833
        %v1910 = vunpack.c.l.b16 %v1834
        %v1911 = vunpack.c.l.b16 %v1835
        %v1912 = vunpack.c.h.b16 %v1835
        %v1913 = vunpack.c.l.b16 %v1836
        %v1914 = vunpack.c.l.b16 %v1837
        %v1915 = vunpack.c.h.b16 %v1837
        %v1916 = vunpack.c.l.b16 %v1838
        %v1917 = vunpack.c.l.b16 %v1839
        %v1918 = vunpack.c.h.b16 %v1839
        %v1919 = vunpack.c.l.b16 %v1840
        %v1920 = vunpack.c.l.b16 %v1841
        %v1921 = vunpack.c.h.b16 %v1841
        %v1922 = vunpack.c.l.b16 %v1842
        %v1923 = vunpack.c.l.b16 %v1843
        %v1924 = vunpack.c.h.b16 %v1843
        %v1925 = vunpack.c.l.b16 %v1844
        %v1926 = vunpack.c.l.b16 %v1845
        %v1927 = vunpack.c.h.b16 %v1845
        %v1928 = vunpack.c.l.b16 %v1846
        %v1929 = vunpack.c.l.b16 %v1847
        %v1930 = vunpack.c.h.b16 %v1847
        %v1931 = vunpack.c.l.b16 %v1848
        %v1932 = vunpack.c.l.b16 %v1849
        %v1933 = vunpack.c.h.b16 %v1849
        %v1934 = vunpack.c.l.b16 %v1850
        %v1935 = vunpack.c.l.b16 %v1851
        %v1936 = vunpack.c.h.b16 %v1851
        %v1937 = vunpack.c.l.b16 %v1852
        %v1938 = vunpack.c.l.b16 %v1853
        %v1939 = vunpack.c.h.b16 %v1853
        %v1940 = vunpack.c.l.b16 %v1854
        %v1941 = vpack.c.b16 %v1896, %v1893
        %v1942 = vpack.c.b16 %v1897, %v1894
        %v1943 = vpack.c.b16 %v1898, %v1895
        %v1944 = vpack.c.b16 %v1902, %v1899
        %v1945 = vpack.c.b16 %v1903, %v1900
        %v1946 = vpack.c.b16 %v1904, %v1901
        %v1947 = vpack.c.b16 %v1908, %v1905
        %v1948 = vpack.c.b16 %v1909, %v1906
        %v1949 = vpack.c.b16 %v1910, %v1907
        %v1950 = vpack.c.b16 %v1914, %v1911
        %v1951 = vpack.c.b16 %v1915, %v1912
        %v1952 = vpack.c.b16 %v1916, %v1913
        %v1953 = vpack.c.b16 %v1920, %v1917
        %v1954 = vpack.c.b16 %v1921, %v1918
        %v1955 = vpack.c.b16 %v1922, %v1919
        %v1956 = vpack.c.b16 %v1926, %v1923
        %v1957 = vpack.c.b16 %v1927, %v1924
        %v1958 = vpack.c.b16 %v1928, %v1925
        %v1959 = vpack.c.b16 %v1932, %v1929
        %v1960 = vpack.c.b16 %v1933, %v1930
        %v1961 = vpack.c.b16 %v1934, %v1931
        %v1962 = vpack.c.b16 %v1938, %v1935
        %v1963 = vpack.c.b16 %v1939, %v1936
        %v1964 = vpack.c.b16 %v1940, %v1937
        %1989 = vmatpush.bf16.msra.mxu0 %v1962
        %1990 = vmatpush.bf16.msra.mxu0 %v1959
        %1991 = vmatpush.bf16.msra.mxu0 %v1956
        %1992 = vmatpush.bf16.msra.mxu0 %v1953
        %1993 = vmatpush.bf16.msra.mxu0 %v1950
        %1994 = vmatpush.bf16.msra.mxu0 %v1947
        %1995 = vmatpush.bf16.msra.mxu0 %v1944
        %1996 = vmatpush.bf16.msra.mxu0 %v1941
        %1997 = vmatmul.bf16.gmra.mxu0 %v1859
        %v1998 = vpop.f32.mrf.mxu0
        %v1999 = vadd.f32 0.0, %v1998
        %v2000 = vpop.f32.mrf.mxu0
        %v2001 = vadd.f32 0.0, %v2000
        %2002 = vdwg.mxu0
        %2003 = vmatpush.bf16.msra.mxu0 %v1963
        %2004 = vmatpush.bf16.msra.mxu0 %v1960
        %2005 = vmatpush.bf16.msra.mxu0 %v1957
        %2006 = vmatpush.bf16.msra.mxu0 %v1954
        %2007 = vmatpush.bf16.msra.mxu0 %v1951
        %2008 = vmatpush.bf16.msra.mxu0 %v1948
        %2009 = vmatpush.bf16.msra.mxu0 %v1945
        %2010 = vmatpush.bf16.msra.mxu0 %v1942
        %2011 = vmatmul.bf16.gmra.mxu0 %v1859
        %v2012 = vpop.f32.mrf.mxu0
        %v2013 = vadd.f32 0.0, %v2012
        %v2014 = vpop.f32.mrf.mxu0
        %v2015 = vadd.f32 0.0, %v2014
        %2016 = vdwg.mxu0
        %2017 = vmatpush.bf16.msra.mxu0 %v1964
        %2018 = vmatpush.bf16.msra.mxu0 %v1961
        %2019 = vmatpush.bf16.msra.mxu0 %v1958
        %2020 = vmatpush.bf16.msra.mxu0 %v1955
        %2021 = vmatpush.bf16.msra.mxu0 %v1952
        %2022 = vmatpush.bf16.msra.mxu0 %v1949
        %2023 = vmatpush.bf16.msra.mxu0 %v1946
        %2024 = vmatpush.bf16.msra.mxu0 %v1943
        %2025 = vmatmul.bf16.gmra.mxu0 %v1859
        %v2026 = vpop.f32.mrf.mxu0
        %v2027 = vadd.f32 0.0, %v2026
        %v2028 = vpop.f32.mrf.mxu0
        %v2029 = vadd.f32 0.0, %v2028
        %2030 = vdwg.mxu0
        %s2031 = sshra.s32 %s1822, 3
        %s2032 = sand.u32 %s1822, 7
        %s2033 = smul.u32 %s2031, 3
        %s2034 = smul.addr %s2033, 8
        %s2035 = scalar_lea.vmem [#allocation3], %s2034
        %v2036 = vld [vmem:[%s2035] sm:$0xff]
        %v2037 = vld [vmem:[%s2035 + $0x8] sm:$0xff]
        %v2038 = vld [vmem:[%s2035 + $0x10] sm:$0xff]
        %v2039 = vld [vmem:[%s2035 + $0x18] sm:$0xff]
        %v2040 = vld [vmem:[%s2035 + $0x20] sm:$0xff]
        %v2041 = vld [vmem:[%s2035 + $0x28] sm:$0xff]
        %v2042 = vadd.f32 %v2036, %v1999
        %v2043 = vadd.f32 %v2039, %v2001
        %v2044 = vxor.u32 %v2042, 2147483648
        %v2045 = vxor.u32 %v2043, 2147483648
        %v2046 = vmul.f32 %v2044, 1.442695
        %v2047 = vpow.pop %v2046
        %v2048 = vmul.f32 %v2045, 1.442695
        %v2049 = vpow.pop %v2048
        %v2050 = vadd.f32 %v2047, 1.0
        %v2051 = vadd.f32 %v2049, 1.0
        %v2052 = vrcp.pop %v2050
        %v2053 = vmul.f32 %v2050, %v2052
        %v2054 = vsub.f32 1.0, %v2053
        %v2055 = vmul.f32 %v2052, %v2054
        %v2056 = vadd.f32 %v2052, %v2055
        %vm2057 = vweird.f32 %v2050
        %vm2058 = vweird.f32 %v2052
        %vm2059 = vmor %vm2057, %vm2058
        %v2060 = vsel %vm2059, %v2052, %v2056
        %v2061 = vand.u32 2147483647, %v2050
        %vm2062 = vcmp.eq.f32.partialorder %v2061, 8.507059e+37
        %v2063 = vand.u32 %v2050, 2147483648
        %v2064 = vor.u32 1.1754944e-38, %v2063
        %v2065 = vsel %vm2062, %v2064, %v2060
        %v2066 = vmul.f32 1.0, %v2065
        %v2067 = vrcp.pop %v2051
        %v2068 = vmul.f32 %v2051, %v2067
        %v2069 = vsub.f32 1.0, %v2068
        %v2070 = vmul.f32 %v2067, %v2069
        %v2071 = vadd.f32 %v2067, %v2070
        %vm2072 = vweird.f32 %v2051
        %vm2073 = vweird.f32 %v2067
        %vm2074 = vmor %vm2072, %vm2073
        %v2075 = vsel %vm2074, %v2067, %v2071
        %v2076 = vand.u32 2147483647, %v2051
        %vm2077 = vcmp.eq.f32.partialorder %v2076, 8.507059e+37
        %v2078 = vand.u32 %v2051, 2147483648
        %v2079 = vor.u32 1.1754944e-38, %v2078
        %v2080 = vsel %vm2077, %v2079, %v2075
        %v2081 = vmul.f32 1.0, %v2080
        %v2082 = vadd.f32 %v2037, %v2013
        %v2083 = vadd.f32 %v2040, %v2015
        %v2084 = vxor.u32 %v2082, 2147483648
        %v2085 = vxor.u32 %v2083, 2147483648
        %v2086 = vmul.f32 %v2084, 1.442695
        %v2087 = vpow.pop %v2086
        %v2088 = vmul.f32 %v2085, 1.442695
        %v2089 = vpow.pop %v2088
        %v2090 = vadd.f32 %v2087, 1.0
        %v2091 = vadd.f32 %v2089, 1.0
        %v2092 = vrcp.pop %v2090
        %v2093 = vmul.f32 %v2090, %v2092
        %v2094 = vsub.f32 1.0, %v2093
        %v2095 = vmul.f32 %v2092, %v2094
        %v2096 = vadd.f32 %v2092, %v2095
        %vm2097 = vweird.f32 %v2090
        %vm2098 = vweird.f32 %v2092
        %vm2099 = vmor %vm2097, %vm2098
        %v2100 = vsel %vm2099, %v2092, %v2096
        %v2101 = vand.u32 2147483647, %v2090
        %vm2102 = vcmp.eq.f32.partialorder %v2101, 8.507059e+37
        %v2103 = vand.u32 %v2090, 2147483648
        %v2104 = vor.u32 1.1754944e-38, %v2103
        %v2105 = vsel %vm2102, %v2104, %v2100
        %v2106 = vmul.f32 1.0, %v2105
        %v2107 = vrcp.pop %v2091
        %v2108 = vmul.f32 %v2091, %v2107
        %v2109 = vsub.f32 1.0, %v2108
        %v2110 = vmul.f32 %v2107, %v2109
        %v2111 = vadd.f32 %v2107, %v2110
        %vm2112 = vweird.f32 %v2091
        %vm2113 = vweird.f32 %v2107
        %vm2114 = vmor %vm2112, %vm2113
        %v2115 = vsel %vm2114, %v2107, %v2111
        %v2116 = vand.u32 2147483647, %v2091
        %vm2117 = vcmp.eq.f32.partialorder %v2116, 8.507059e+37
        %v2118 = vand.u32 %v2091, 2147483648
        %v2119 = vor.u32 1.1754944e-38, %v2118
        %v2120 = vsel %vm2117, %v2119, %v2115
        %v2121 = vmul.f32 1.0, %v2120
        %v2122 = vadd.f32 %v2027, %v1155
        %v2123 = vadd.f32 %v2029, %v1155
        %v2124 = vmul.f32 %v2066, %v2122
        %v2125 = vmul.f32 %v2081, %v2123
        %v2126 = vadd.f32 %v2038, %v2124
        %v2127 = vadd.f32 %v2041, %v2125
        %v2128 = vtanh.pop %v2126
        %v2129 = vtanh.pop %v2127
        %v2130 = vsub.f32 %v1813, %v2128
        %v2131 = vsub.f32 %v1814, %v2129
        %v2132 = vmul.f32 %v2106, %v2130
        %v2133 = vmul.f32 %v2121, %v2131
        %v2134 = vadd.f32 %v2128, %v2132
        %v2135 = vadd.f32 %v2129, %v2133
        %v2136 = vpack.c.bf16 %v2134, %v2134
        %v2137 = vpack.c.bf16 %v2135, %v2135
        %s2138 = smul.addr %s2031, 4
        %s2139 = scalar_lea.vmem %s409, %s2138 [#allocation12]
        %2140 = vst [vmem:[%s2139] sm:$0xf] %v2136
        %2141 = vst [vmem:[%s2139 + $0x4] sm:$0xf] %v2137
        %s2142 = ssub.s32 4, %s32
        %s2143 = smul.u32 %s2142, 16
        %v2144 = vld [vmem:[%s354] sm:$0xff]
        %v2145 = vld [vmem:[%s354 + $0x8] sm:$0xf]
        %v2146 = vld [vmem:[%s354 + $0xc] sm:$0xff]
        %v2147 = vld [vmem:[%s354 + $0x14] sm:$0xf]
        %v2148 = vld [vmem:[%s354 + $0x18] sm:$0xff]
        %v2149 = vld [vmem:[%s354 + $0x20] sm:$0xf]
        %v2150 = vld [vmem:[%s354 + $0x24] sm:$0xff]
        %v2151 = vld [vmem:[%s354 + $0x2c] sm:$0xf]
        %v2152 = vld [vmem:[%s354 + $0x30] sm:$0xff]
        %v2153 = vld [vmem:[%s354 + $0x38] sm:$0xf]
        %v2154 = vld [vmem:[%s354 + $0x3c] sm:$0xff]
        %v2155 = vld [vmem:[%s354 + $0x44] sm:$0xf]
        %v2156 = vld [vmem:[%s354 + $0x48] sm:$0xff]
        %v2157 = vld [vmem:[%s354 + $0x50] sm:$0xf]
        %v2158 = vld [vmem:[%s354 + $0x54] sm:$0xff]
        %v2159 = vld [vmem:[%s354 + $0x5c] sm:$0xf]
        %v2160 = vld [vmem:[%s354 + $0x60] sm:$0xff]
        %v2161 = vld [vmem:[%s354 + $0x68] sm:$0xf]
        %v2162 = vld [vmem:[%s354 + $0x6c] sm:$0xff]
        %v2163 = vld [vmem:[%s354 + $0x74] sm:$0xf]
        %v2164 = vld [vmem:[%s354 + $0x78] sm:$0xff]
        %v2165 = vld [vmem:[%s354 + $0x80] sm:$0xf]
        %v2166 = vld [vmem:[%s354 + $0x84] sm:$0xff]
        %v2167 = vld [vmem:[%s354 + $0x8c] sm:$0xf]
        %v2168 = vld [vmem:[%s354 + $0x90] sm:$0xff]
        %v2169 = vld [vmem:[%s354 + $0x98] sm:$0xf]
        %v2170 = vld [vmem:[%s354 + $0x9c] sm:$0xff]
        %v2171 = vld [vmem:[%s354 + $0xa4] sm:$0xf]
        %v2172 = vld [vmem:[%s354 + $0xa8] sm:$0xff]
        %v2173 = vld [vmem:[%s354 + $0xb0] sm:$0xf]
        %v2174 = vld [vmem:[%s354 + $0xb4] sm:$0xff]
        %v2175 = vld [vmem:[%s354 + $0xbc] sm:$0xf]
        %v2178 = vunpack.c.l.b16 %v2136
        %v2179 = vunpack.c.l.b16 %v2137
        %v2180 = vpack.c.b16 %v2179, %v2178
        %v2214 = vunpack.c.l.b16 %v2144
        %v2215 = vunpack.c.h.b16 %v2144
        %v2216 = vunpack.c.l.b16 %v2145
        %v2217 = vunpack.c.l.b16 %v2146
        %v2218 = vunpack.c.h.b16 %v2146
        %v2219 = vunpack.c.l.b16 %v2147
        %v2220 = vunpack.c.l.b16 %v2148
        %v2221 = vunpack.c.h.b16 %v2148
        %v2222 = vunpack.c.l.b16 %v2149
        %v2223 = vunpack.c.l.b16 %v2150
        %v2224 = vunpack.c.h.b16 %v2150
        %v2225 = vunpack.c.l.b16 %v2151
        %v2226 = vunpack.c.l.b16 %v2152
        %v2227 = vunpack.c.h.b16 %v2152
        %v2228 = vunpack.c.l.b16 %v2153
        %v2229 = vunpack.c.l.b16 %v2154
        %v2230 = vunpack.c.h.b16 %v2154
        %v2231 = vunpack.c.l.b16 %v2155
        %v2232 = vunpack.c.l.b16 %v2156
        %v2233 = vunpack.c.h.b16 %v2156
        %v2234 = vunpack.c.l.b16 %v2157
        %v2235 = vunpack.c.l.b16 %v2158
        %v2236 = vunpack.c.h.b16 %v2158
        %v2237 = vunpack.c.l.b16 %v2159
        %v2238 = vunpack.c.l.b16 %v2160
        %v2239 = vunpack.c.h.b16 %v2160
        %v2240 = vunpack.c.l.b16 %v2161
        %v2241 = vunpack.c.l.b16 %v2162
        %v2242 = vunpack.c.h.b16 %v2162
        %v2243 = vunpack.c.l.b16 %v2163
        %v2244 = vunpack.c.l.b16 %v2164
        %v2245 = vunpack.c.h.b16 %v2164
        %v2246 = vunpack.c.l.b16 %v2165
        %v2247 = vunpack.c.l.b16 %v2166
        %v2248 = vunpack.c.h.b16 %v2166
        %v2249 = vunpack.c.l.b16 %v2167
        %v2250 = vunpack.c.l.b16 %v2168
        %v2251 = vunpack.c.h.b16 %v2168
        %v2252 = vunpack.c.l.b16 %v2169
        %v2253 = vunpack.c.l.b16 %v2170
        %v2254 = vunpack.c.h.b16 %v2170
        %v2255 = vunpack.c.l.b16 %v2171
        %v2256 = vunpack.c.l.b16 %v2172
        %v2257 = vunpack.c.h.b16 %v2172
        %v2258 = vunpack.c.l.b16 %v2173
        %v2259 = vunpack.c.l.b16 %v2174
        %v2260 = vunpack.c.h.b16 %v2174
        %v2261 = vunpack.c.l.b16 %v2175
        %v2262 = vpack.c.b16 %v2217, %v2214
        %v2263 = vpack.c.b16 %v2218, %v2215
        %v2264 = vpack.c.b16 %v2219, %v2216
        %v2265 = vpack.c.b16 %v2223, %v2220
        %v2266 = vpack.c.b16 %v2224, %v2221
        %v2267 = vpack.c.b16 %v2225, %v2222
        %v2268 = vpack.c.b16 %v2229, %v2226
        %v2269 = vpack.c.b16 %v2230, %v2227
        %v2270 = vpack.c.b16 %v2231, %v2228
        %v2271 = vpack.c.b16 %v2235, %v2232
        %v2272 = vpack.c.b16 %v2236, %v2233
        %v2273 = vpack.c.b16 %v2237, %v2234
        %v2274 = vpack.c.b16 %v2241, %v2238
        %v2275 = vpack.c.b16 %v2242, %v2239
        %v2276 = vpack.c.b16 %v2243, %v2240
        %v2277 = vpack.c.b16 %v2247, %v2244
        %v2278 = vpack.c.b16 %v2248, %v2245
        %v2279 = vpack.c.b16 %v2249, %v2246
        %v2280 = vpack.c.b16 %v2253, %v2250
        %v2281 = vpack.c.b16 %v2254, %v2251
        %v2282 = vpack.c.b16 %v2255, %v2252
        %v2283 = vpack.c.b16 %v2259, %v2256
        %v2284 = vpack.c.b16 %v2260, %v2257
        %v2285 = vpack.c.b16 %v2261, %v2258
        %2310 = vmatpush.bf16.msra.mxu0 %v2283
        %2311 = vmatpush.bf16.msra.mxu0 %v2280
        %2312 = vmatpush.bf16.msra.mxu0 %v2277
        %2313 = vmatpush.bf16.msra.mxu0 %v2274
        %2314 = vmatpush.bf16.msra.mxu0 %v2271
        %2315 = vmatpush.bf16.msra.mxu0 %v2268
        %2316 = vmatpush.bf16.msra.mxu0 %v2265
        %2317 = vmatpush.bf16.msra.mxu0 %v2262
        %2318 = vmatmul.bf16.gmra.mxu0 %v2180
        %v2319 = vpop.f32.mrf.mxu0
        %v2320 = vadd.f32 0.0, %v2319
        %v2321 = vpop.f32.mrf.mxu0
        %v2322 = vadd.f32 0.0, %v2321
        %2323 = vdwg.mxu0
        %2324 = vmatpush.bf16.msra.mxu0 %v2284
        %2325 = vmatpush.bf16.msra.mxu0 %v2281
        %2326 = vmatpush.bf16.msra.mxu0 %v2278
        %2327 = vmatpush.bf16.msra.mxu0 %v2275
        %2328 = vmatpush.bf16.msra.mxu0 %v2272
        %2329 = vmatpush.bf16.msra.mxu0 %v2269
        %2330 = vmatpush.bf16.msra.mxu0 %v2266
        %2331 = vmatpush.bf16.msra.mxu0 %v2263
        %2332 = vmatmul.bf16.gmra.mxu0 %v2180
        %v2333 = vpop.f32.mrf.mxu0
        %v2334 = vadd.f32 0.0, %v2333
        %v2335 = vpop.f32.mrf.mxu0
        %v2336 = vadd.f32 0.0, %v2335
        %2337 = vdwg.mxu0
        %2338 = vmatpush.bf16.msra.mxu0 %v2285
        %2339 = vmatpush.bf16.msra.mxu0 %v2282
        %2340 = vmatpush.bf16.msra.mxu0 %v2279
        %2341 = vmatpush.bf16.msra.mxu0 %v2276
        %2342 = vmatpush.bf16.msra.mxu0 %v2273
        %2343 = vmatpush.bf16.msra.mxu0 %v2270
        %2344 = vmatpush.bf16.msra.mxu0 %v2267
        %2345 = vmatpush.bf16.msra.mxu0 %v2264
        %2346 = vmatmul.bf16.gmra.mxu0 %v2180
        %v2347 = vpop.f32.mrf.mxu0
        %v2348 = vadd.f32 0.0, %v2347
        %v2349 = vpop.f32.mrf.mxu0
        %v2350 = vadd.f32 0.0, %v2349
        %2351 = vdwg.mxu0
        %s2352 = sshra.s32 %s2143, 3
        %s2353 = sand.u32 %s2143, 7
        %s2354 = smul.u32 %s2352, 3
        %s2355 = smul.addr %s2354, 8
        %s2356 = scalar_lea.vmem [#allocation3], %s2355
        %v2357 = vld [vmem:[%s2356] sm:$0xff]
        %v2358 = vld [vmem:[%s2356 + $0x8] sm:$0xff]
        %v2359 = vld [vmem:[%s2356 + $0x10] sm:$0xff]
        %v2360 = vld [vmem:[%s2356 + $0x18] sm:$0xff]
        %v2361 = vld [vmem:[%s2356 + $0x20] sm:$0xff]
        %v2362 = vld [vmem:[%s2356 + $0x28] sm:$0xff]
        %v2363 = vadd.f32 %v2357, %v2320
        %v2364 = vadd.f32 %v2360, %v2322
        %v2365 = vxor.u32 %v2363, 2147483648
        %v2366 = vxor.u32 %v2364, 2147483648
        %v2367 = vmul.f32 %v2365, 1.442695
        %v2368 = vpow.pop %v2367
        %v2369 = vmul.f32 %v2366, 1.442695
        %v2370 = vpow.pop %v2369
        %v2371 = vadd.f32 %v2368, 1.0
        %v2372 = vadd.f32 %v2370, 1.0
        %v2373 = vrcp.pop %v2371
        %v2374 = vmul.f32 %v2371, %v2373
        %v2375 = vsub.f32 1.0, %v2374
        %v2376 = vmul.f32 %v2373, %v2375
        %v2377 = vadd.f32 %v2373, %v2376
        %vm2378 = vweird.f32 %v2371
        %vm2379 = vweird.f32 %v2373
        %vm2380 = vmor %vm2378, %vm2379
        %v2381 = vsel %vm2380, %v2373, %v2377
        %v2382 = vand.u32 2147483647, %v2371
        %vm2383 = vcmp.eq.f32.partialorder %v2382, 8.507059e+37
        %v2384 = vand.u32 %v2371, 2147483648
        %v2385 = vor.u32 1.1754944e-38, %v2384
        %v2386 = vsel %vm2383, %v2385, %v2381
        %v2387 = vmul.f32 1.0, %v2386
        %v2388 = vrcp.pop %v2372
        %v2389 = vmul.f32 %v2372, %v2388
        %v2390 = vsub.f32 1.0, %v2389
        %v2391 = vmul.f32 %v2388, %v2390
        %v2392 = vadd.f32 %v2388, %v2391
        %vm2393 = vweird.f32 %v2372
        %vm2394 = vweird.f32 %v2388
        %vm2395 = vmor %vm2393, %vm2394
        %v2396 = vsel %vm2395, %v2388, %v2392
        %v2397 = vand.u32 2147483647, %v2372
        %vm2398 = vcmp.eq.f32.partialorder %v2397, 8.507059e+37
        %v2399 = vand.u32 %v2372, 2147483648
        %v2400 = vor.u32 1.1754944e-38, %v2399
        %v2401 = vsel %vm2398, %v2400, %v2396
        %v2402 = vmul.f32 1.0, %v2401
        %v2403 = vadd.f32 %v2358, %v2334
        %v2404 = vadd.f32 %v2361, %v2336
        %v2405 = vxor.u32 %v2403, 2147483648
        %v2406 = vxor.u32 %v2404, 2147483648
        %v2407 = vmul.f32 %v2405, 1.442695
        %v2408 = vpow.pop %v2407
        %v2409 = vmul.f32 %v2406, 1.442695
        %v2410 = vpow.pop %v2409
        %v2411 = vadd.f32 %v2408, 1.0
        %v2412 = vadd.f32 %v2410, 1.0
        %v2413 = vrcp.pop %v2411
        %v2414 = vmul.f32 %v2411, %v2413
        %v2415 = vsub.f32 1.0, %v2414
        %v2416 = vmul.f32 %v2413, %v2415
        %v2417 = vadd.f32 %v2413, %v2416
        %vm2418 = vweird.f32 %v2411
        %vm2419 = vweird.f32 %v2413
        %vm2420 = vmor %vm2418, %vm2419
        %v2421 = vsel %vm2420, %v2413, %v2417
        %v2422 = vand.u32 2147483647, %v2411
        %vm2423 = vcmp.eq.f32.partialorder %v2422, 8.507059e+37
        %v2424 = vand.u32 %v2411, 2147483648
        %v2425 = vor.u32 1.1754944e-38, %v2424
        %v2426 = vsel %vm2423, %v2425, %v2421
        %v2427 = vmul.f32 1.0, %v2426
        %v2428 = vrcp.pop %v2412
        %v2429 = vmul.f32 %v2412, %v2428
        %v2430 = vsub.f32 1.0, %v2429
        %v2431 = vmul.f32 %v2428, %v2430
        %v2432 = vadd.f32 %v2428, %v2431
        %vm2433 = vweird.f32 %v2412
        %vm2434 = vweird.f32 %v2428
        %vm2435 = vmor %vm2433, %vm2434
        %v2436 = vsel %vm2435, %v2428, %v2432
        %v2437 = vand.u32 2147483647, %v2412
        %vm2438 = vcmp.eq.f32.partialorder %v2437, 8.507059e+37
        %v2439 = vand.u32 %v2412, 2147483648
        %v2440 = vor.u32 1.1754944e-38, %v2439
        %v2441 = vsel %vm2438, %v2440, %v2436
        %v2442 = vmul.f32 1.0, %v2441
        %v2443 = vadd.f32 %v2348, %v1155
        %v2444 = vadd.f32 %v2350, %v1155
        %v2445 = vmul.f32 %v2387, %v2443
        %v2446 = vmul.f32 %v2402, %v2444
        %v2447 = vadd.f32 %v2359, %v2445
        %v2448 = vadd.f32 %v2362, %v2446
        %v2449 = vtanh.pop %v2447
        %v2450 = vtanh.pop %v2448
        %v2451 = vsub.f32 %v2134, %v2449
        %v2452 = vsub.f32 %v2135, %v2450
        %v2453 = vmul.f32 %v2427, %v2451
        %v2454 = vmul.f32 %v2442, %v2452
        %v2455 = vadd.f32 %v2449, %v2453
        %v2456 = vadd.f32 %v2450, %v2454
        %v2457 = vpack.c.bf16 %v2455, %v2455
        %v2458 = vpack.c.bf16 %v2456, %v2456
        %s2459 = smul.addr %s2352, 4
        %s2460 = scalar_lea.vmem %s409, %s2459 [#allocation12]
        %2461 = vst [vmem:[%s2460] sm:$0xf] %v2457
        %2462 = vst [vmem:[%s2460 + $0x4] sm:$0xf] %v2458
        %s2463 = smul.u32 %s32, 4294967293
        %s2464 = sadd.s32 %s2463, 5
        %s2465 = smul.u32 %s2464, 16
        %v2466 = vld [vmem:[%s354] sm:$0xff]
        %v2467 = vld [vmem:[%s354 + $0x8] sm:$0xf]
        %v2468 = vld [vmem:[%s354 + $0xc] sm:$0xff]
        %v2469 = vld [vmem:[%s354 + $0x14] sm:$0xf]
        %v2470 = vld [vmem:[%s354 + $0x18] sm:$0xff]
        %v2471 = vld [vmem:[%s354 + $0x20] sm:$0xf]
        %v2472 = vld [vmem:[%s354 + $0x24] sm:$0xff]
        %v2473 = vld [vmem:[%s354 + $0x2c] sm:$0xf]
        %v2474 = vld [vmem:[%s354 + $0x30] sm:$0xff]
        %v2475 = vld [vmem:[%s354 + $0x38] sm:$0xf]
        %v2476 = vld [vmem:[%s354 + $0x3c] sm:$0xff]
        %v2477 = vld [vmem:[%s354 + $0x44] sm:$0xf]
        %v2478 = vld [vmem:[%s354 + $0x48] sm:$0xff]
        %v2479 = vld [vmem:[%s354 + $0x50] sm:$0xf]
        %v2480 = vld [vmem:[%s354 + $0x54] sm:$0xff]
        %v2481 = vld [vmem:[%s354 + $0x5c] sm:$0xf]
        %v2482 = vld [vmem:[%s354 + $0x60] sm:$0xff]
        %v2483 = vld [vmem:[%s354 + $0x68] sm:$0xf]
        %v2484 = vld [vmem:[%s354 + $0x6c] sm:$0xff]
        %v2485 = vld [vmem:[%s354 + $0x74] sm:$0xf]
        %v2486 = vld [vmem:[%s354 + $0x78] sm:$0xff]
        %v2487 = vld [vmem:[%s354 + $0x80] sm:$0xf]
        %v2488 = vld [vmem:[%s354 + $0x84] sm:$0xff]
        %v2489 = vld [vmem:[%s354 + $0x8c] sm:$0xf]
        %v2490 = vld [vmem:[%s354 + $0x90] sm:$0xff]
        %v2491 = vld [vmem:[%s354 + $0x98] sm:$0xf]
        %v2492 = vld [vmem:[%s354 + $0x9c] sm:$0xff]
        %v2493 = vld [vmem:[%s354 + $0xa4] sm:$0xf]
        %v2494 = vld [vmem:[%s354 + $0xa8] sm:$0xff]
        %v2495 = vld [vmem:[%s354 + $0xb0] sm:$0xf]
        %v2496 = vld [vmem:[%s354 + $0xb4] sm:$0xff]
        %v2497 = vld [vmem:[%s354 + $0xbc] sm:$0xf]
        %v2500 = vunpack.c.l.b16 %v2457
        %v2501 = vunpack.c.l.b16 %v2458
        %v2502 = vpack.c.b16 %v2501, %v2500
        %v2536 = vunpack.c.l.b16 %v2466
        %v2537 = vunpack.c.h.b16 %v2466
        %v2538 = vunpack.c.l.b16 %v2467
        %v2539 = vunpack.c.l.b16 %v2468
        %v2540 = vunpack.c.h.b16 %v2468
        %v2541 = vunpack.c.l.b16 %v2469
        %v2542 = vunpack.c.l.b16 %v2470
        %v2543 = vunpack.c.h.b16 %v2470
        %v2544 = vunpack.c.l.b16 %v2471
        %v2545 = vunpack.c.l.b16 %v2472
        %v2546 = vunpack.c.h.b16 %v2472
        %v2547 = vunpack.c.l.b16 %v2473
        %v2548 = vunpack.c.l.b16 %v2474
        %v2549 = vunpack.c.h.b16 %v2474
        %v2550 = vunpack.c.l.b16 %v2475
        %v2551 = vunpack.c.l.b16 %v2476
        %v2552 = vunpack.c.h.b16 %v2476
        %v2553 = vunpack.c.l.b16 %v2477
        %v2554 = vunpack.c.l.b16 %v2478
        %v2555 = vunpack.c.h.b16 %v2478
        %v2556 = vunpack.c.l.b16 %v2479
        %v2557 = vunpack.c.l.b16 %v2480
        %v2558 = vunpack.c.h.b16 %v2480
        %v2559 = vunpack.c.l.b16 %v2481
        %v2560 = vunpack.c.l.b16 %v2482
        %v2561 = vunpack.c.h.b16 %v2482
        %v2562 = vunpack.c.l.b16 %v2483
        %v2563 = vunpack.c.l.b16 %v2484
        %v2564 = vunpack.c.h.b16 %v2484
        %v2565 = vunpack.c.l.b16 %v2485
        %v2566 = vunpack.c.l.b16 %v2486
        %v2567 = vunpack.c.h.b16 %v2486
        %v2568 = vunpack.c.l.b16 %v2487
        %v2569 = vunpack.c.l.b16 %v2488
        %v2570 = vunpack.c.h.b16 %v2488
        %v2571 = vunpack.c.l.b16 %v2489
        %v2572 = vunpack.c.l.b16 %v2490
        %v2573 = vunpack.c.h.b16 %v2490
        %v2574 = vunpack.c.l.b16 %v2491
        %v2575 = vunpack.c.l.b16 %v2492
        %v2576 = vunpack.c.h.b16 %v2492
        %v2577 = vunpack.c.l.b16 %v2493
        %v2578 = vunpack.c.l.b16 %v2494
        %v2579 = vunpack.c.h.b16 %v2494
        %v2580 = vunpack.c.l.b16 %v2495
        %v2581 = vunpack.c.l.b16 %v2496
        %v2582 = vunpack.c.h.b16 %v2496
        %v2583 = vunpack.c.l.b16 %v2497
        %v2584 = vpack.c.b16 %v2539, %v2536
        %v2585 = vpack.c.b16 %v2540, %v2537
        %v2586 = vpack.c.b16 %v2541, %v2538
        %v2587 = vpack.c.b16 %v2545, %v2542
        %v2588 = vpack.c.b16 %v2546, %v2543
        %v2589 = vpack.c.b16 %v2547, %v2544
        %v2590 = vpack.c.b16 %v2551, %v2548
        %v2591 = vpack.c.b16 %v2552, %v2549
        %v2592 = vpack.c.b16 %v2553, %v2550
        %v2593 = vpack.c.b16 %v2557, %v2554
        %v2594 = vpack.c.b16 %v2558, %v2555
        %v2595 = vpack.c.b16 %v2559, %v2556
        %v2596 = vpack.c.b16 %v2563, %v2560
        %v2597 = vpack.c.b16 %v2564, %v2561
        %v2598 = vpack.c.b16 %v2565, %v2562
        %v2599 = vpack.c.b16 %v2569, %v2566
        %v2600 = vpack.c.b16 %v2570, %v2567
        %v2601 = vpack.c.b16 %v2571, %v2568
        %v2602 = vpack.c.b16 %v2575, %v2572
        %v2603 = vpack.c.b16 %v2576, %v2573
        %v2604 = vpack.c.b16 %v2577, %v2574
        %v2605 = vpack.c.b16 %v2581, %v2578
        %v2606 = vpack.c.b16 %v2582, %v2579
        %v2607 = vpack.c.b16 %v2583, %v2580
        %2632 = vmatpush.bf16.msra.mxu0 %v2605
        %2633 = vmatpush.bf16.msra.mxu0 %v2602
        %2634 = vmatpush.bf16.msra.mxu0 %v2599
        %2635 = vmatpush.bf16.msra.mxu0 %v2596
        %2636 = vmatpush.bf16.msra.mxu0 %v2593
        %2637 = vmatpush.bf16.msra.mxu0 %v2590
        %2638 = vmatpush.bf16.msra.mxu0 %v2587
        %2639 = vmatpush.bf16.msra.mxu0 %v2584
        %2640 = vmatmul.bf16.gmra.mxu0 %v2502
        %v2641 = vpop.f32.mrf.mxu0
        %v2642 = vadd.f32 0.0, %v2641
        %v2643 = vpop.f32.mrf.mxu0
        %v2644 = vadd.f32 0.0, %v2643
        %2645 = vdwg.mxu0
        %2646 = vmatpush.bf16.msra.mxu0 %v2606
        %2647 = vmatpush.bf16.msra.mxu0 %v2603
        %2648 = vmatpush.bf16.msra.mxu0 %v2600
        %2649 = vmatpush.bf16.msra.mxu0 %v2597
        %2650 = vmatpush.bf16.msra.mxu0 %v2594
        %2651 = vmatpush.bf16.msra.mxu0 %v2591
        %2652 = vmatpush.bf16.msra.mxu0 %v2588
        %2653 = vmatpush.bf16.msra.mxu0 %v2585
        %2654 = vmatmul.bf16.gmra.mxu0 %v2502
        %v2655 = vpop.f32.mrf.mxu0
        %v2656 = vadd.f32 0.0, %v2655
        %v2657 = vpop.f32.mrf.mxu0
        %v2658 = vadd.f32 0.0, %v2657
        %2659 = vdwg.mxu0
        %2660 = vmatpush.bf16.msra.mxu0 %v2607
        %2661 = vmatpush.bf16.msra.mxu0 %v2604
        %2662 = vmatpush.bf16.msra.mxu0 %v2601
        %2663 = vmatpush.bf16.msra.mxu0 %v2598
        %2664 = vmatpush.bf16.msra.mxu0 %v2595
        %2665 = vmatpush.bf16.msra.mxu0 %v2592
        %2666 = vmatpush.bf16.msra.mxu0 %v2589
        %2667 = vmatpush.bf16.msra.mxu0 %v2586
        %2668 = vmatmul.bf16.gmra.mxu0 %v2502
        %v2669 = vpop.f32.mrf.mxu0
        %v2670 = vadd.f32 0.0, %v2669
        %v2671 = vpop.f32.mrf.mxu0
        %v2672 = vadd.f32 0.0, %v2671
        %2673 = vdwg.mxu0
        %s2674 = sshra.s32 %s2465, 3
        %s2675 = sand.u32 %s2465, 7
        %s2676 = smul.u32 %s2674, 3
        %s2677 = smul.addr %s2676, 8
        %s2678 = scalar_lea.vmem [#allocation3], %s2677
        %v2679 = vld [vmem:[%s2678] sm:$0xff]
        %v2680 = vld [vmem:[%s2678 + $0x8] sm:$0xff]
        %v2681 = vld [vmem:[%s2678 + $0x10] sm:$0xff]
        %v2682 = vld [vmem:[%s2678 + $0x18] sm:$0xff]
        %v2683 = vld [vmem:[%s2678 + $0x20] sm:$0xff]
        %v2684 = vld [vmem:[%s2678 + $0x28] sm:$0xff]
        %v2685 = vadd.f32 %v2679, %v2642
        %v2686 = vadd.f32 %v2682, %v2644
        %v2687 = vxor.u32 %v2685, 2147483648
        %v2688 = vxor.u32 %v2686, 2147483648
        %v2689 = vmul.f32 %v2687, 1.442695
        %v2690 = vpow.pop %v2689
        %v2691 = vmul.f32 %v2688, 1.442695
        %v2692 = vpow.pop %v2691
        %v2693 = vadd.f32 %v2690, 1.0
        %v2694 = vadd.f32 %v2692, 1.0
        %v2695 = vrcp.pop %v2693
        %v2696 = vmul.f32 %v2693, %v2695
        %v2697 = vsub.f32 1.0, %v2696
        %v2698 = vmul.f32 %v2695, %v2697
        %v2699 = vadd.f32 %v2695, %v2698
        %vm2700 = vweird.f32 %v2693
        %vm2701 = vweird.f32 %v2695
        %vm2702 = vmor %vm2700, %vm2701
        %v2703 = vsel %vm2702, %v2695, %v2699
        %v2704 = vand.u32 2147483647, %v2693
        %vm2705 = vcmp.eq.f32.partialorder %v2704, 8.507059e+37
        %v2706 = vand.u32 %v2693, 2147483648
        %v2707 = vor.u32 1.1754944e-38, %v2706
        %v2708 = vsel %vm2705, %v2707, %v2703
        %v2709 = vmul.f32 1.0, %v2708
        %v2710 = vrcp.pop %v2694
        %v2711 = vmul.f32 %v2694, %v2710
        %v2712 = vsub.f32 1.0, %v2711
        %v2713 = vmul.f32 %v2710, %v2712
        %v2714 = vadd.f32 %v2710, %v2713
        %vm2715 = vweird.f32 %v2694
        %vm2716 = vweird.f32 %v2710
        %vm2717 = vmor %vm2715, %vm2716
        %v2718 = vsel %vm2717, %v2710, %v2714
        %v2719 = vand.u32 2147483647, %v2694
        %vm2720 = vcmp.eq.f32.partialorder %v2719, 8.507059e+37
        %v2721 = vand.u32 %v2694, 2147483648
        %v2722 = vor.u32 1.1754944e-38, %v2721
        %v2723 = vsel %vm2720, %v2722, %v2718
        %v2724 = vmul.f32 1.0, %v2723
        %v2725 = vadd.f32 %v2680, %v2656
        %v2726 = vadd.f32 %v2683, %v2658
        %v2727 = vxor.u32 %v2725, 2147483648
        %v2728 = vxor.u32 %v2726, 2147483648
        %v2729 = vmul.f32 %v2727, 1.442695
        %v2730 = vpow.pop %v2729
        %v2731 = vmul.f32 %v2728, 1.442695
        %v2732 = vpow.pop %v2731
        %v2733 = vadd.f32 %v2730, 1.0
        %v2734 = vadd.f32 %v2732, 1.0
        %v2735 = vrcp.pop %v2733
        %v2736 = vmul.f32 %v2733, %v2735
        %v2737 = vsub.f32 1.0, %v2736
        %v2738 = vmul.f32 %v2735, %v2737
        %v2739 = vadd.f32 %v2735, %v2738
        %vm2740 = vweird.f32 %v2733
        %vm2741 = vweird.f32 %v2735
        %vm2742 = vmor %vm2740, %vm2741
        %v2743 = vsel %vm2742, %v2735, %v2739
        %v2744 = vand.u32 2147483647, %v2733
        %vm2745 = vcmp.eq.f32.partialorder %v2744, 8.507059e+37
        %v2746 = vand.u32 %v2733, 2147483648
        %v2747 = vor.u32 1.1754944e-38, %v2746
        %v2748 = vsel %vm2745, %v2747, %v2743
        %v2749 = vmul.f32 1.0, %v2748
        %v2750 = vrcp.pop %v2734
        %v2751 = vmul.f32 %v2734, %v2750
        %v2752 = vsub.f32 1.0, %v2751
        %v2753 = vmul.f32 %v2750, %v2752
        %v2754 = vadd.f32 %v2750, %v2753
        %vm2755 = vweird.f32 %v2734
        %vm2756 = vweird.f32 %v2750
        %vm2757 = vmor %vm2755, %vm2756
        %v2758 = vsel %vm2757, %v2750, %v2754
        %v2759 = vand.u32 2147483647, %v2734
        %vm2760 = vcmp.eq.f32.partialorder %v2759, 8.507059e+37
        %v2761 = vand.u32 %v2734, 2147483648
        %v2762 = vor.u32 1.1754944e-38, %v2761
        %v2763 = vsel %vm2760, %v2762, %v2758
        %v2764 = vmul.f32 1.0, %v2763
        %v2765 = vadd.f32 %v2670, %v1155
        %v2766 = vadd.f32 %v2672, %v1155
        %v2767 = vmul.f32 %v2709, %v2765
        %v2768 = vmul.f32 %v2724, %v2766
        %v2769 = vadd.f32 %v2681, %v2767
        %v2770 = vadd.f32 %v2684, %v2768
        %v2771 = vtanh.pop %v2769
        %v2772 = vtanh.pop %v2770
        %v2773 = vsub.f32 %v2455, %v2771
        %v2774 = vsub.f32 %v2456, %v2772
        %v2775 = vmul.f32 %v2749, %v2773
        %v2776 = vmul.f32 %v2764, %v2774
        %v2777 = vadd.f32 %v2771, %v2775
        %v2778 = vadd.f32 %v2772, %v2776
        %v2779 = vpack.c.bf16 %v2777, %v2777
        %v2780 = vpack.c.bf16 %v2778, %v2778
        %s2781 = smul.addr %s2674, 4
        %s2782 = scalar_lea.vmem %s409, %s2781 [#allocation12]
        %2783 = vst [vmem:[%s2782] sm:$0xf] %v2779
        %2784 = vst [vmem:[%s2782 + $0x4] sm:$0xf] %v2780
        %s2785 = smul.u32 %s32, 4294967291
        %s2786 = sadd.s32 %s2785, 6
        %s2787 = smul.u32 %s2786, 16
        %v2788 = vld [vmem:[%s354] sm:$0xff]
        %v2789 = vld [vmem:[%s354 + $0x8] sm:$0xf]
        %v2790 = vld [vmem:[%s354 + $0xc] sm:$0xff]
        %v2791 = vld [vmem:[%s354 + $0x14] sm:$0xf]
        %v2792 = vld [vmem:[%s354 + $0x18] sm:$0xff]
        %v2793 = vld [vmem:[%s354 + $0x20] sm:$0xf]
        %v2794 = vld [vmem:[%s354 + $0x24] sm:$0xff]
        %v2795 = vld [vmem:[%s354 + $0x2c] sm:$0xf]
        %v2796 = vld [vmem:[%s354 + $0x30] sm:$0xff]
        %v2797 = vld [vmem:[%s354 + $0x38] sm:$0xf]
        %v2798 = vld [vmem:[%s354 + $0x3c] sm:$0xff]
        %v2799 = vld [vmem:[%s354 + $0x44] sm:$0xf]
        %v2800 = vld [vmem:[%s354 + $0x48] sm:$0xff]
        %v2801 = vld [vmem:[%s354 + $0x50] sm:$0xf]
        %v2802 = vld [vmem:[%s354 + $0x54] sm:$0xff]
        %v2803 = vld [vmem:[%s354 + $0x5c] sm:$0xf]
        %v2804 = vld [vmem:[%s354 + $0x60] sm:$0xff]
        %v2805 = vld [vmem:[%s354 + $0x68] sm:$0xf]
        %v2806 = vld [vmem:[%s354 + $0x6c] sm:$0xff]
        %v2807 = vld [vmem:[%s354 + $0x74] sm:$0xf]
        %v2808 = vld [vmem:[%s354 + $0x78] sm:$0xff]
        %v2809 = vld [vmem:[%s354 + $0x80] sm:$0xf]
        %v2810 = vld [vmem:[%s354 + $0x84] sm:$0xff]
        %v2811 = vld [vmem:[%s354 + $0x8c] sm:$0xf]
        %v2812 = vld [vmem:[%s354 + $0x90] sm:$0xff]
        %v2813 = vld [vmem:[%s354 + $0x98] sm:$0xf]
        %v2814 = vld [vmem:[%s354 + $0x9c] sm:$0xff]
        %v2815 = vld [vmem:[%s354 + $0xa4] sm:$0xf]
        %v2816 = vld [vmem:[%s354 + $0xa8] sm:$0xff]
        %v2817 = vld [vmem:[%s354 + $0xb0] sm:$0xf]
        %v2818 = vld [vmem:[%s354 + $0xb4] sm:$0xff]
        %v2819 = vld [vmem:[%s354 + $0xbc] sm:$0xf]
        %v2822 = vunpack.c.l.b16 %v2779
        %v2823 = vunpack.c.l.b16 %v2780
        %v2824 = vpack.c.b16 %v2823, %v2822
        %v2858 = vunpack.c.l.b16 %v2788
        %v2859 = vunpack.c.h.b16 %v2788
        %v2860 = vunpack.c.l.b16 %v2789
        %v2861 = vunpack.c.l.b16 %v2790
        %v2862 = vunpack.c.h.b16 %v2790
        %v2863 = vunpack.c.l.b16 %v2791
        %v2864 = vunpack.c.l.b16 %v2792
        %v2865 = vunpack.c.h.b16 %v2792
        %v2866 = vunpack.c.l.b16 %v2793
        %v2867 = vunpack.c.l.b16 %v2794
        %v2868 = vunpack.c.h.b16 %v2794
        %v2869 = vunpack.c.l.b16 %v2795
        %v2870 = vunpack.c.l.b16 %v2796
        %v2871 = vunpack.c.h.b16 %v2796
        %v2872 = vunpack.c.l.b16 %v2797
        %v2873 = vunpack.c.l.b16 %v2798
        %v2874 = vunpack.c.h.b16 %v2798
        %v2875 = vunpack.c.l.b16 %v2799
        %v2876 = vunpack.c.l.b16 %v2800
        %v2877 = vunpack.c.h.b16 %v2800
        %v2878 = vunpack.c.l.b16 %v2801
        %v2879 = vunpack.c.l.b16 %v2802
        %v2880 = vunpack.c.h.b16 %v2802
        %v2881 = vunpack.c.l.b16 %v2803
        %v2882 = vunpack.c.l.b16 %v2804
        %v2883 = vunpack.c.h.b16 %v2804
        %v2884 = vunpack.c.l.b16 %v2805
        %v2885 = vunpack.c.l.b16 %v2806
        %v2886 = vunpack.c.h.b16 %v2806
        %v2887 = vunpack.c.l.b16 %v2807
        %v2888 = vunpack.c.l.b16 %v2808
        %v2889 = vunpack.c.h.b16 %v2808
        %v2890 = vunpack.c.l.b16 %v2809
        %v2891 = vunpack.c.l.b16 %v2810
        %v2892 = vunpack.c.h.b16 %v2810
        %v2893 = vunpack.c.l.b16 %v2811
        %v2894 = vunpack.c.l.b16 %v2812
        %v2895 = vunpack.c.h.b16 %v2812
        %v2896 = vunpack.c.l.b16 %v2813
        %v2897 = vunpack.c.l.b16 %v2814
        %v2898 = vunpack.c.h.b16 %v2814
        %v2899 = vunpack.c.l.b16 %v2815
        %v2900 = vunpack.c.l.b16 %v2816
        %v2901 = vunpack.c.h.b16 %v2816
        %v2902 = vunpack.c.l.b16 %v2817
        %v2903 = vunpack.c.l.b16 %v2818
        %v2904 = vunpack.c.h.b16 %v2818
        %v2905 = vunpack.c.l.b16 %v2819
        %v2906 = vpack.c.b16 %v2861, %v2858
        %v2907 = vpack.c.b16 %v2862, %v2859
        %v2908 = vpack.c.b16 %v2863, %v2860
        %v2909 = vpack.c.b16 %v2867, %v2864
        %v2910 = vpack.c.b16 %v2868, %v2865
        %v2911 = vpack.c.b16 %v2869, %v2866
        %v2912 = vpack.c.b16 %v2873, %v2870
        %v2913 = vpack.c.b16 %v2874, %v2871
        %v2914 = vpack.c.b16 %v2875, %v2872
        %v2915 = vpack.c.b16 %v2879, %v2876
        %v2916 = vpack.c.b16 %v2880, %v2877
        %v2917 = vpack.c.b16 %v2881, %v2878
        %v2918 = vpack.c.b16 %v2885, %v2882
        %v2919 = vpack.c.b16 %v2886, %v2883
        %v2920 = vpack.c.b16 %v2887, %v2884
        %v2921 = vpack.c.b16 %v2891, %v2888
        %v2922 = vpack.c.b16 %v2892, %v2889
        %v2923 = vpack.c.b16 %v2893, %v2890
        %v2924 = vpack.c.b16 %v2897, %v2894
        %v2925 = vpack.c.b16 %v2898, %v2895
        %v2926 = vpack.c.b16 %v2899, %v2896
        %v2927 = vpack.c.b16 %v2903, %v2900
        %v2928 = vpack.c.b16 %v2904, %v2901
        %v2929 = vpack.c.b16 %v2905, %v2902
        %2954 = vmatpush.bf16.msra.mxu0 %v2927
        %2955 = vmatpush.bf16.msra.mxu0 %v2924
        %2956 = vmatpush.bf16.msra.mxu0 %v2921
        %2957 = vmatpush.bf16.msra.mxu0 %v2918
        %2958 = vmatpush.bf16.msra.mxu0 %v2915
        %2959 = vmatpush.bf16.msra.mxu0 %v2912
        %2960 = vmatpush.bf16.msra.mxu0 %v2909
        %2961 = vmatpush.bf16.msra.mxu0 %v2906
        %2962 = vmatmul.bf16.gmra.mxu0 %v2824
        %v2963 = vpop.f32.mrf.mxu0
        %v2964 = vadd.f32 0.0, %v2963
        %v2965 = vpop.f32.mrf.mxu0
        %v2966 = vadd.f32 0.0, %v2965
        %2967 = vdwg.mxu0
        %2968 = vmatpush.bf16.msra.mxu0 %v2928
        %2969 = vmatpush.bf16.msra.mxu0 %v2925
        %2970 = vmatpush.bf16.msra.mxu0 %v2922
        %2971 = vmatpush.bf16.msra.mxu0 %v2919
        %2972 = vmatpush.bf16.msra.mxu0 %v2916
        %2973 = vmatpush.bf16.msra.mxu0 %v2913
        %2974 = vmatpush.bf16.msra.mxu0 %v2910
        %2975 = vmatpush.bf16.msra.mxu0 %v2907
        %2976 = vmatmul.bf16.gmra.mxu0 %v2824
        %v2977 = vpop.f32.mrf.mxu0
        %v2978 = vadd.f32 0.0, %v2977
        %v2979 = vpop.f32.mrf.mxu0
        %v2980 = vadd.f32 0.0, %v2979
        %2981 = vdwg.mxu0
        %2982 = vmatpush.bf16.msra.mxu0 %v2929
        %2983 = vmatpush.bf16.msra.mxu0 %v2926
        %2984 = vmatpush.bf16.msra.mxu0 %v2923
        %2985 = vmatpush.bf16.msra.mxu0 %v2920
        %2986 = vmatpush.bf16.msra.mxu0 %v2917
        %2987 = vmatpush.bf16.msra.mxu0 %v2914
        %2988 = vmatpush.bf16.msra.mxu0 %v2911
        %2989 = vmatpush.bf16.msra.mxu0 %v2908
        %2990 = vmatmul.bf16.gmra.mxu0 %v2824
        %v2991 = vpop.f32.mrf.mxu0
        %v2992 = vadd.f32 0.0, %v2991
        %v2993 = vpop.f32.mrf.mxu0
        %v2994 = vadd.f32 0.0, %v2993
        %2995 = vdwg.mxu0
        %s2996 = sshra.s32 %s2787, 3
        %s2997 = sand.u32 %s2787, 7
        %s2998 = smul.u32 %s2996, 3
        %s2999 = smul.addr %s2998, 8
        %s3000 = scalar_lea.vmem [#allocation3], %s2999
        %v3001 = vld [vmem:[%s3000] sm:$0xff]
        %v3002 = vld [vmem:[%s3000 + $0x8] sm:$0xff]
        %v3003 = vld [vmem:[%s3000 + $0x10] sm:$0xff]
        %v3004 = vld [vmem:[%s3000 + $0x18] sm:$0xff]
        %v3005 = vld [vmem:[%s3000 + $0x20] sm:$0xff]
        %v3006 = vld [vmem:[%s3000 + $0x28] sm:$0xff]
        %v3007 = vadd.f32 %v3001, %v2964
        %v3008 = vadd.f32 %v3004, %v2966
        %v3009 = vxor.u32 %v3007, 2147483648
        %v3010 = vxor.u32 %v3008, 2147483648
        %v3011 = vmul.f32 %v3009, 1.442695
        %v3012 = vpow.pop %v3011
        %v3013 = vmul.f32 %v3010, 1.442695
        %v3014 = vpow.pop %v3013
        %v3015 = vadd.f32 %v3012, 1.0
        %v3016 = vadd.f32 %v3014, 1.0
        %v3017 = vrcp.pop %v3015
        %v3018 = vmul.f32 %v3015, %v3017
        %v3019 = vsub.f32 1.0, %v3018
        %v3020 = vmul.f32 %v3017, %v3019
        %v3021 = vadd.f32 %v3017, %v3020
        %vm3022 = vweird.f32 %v3015
        %vm3023 = vweird.f32 %v3017
        %vm3024 = vmor %vm3022, %vm3023
        %v3025 = vsel %vm3024, %v3017, %v3021
        %v3026 = vand.u32 2147483647, %v3015
        %vm3027 = vcmp.eq.f32.partialorder %v3026, 8.507059e+37
        %v3028 = vand.u32 %v3015, 2147483648
        %v3029 = vor.u32 1.1754944e-38, %v3028
        %v3030 = vsel %vm3027, %v3029, %v3025
        %v3031 = vmul.f32 1.0, %v3030
        %v3032 = vrcp.pop %v3016
        %v3033 = vmul.f32 %v3016, %v3032
        %v3034 = vsub.f32 1.0, %v3033
        %v3035 = vmul.f32 %v3032, %v3034
        %v3036 = vadd.f32 %v3032, %v3035
        %vm3037 = vweird.f32 %v3016
        %vm3038 = vweird.f32 %v3032
        %vm3039 = vmor %vm3037, %vm3038
        %v3040 = vsel %vm3039, %v3032, %v3036
        %v3041 = vand.u32 2147483647, %v3016
        %vm3042 = vcmp.eq.f32.partialorder %v3041, 8.507059e+37
        %v3043 = vand.u32 %v3016, 2147483648
        %v3044 = vor.u32 1.1754944e-38, %v3043
        %v3045 = vsel %vm3042, %v3044, %v3040
        %v3046 = vmul.f32 1.0, %v3045
        %v3047 = vadd.f32 %v3002, %v2978
        %v3048 = vadd.f32 %v3005, %v2980
        %v3049 = vxor.u32 %v3047, 2147483648
        %v3050 = vxor.u32 %v3048, 2147483648
        %v3051 = vmul.f32 %v3049, 1.442695
        %v3052 = vpow.pop %v3051
        %v3053 = vmul.f32 %v3050, 1.442695
        %v3054 = vpow.pop %v3053
        %v3055 = vadd.f32 %v3052, 1.0
        %v3056 = vadd.f32 %v3054, 1.0
        %v3057 = vrcp.pop %v3055
        %v3058 = vmul.f32 %v3055, %v3057
        %v3059 = vsub.f32 1.0, %v3058
        %v3060 = vmul.f32 %v3057, %v3059
        %v3061 = vadd.f32 %v3057, %v3060
        %vm3062 = vweird.f32 %v3055
        %vm3063 = vweird.f32 %v3057
        %vm3064 = vmor %vm3062, %vm3063
        %v3065 = vsel %vm3064, %v3057, %v3061
        %v3066 = vand.u32 2147483647, %v3055
        %vm3067 = vcmp.eq.f32.partialorder %v3066, 8.507059e+37
        %v3068 = vand.u32 %v3055, 2147483648
        %v3069 = vor.u32 1.1754944e-38, %v3068
        %v3070 = vsel %vm3067, %v3069, %v3065
        %v3071 = vmul.f32 1.0, %v3070
        %v3072 = vrcp.pop %v3056
        %v3073 = vmul.f32 %v3056, %v3072
        %v3074 = vsub.f32 1.0, %v3073
        %v3075 = vmul.f32 %v3072, %v3074
        %v3076 = vadd.f32 %v3072, %v3075
        %vm3077 = vweird.f32 %v3056
        %vm3078 = vweird.f32 %v3072
        %vm3079 = vmor %vm3077, %vm3078
        %v3080 = vsel %vm3079, %v3072, %v3076
        %v3081 = vand.u32 2147483647, %v3056
        %vm3082 = vcmp.eq.f32.partialorder %v3081, 8.507059e+37
        %v3083 = vand.u32 %v3056, 2147483648
        %v3084 = vor.u32 1.1754944e-38, %v3083
        %v3085 = vsel %vm3082, %v3084, %v3080
        %v3086 = vmul.f32 1.0, %v3085
        %v3087 = vadd.f32 %v2992, %v1155
        %v3088 = vadd.f32 %v2994, %v1155
        %v3089 = vmul.f32 %v3031, %v3087
        %v3090 = vmul.f32 %v3046, %v3088
        %v3091 = vadd.f32 %v3003, %v3089
        %v3092 = vadd.f32 %v3006, %v3090
        %v3093 = vtanh.pop %v3091
        %v3094 = vtanh.pop %v3092
        %v3095 = vsub.f32 %v2777, %v3093
        %v3096 = vsub.f32 %v2778, %v3094
        %v3097 = vmul.f32 %v3071, %v3095
        %v3098 = vmul.f32 %v3086, %v3096
        %v3099 = vadd.f32 %v3093, %v3097
        %v3100 = vadd.f32 %v3094, %v3098
        %v3101 = vpack.c.bf16 %v3099, %v3099
        %v3102 = vpack.c.bf16 %v3100, %v3100
        %s3103 = smul.addr %s2996, 4
        %s3104 = scalar_lea.vmem %s409, %s3103 [#allocation12]
        %3105 = vst [vmem:[%s3104] sm:$0xf] %v3101
        %3106 = vst [vmem:[%s3104 + $0x4] sm:$0xf] %v3102
        %s3107 = smul.u32 %s32, 4294967289
        %s3108 = sadd.s32 %s3107, 7
        %s3109 = smul.u32 %s3108, 16
        %v3110 = vld [vmem:[%s354] sm:$0xff]
        %v3111 = vld [vmem:[%s354 + $0x8] sm:$0xf]
        %v3112 = vld [vmem:[%s354 + $0xc] sm:$0xff]
        %v3113 = vld [vmem:[%s354 + $0x14] sm:$0xf]
        %v3114 = vld [vmem:[%s354 + $0x18] sm:$0xff]
        %v3115 = vld [vmem:[%s354 + $0x20] sm:$0xf]
        %v3116 = vld [vmem:[%s354 + $0x24] sm:$0xff]
        %v3117 = vld [vmem:[%s354 + $0x2c] sm:$0xf]
        %v3118 = vld [vmem:[%s354 + $0x30] sm:$0xff]
        %v3119 = vld [vmem:[%s354 + $0x38] sm:$0xf]
        %v3120 = vld [vmem:[%s354 + $0x3c] sm:$0xff]
        %v3121 = vld [vmem:[%s354 + $0x44] sm:$0xf]
        %v3122 = vld [vmem:[%s354 + $0x48] sm:$0xff]
        %v3123 = vld [vmem:[%s354 + $0x50] sm:$0xf]
        %v3124 = vld [vmem:[%s354 + $0x54] sm:$0xff]
        %v3125 = vld [vmem:[%s354 + $0x5c] sm:$0xf]
        %v3126 = vld [vmem:[%s354 + $0x60] sm:$0xff]
        %v3127 = vld [vmem:[%s354 + $0x68] sm:$0xf]
        %v3128 = vld [vmem:[%s354 + $0x6c] sm:$0xff]
        %v3129 = vld [vmem:[%s354 + $0x74] sm:$0xf]
        %v3130 = vld [vmem:[%s354 + $0x78] sm:$0xff]
        %v3131 = vld [vmem:[%s354 + $0x80] sm:$0xf]
        %v3132 = vld [vmem:[%s354 + $0x84] sm:$0xff]
        %v3133 = vld [vmem:[%s354 + $0x8c] sm:$0xf]
        %v3134 = vld [vmem:[%s354 + $0x90] sm:$0xff]
        %v3135 = vld [vmem:[%s354 + $0x98] sm:$0xf]
        %v3136 = vld [vmem:[%s354 + $0x9c] sm:$0xff]
        %v3137 = vld [vmem:[%s354 + $0xa4] sm:$0xf]
        %v3138 = vld [vmem:[%s354 + $0xa8] sm:$0xff]
        %v3139 = vld [vmem:[%s354 + $0xb0] sm:$0xf]
        %v3140 = vld [vmem:[%s354 + $0xb4] sm:$0xff]
        %v3141 = vld [vmem:[%s354 + $0xbc] sm:$0xf]
        %v3144 = vunpack.c.l.b16 %v3101
        %v3145 = vunpack.c.l.b16 %v3102
        %v3146 = vpack.c.b16 %v3145, %v3144
        %v3180 = vunpack.c.l.b16 %v3110
        %v3181 = vunpack.c.h.b16 %v3110
        %v3182 = vunpack.c.l.b16 %v3111
        %v3183 = vunpack.c.l.b16 %v3112
        %v3184 = vunpack.c.h.b16 %v3112
        %v3185 = vunpack.c.l.b16 %v3113
        %v3186 = vunpack.c.l.b16 %v3114
        %v3187 = vunpack.c.h.b16 %v3114
        %v3188 = vunpack.c.l.b16 %v3115
        %v3189 = vunpack.c.l.b16 %v3116
        %v3190 = vunpack.c.h.b16 %v3116
        %v3191 = vunpack.c.l.b16 %v3117
        %v3192 = vunpack.c.l.b16 %v3118
        %v3193 = vunpack.c.h.b16 %v3118
        %v3194 = vunpack.c.l.b16 %v3119
        %v3195 = vunpack.c.l.b16 %v3120
        %v3196 = vunpack.c.h.b16 %v3120
        %v3197 = vunpack.c.l.b16 %v3121
        %v3198 = vunpack.c.l.b16 %v3122
        %v3199 = vunpack.c.h.b16 %v3122
        %v3200 = vunpack.c.l.b16 %v3123
        %v3201 = vunpack.c.l.b16 %v3124
        %v3202 = vunpack.c.h.b16 %v3124
        %v3203 = vunpack.c.l.b16 %v3125
        %v3204 = vunpack.c.l.b16 %v3126
        %v3205 = vunpack.c.h.b16 %v3126
        %v3206 = vunpack.c.l.b16 %v3127
        %v3207 = vunpack.c.l.b16 %v3128
        %v3208 = vunpack.c.h.b16 %v3128
        %v3209 = vunpack.c.l.b16 %v3129
        %v3210 = vunpack.c.l.b16 %v3130
        %v3211 = vunpack.c.h.b16 %v3130
        %v3212 = vunpack.c.l.b16 %v3131
        %v3213 = vunpack.c.l.b16 %v3132
        %v3214 = vunpack.c.h.b16 %v3132
        %v3215 = vunpack.c.l.b16 %v3133
        %v3216 = vunpack.c.l.b16 %v3134
        %v3217 = vunpack.c.h.b16 %v3134
        %v3218 = vunpack.c.l.b16 %v3135
        %v3219 = vunpack.c.l.b16 %v3136
        %v3220 = vunpack.c.h.b16 %v3136
        %v3221 = vunpack.c.l.b16 %v3137
        %v3222 = vunpack.c.l.b16 %v3138
        %v3223 = vunpack.c.h.b16 %v3138
        %v3224 = vunpack.c.l.b16 %v3139
        %v3225 = vunpack.c.l.b16 %v3140
        %v3226 = vunpack.c.h.b16 %v3140
        %v3227 = vunpack.c.l.b16 %v3141
        %v3228 = vpack.c.b16 %v3183, %v3180
        %v3229 = vpack.c.b16 %v3184, %v3181
        %v3230 = vpack.c.b16 %v3185, %v3182
        %v3231 = vpack.c.b16 %v3189, %v3186
        %v3232 = vpack.c.b16 %v3190, %v3187
        %v3233 = vpack.c.b16 %v3191, %v3188
        %v3234 = vpack.c.b16 %v3195, %v3192
        %v3235 = vpack.c.b16 %v3196, %v3193
        %v3236 = vpack.c.b16 %v3197, %v3194
        %v3237 = vpack.c.b16 %v3201, %v3198
        %v3238 = vpack.c.b16 %v3202, %v3199
        %v3239 = vpack.c.b16 %v3203, %v3200
        %v3240 = vpack.c.b16 %v3207, %v3204
        %v3241 = vpack.c.b16 %v3208, %v3205
        %v3242 = vpack.c.b16 %v3209, %v3206
        %v3243 = vpack.c.b16 %v3213, %v3210
        %v3244 = vpack.c.b16 %v3214, %v3211
        %v3245 = vpack.c.b16 %v3215, %v3212
        %v3246 = vpack.c.b16 %v3219, %v3216
        %v3247 = vpack.c.b16 %v3220, %v3217
        %v3248 = vpack.c.b16 %v3221, %v3218
        %v3249 = vpack.c.b16 %v3225, %v3222
        %v3250 = vpack.c.b16 %v3226, %v3223
        %v3251 = vpack.c.b16 %v3227, %v3224
        %3276 = vmatpush.bf16.msra.mxu0 %v3249
        %3277 = vmatpush.bf16.msra.mxu0 %v3246
        %3278 = vmatpush.bf16.msra.mxu0 %v3243
        %3279 = vmatpush.bf16.msra.mxu0 %v3240
        %3280 = vmatpush.bf16.msra.mxu0 %v3237
        %3281 = vmatpush.bf16.msra.mxu0 %v3234
        %3282 = vmatpush.bf16.msra.mxu0 %v3231
        %3283 = vmatpush.bf16.msra.mxu0 %v3228
        %3284 = vmatmul.bf16.gmra.mxu0 %v3146
        %v3285 = vpop.f32.mrf.mxu0
        %v3286 = vadd.f32 0.0, %v3285
        %v3287 = vpop.f32.mrf.mxu0
        %v3288 = vadd.f32 0.0, %v3287
        %3289 = vdwg.mxu0
        %3290 = vmatpush.bf16.msra.mxu0 %v3250
        %3291 = vmatpush.bf16.msra.mxu0 %v3247
        %3292 = vmatpush.bf16.msra.mxu0 %v3244
        %3293 = vmatpush.bf16.msra.mxu0 %v3241
        %3294 = vmatpush.bf16.msra.mxu0 %v3238
        %3295 = vmatpush.bf16.msra.mxu0 %v3235
        %3296 = vmatpush.bf16.msra.mxu0 %v3232
        %3297 = vmatpush.bf16.msra.mxu0 %v3229
        %3298 = vmatmul.bf16.gmra.mxu0 %v3146
        %v3299 = vpop.f32.mrf.mxu0
        %v3300 = vadd.f32 0.0, %v3299
        %v3301 = vpop.f32.mrf.mxu0
        %v3302 = vadd.f32 0.0, %v3301
        %3303 = vdwg.mxu0
        %3304 = vmatpush.bf16.msra.mxu0 %v3251
        %3305 = vmatpush.bf16.msra.mxu0 %v3248
        %3306 = vmatpush.bf16.msra.mxu0 %v3245
        %3307 = vmatpush.bf16.msra.mxu0 %v3242
        %3308 = vmatpush.bf16.msra.mxu0 %v3239
        %3309 = vmatpush.bf16.msra.mxu0 %v3236
        %3310 = vmatpush.bf16.msra.mxu0 %v3233
        %3311 = vmatpush.bf16.msra.mxu0 %v3230
        %3312 = vmatmul.bf16.gmra.mxu0 %v3146
        %v3313 = vpop.f32.mrf.mxu0
        %v3314 = vadd.f32 0.0, %v3313
        %v3315 = vpop.f32.mrf.mxu0
        %v3316 = vadd.f32 0.0, %v3315
        %3317 = vdwg.mxu0
        %s3318 = sshra.s32 %s3109, 3
        %s3319 = sand.u32 %s3109, 7
        %s3320 = smul.u32 %s3318, 3
        %s3321 = smul.addr %s3320, 8
        %s3322 = scalar_lea.vmem [#allocation3], %s3321
        %v3323 = vld [vmem:[%s3322] sm:$0xff]
        %v3324 = vld [vmem:[%s3322 + $0x8] sm:$0xff]
        %v3325 = vld [vmem:[%s3322 + $0x10] sm:$0xff]
        %v3326 = vld [vmem:[%s3322 + $0x18] sm:$0xff]
        %v3327 = vld [vmem:[%s3322 + $0x20] sm:$0xff]
        %v3328 = vld [vmem:[%s3322 + $0x28] sm:$0xff]
        %v3329 = vadd.f32 %v3323, %v3286
        %v3330 = vadd.f32 %v3326, %v3288
        %v3331 = vxor.u32 %v3329, 2147483648
        %v3332 = vxor.u32 %v3330, 2147483648
        %v3333 = vmul.f32 %v3331, 1.442695
        %v3334 = vpow.pop %v3333
        %v3335 = vmul.f32 %v3332, 1.442695
        %v3336 = vpow.pop %v3335
        %v3337 = vadd.f32 %v3334, 1.0
        %v3338 = vadd.f32 %v3336, 1.0
        %v3339 = vrcp.pop %v3337
        %v3340 = vmul.f32 %v3337, %v3339
        %v3341 = vsub.f32 1.0, %v3340
        %v3342 = vmul.f32 %v3339, %v3341
        %v3343 = vadd.f32 %v3339, %v3342
        %vm3344 = vweird.f32 %v3337
        %vm3345 = vweird.f32 %v3339
        %vm3346 = vmor %vm3344, %vm3345
        %v3347 = vsel %vm3346, %v3339, %v3343
        %v3348 = vand.u32 2147483647, %v3337
        %vm3349 = vcmp.eq.f32.partialorder %v3348, 8.507059e+37
        %v3350 = vand.u32 %v3337, 2147483648
        %v3351 = vor.u32 1.1754944e-38, %v3350
        %v3352 = vsel %vm3349, %v3351, %v3347
        %v3353 = vmul.f32 1.0, %v3352
        %v3354 = vrcp.pop %v3338
        %v3355 = vmul.f32 %v3338, %v3354
        %v3356 = vsub.f32 1.0, %v3355
        %v3357 = vmul.f32 %v3354, %v3356
        %v3358 = vadd.f32 %v3354, %v3357
        %vm3359 = vweird.f32 %v3338
        %vm3360 = vweird.f32 %v3354
        %vm3361 = vmor %vm3359, %vm3360
        %v3362 = vsel %vm3361, %v3354, %v3358
        %v3363 = vand.u32 2147483647, %v3338
        %vm3364 = vcmp.eq.f32.partialorder %v3363, 8.507059e+37
        %v3365 = vand.u32 %v3338, 2147483648
        %v3366 = vor.u32 1.1754944e-38, %v3365
        %v3367 = vsel %vm3364, %v3366, %v3362
        %v3368 = vmul.f32 1.0, %v3367
        %v3369 = vadd.f32 %v3324, %v3300
        %v3370 = vadd.f32 %v3327, %v3302
        %v3371 = vxor.u32 %v3369, 2147483648
        %v3372 = vxor.u32 %v3370, 2147483648
        %v3373 = vmul.f32 %v3371, 1.442695
        %v3374 = vpow.pop %v3373
        %v3375 = vmul.f32 %v3372, 1.442695
        %v3376 = vpow.pop %v3375
        %v3377 = vadd.f32 %v3374, 1.0
        %v3378 = vadd.f32 %v3376, 1.0
        %v3379 = vrcp.pop %v3377
        %v3380 = vmul.f32 %v3377, %v3379
        %v3381 = vsub.f32 1.0, %v3380
        %v3382 = vmul.f32 %v3379, %v3381
        %v3383 = vadd.f32 %v3379, %v3382
        %vm3384 = vweird.f32 %v3377
        %vm3385 = vweird.f32 %v3379
        %vm3386 = vmor %vm3384, %vm3385
        %v3387 = vsel %vm3386, %v3379, %v3383
        %v3388 = vand.u32 2147483647, %v3377
        %vm3389 = vcmp.eq.f32.partialorder %v3388, 8.507059e+37
        %v3390 = vand.u32 %v3377, 2147483648
        %v3391 = vor.u32 1.1754944e-38, %v3390
        %v3392 = vsel %vm3389, %v3391, %v3387
        %v3393 = vmul.f32 1.0, %v3392
        %v3394 = vrcp.pop %v3378
        %v3395 = vmul.f32 %v3378, %v3394
        %v3396 = vsub.f32 1.0, %v3395
        %v3397 = vmul.f32 %v3394, %v3396
        %v3398 = vadd.f32 %v3394, %v3397
        %vm3399 = vweird.f32 %v3378
        %vm3400 = vweird.f32 %v3394
        %vm3401 = vmor %vm3399, %vm3400
        %v3402 = vsel %vm3401, %v3394, %v3398
        %v3403 = vand.u32 2147483647, %v3378
        %vm3404 = vcmp.eq.f32.partialorder %v3403, 8.507059e+37
        %v3405 = vand.u32 %v3378, 2147483648
        %v3406 = vor.u32 1.1754944e-38, %v3405
        %v3407 = vsel %vm3404, %v3406, %v3402
        %v3408 = vmul.f32 1.0, %v3407
        %v3409 = vadd.f32 %v3314, %v1155
        %v3410 = vadd.f32 %v3316, %v1155
        %v3411 = vmul.f32 %v3353, %v3409
        %v3412 = vmul.f32 %v3368, %v3410
        %v3413 = vadd.f32 %v3325, %v3411
        %v3414 = vadd.f32 %v3328, %v3412
        %v3415 = vtanh.pop %v3413
        %v3416 = vtanh.pop %v3414
        %v3417 = vsub.f32 %v3099, %v3415
        %v3418 = vsub.f32 %v3100, %v3416
        %v3419 = vmul.f32 %v3393, %v3417
        %v3420 = vmul.f32 %v3408, %v3418
        %v3421 = vadd.f32 %v3415, %v3419
        %v3422 = vadd.f32 %v3416, %v3420
        %v3423 = vpack.c.bf16 %v3421, %v3421
        %v3424 = vpack.c.bf16 %v3422, %v3422
        %s3425 = smul.addr %s3318, 4
        %s3426 = scalar_lea.vmem %s409, %s3425 [#allocation12]
        %3427 = vst [vmem:[%s3426] sm:$0xf] %v3423
        %3428 = vst [vmem:[%s3426 + $0x4] sm:$0xf] %v3424
        %3429 = vst [vmem:[#allocation2] sm:$0xff] %v3421
        %3430 = vst [vmem:[#allocation2 + $0x8] sm:$0xff] %v3422
        %s3431 = sand.u32 %s196, 1
        %s3432 = scalar_lea.sflag [#allocation6], %s3431
        %s3433 = sand.u32 %s196, 1
        %s3434 = smul.addr %s3433, 64
        %s3435 = scalar_lea.vmem [#allocation12], %s3434
        // Predicated region
        $region61: #{tpu_custom_call.1} parent=39 // pred_check
          %p3436 = pneg %p206
        $region62: #{tpu_custom_call.1} parent=39 // pred_check_branch
          %3438 = sbr.rel (%p3436) target = $region64
        $region63: #{tpu_custom_call.1} parent=39 // pred_region
          %s3439 = smul.u32 %s33, 2
          %s3440 = ssub.s32 1, %s3439
          %s3441 = smul.u32 %s32, %s3440
          %s3442 = sadd.s32 %s33, %s3441
          %s3443 = smul.u32 16, %s3442
          %3445 = vsyncadd %s3432, 0
          %s3446 = smul.addr %s3443, 2
          %s3447 = sadd.s32 %s32, %s3446
          %s3448 = smul.addr %s3447, 4
          %s3449 = scalar_lea.hbm %s5, %s3448
          %s3450 = sshll.u32 %s3435, 4
          %s3451 = int_to_ptr.vmem [resolvable:$true] %s3450
          %s3452 = sshll.u32 %s3449, 4
          %s3453 = int_to_ptr.hbm [resolvable:$true] %s3452
          %3458 = dma.vmem_to_hbm [thread:$0]  %s3451, 1024, %s3453, %s3432, 64, 128, 4
        $region64: #{tpu_custom_call.1} parent=39 // pred_fallthru
          _
      $region40: #{tpu_custom_call.1} parent=5 // pred_fallthru
        _
      %p3459 = scmp.le.s32.totalorder 2, %s23
      // Predicated region
      $region65: #{tpu_custom_call.1} parent=5 // pred_check
        %p3460 = pneg %p3459
      $region66: #{tpu_custom_call.1} parent=5 // pred_check_branch
        %3462 = sbr.rel (%p3460) target = $region68
      $region67: #{tpu_custom_call.1} parent=5 // pred_region
        %s3463 = ssub.s32 %s23, 2
        // Predicated region
        $region69: #{tpu_custom_call.1} parent=67 // pred_check
          %p3464 = pneg %p212
        $region70: #{tpu_custom_call.1} parent=67 // pred_check_branch
          %3466 = sbr.rel (%p3464) target = $region72
        $region71: #{tpu_custom_call.1} parent=67 // pred_region
          %s3467 = sand.u32 %s197, 1
          %s3468 = scalar_lea.sflag [#allocation6], %s3467
          %s3469 = sand.u32 %s197, 1
          %s3470 = smul.addr %s3469, 64
          %s3471 = scalar_lea.vmem [#allocation12], %s3470
          %3473 = dma.done %s3468, 1024
        $region72: #{tpu_custom_call.1} parent=67 // pred_fallthru
          _
      $region68: #{tpu_custom_call.1} parent=5 // pred_fallthru
        _
    $region6: #{tpu_custom_call.1} parent=1 // loop_footer
      %s27 = sadd.s32 1, %s23
    $region7: #{tpu_custom_call.1} parent=1 // loop_footer_branch
      %22 = sbr.rel target = $region3
    $region8: #{tpu_custom_call.1} parent=1 // loop_exit
      _
    %3474 = vsyncpa [#allocation5], 1
    %s3475 = scalar_lea.sflag [#allocation5], 1
    %3476 = vsyncpa %s3475, 1
    %3477 = vsyncpa [#allocation8], 1
    %s3478 = scalar_lea.sflag [#allocation8], 1
    %3479 = vsyncpa %s3478, 1
    %3480 = vsyncpa [#allocation11], 1
    %s3481 = scalar_lea.sflag [#allocation11], 1
    %3482 = vsyncpa %s3481, 1
    %3483 = vsyncpa [#allocation6], 1
    %s3484 = scalar_lea.sflag [#allocation6], 1
    %3485 = vsyncpa %s3484, 1

</llo_original>
